<compile_context>
chip_gen: v7x
topology: tpu7x:2x2x1
jax: 0.10.0
libtpu: 0.0.40
codegen_flags: <defaults>
</compile_context>

<pallas_src>
import jax
import jax.numpy as jnp
import numpy as np
from jax.experimental import pallas as pl
from jax.experimental.pallas import tpu as pltpu


def _ru(a, b):
    return (a + b - 1) // b * b


# ---- small stand-in sizes (real model: F=H=2048, RH=1024, V=6890, K=49) ----
B, T = 2, 8
F = 32             # input feature dim (== GRU hidden so use_residual applies)
H = 32             # GRU hidden size
NJ = 24            # SMPL joints
NPOSE = NJ * 6     # 144 (6D pose)
NSHAPE = 10
NCAM = 3
HEAD = NPOSE + NCAM + NSHAPE    # 157
RH = 64            # regressor hidden (1024 in the real Regressor)
V = 64             # vertices (6890 in SMPL)
K = 24             # regressed keypoints (49 in VIBE/MEVA)
assert F == H      # use_residual=True requires it

# lane-friendly padded layouts used by the kernels
CSTR = 32                        # per-component stride: 24 joints padded to 32
POSE_W = 6 * CSTR                # 192   (6D pose, component-major)
ROT_W = 9 * CSTR                 # 288   (3x3 rotmat, component-major)
PSC_W = POSE_W + NCAM + NSHAPE   # 205   [pose | cam | shape]
PSC_PAD = _ru(PSC_W, 128)        # 256
V3P = _ru(V * 3, 128)            # vertices*3, lane padded
K3P = _ru(K * 3, 128)            # keypoints*3, lane padded
VMEM_BUDGET = 48 * 1024 * 1024   # fits v5e/v6e (128 MiB) and v7x (64 MiB)

# column permutation: "component-major" pose col c*NJ + j  <-  per-joint 6j + c
P6 = np.array([6 * j + c for c in range(6) for j in range(NJ)], dtype=np.int32)
INV6 = np.argsort(P6).astype(np.int32)     # back to per-joint (j, 6) ordering
# rotmat rows: component-major col (cc*3 + r)*NJ + j  <-  flat col 9j + 3r + cc
PR = np.array([9 * j + 3 * r + cc
               for cc in range(3) for r in range(3) for j in range(NJ)],
              dtype=np.int32)


# ------------------------------ parameters ---------------------------------
def _rand(key, shape, scale=0.05):
    return (scale * jax.random.normal(key, shape)).astype(jnp.float32)


def init_params(key):
    """Original (PyTorch-layout) parameters."""
    ks = jax.random.split(key, 23)
    p = {}
    # TemporalEncoder GRU (gate order r, z, n -- PyTorch convention)
    p["gru_wih"] = _rand(ks[0], (F, 3 * H))
    p["gru_whh"] = _rand(ks[1], (H, 3 * H))
    p["gru_bih"] = _rand(ks[2], (1, 3 * H))
    p["gru_bhh"] = _rand(ks[3], (1, 3 * H))
    # meva_model stand-in head: feature -> [X_r(144) | cam(3) | shape(10)]
    p["head_w"] = _rand(ks[4], (H, HEAD))
    p["head_b"] = _rand(ks[5], (1, HEAD))
    # Regressor (fc1 split per input block; fused host-side in prepare_params)
    p["w1f"] = _rand(ks[6], (H, RH))
    p["w1p"] = _rand(ks[7], (NPOSE, RH))
    p["w1s"] = _rand(ks[8], (NSHAPE, RH))
    p["w1c"] = _rand(ks[9], (NCAM, RH))
    p["b1"] = _rand(ks[10], (1, RH))
    p["w2"] = _rand(ks[11], (RH, RH))
    p["b2"] = _rand(ks[12], (1, RH))
    p["wp"] = _rand(ks[13], (RH, NPOSE))
    p["bp"] = _rand(ks[14], (1, NPOSE))
    p["ws"] = _rand(ks[15], (RH, NSHAPE))
    p["bs"] = _rand(ks[16], (1, NSHAPE))
    p["wc"] = _rand(ks[17], (RH, NCAM))
    p["bc"] = _rand(ks[18], (1, NCAM))
    # SMPL-like synthetic bases
    # TODO(synk): real SMPL template/shapedirs/posedirs/J_regressor come from
    # the SMPL model file + SPIN checkpoint; synthetic stand-ins here.
    p["smpl_template"] = _rand(ks[19], (1, V * 3), scale=1.0)
    p["smpl_shapedirs"] = _rand(ks[20], (NSHAPE, V * 3))
    p["smpl_posedirs"] = _rand(ks[21], (NJ * 9, V * 3))
    p["smpl_jreg3"] = _rand(ks[22], (V * 3, K * 3))
    return p


def prepare_params(p):
    """Permute / fuse / zero-pad / bf16-cast the PyTorch-layout parameters into
    the lane-dense layouts the kernels consume (host side, once)."""
    bf16 = jnp.bfloat16

    def comp_pad_cols(a, n_comp):            # (R, n*NJ) -> (R, n*CSTR)
        r = a.shape[0]
        a = a.reshape(r, n_comp, NJ)
        return jnp.pad(a, ((0, 0), (0, 0), (0, CSTR - NJ))).reshape(
            r, n_comp * CSTR)

    def comp_pad_rows(a, n_comp):            # (n*NJ, C) -> (n*CSTR, C)
        c = a.shape[1]
        a = a.reshape(n_comp, NJ, c)
        return jnp.pad(a, ((0, 0), (0, CSTR - NJ), (0, 0))).reshape(
            n_comp * CSTR, c)

    def pad_cols(a, total):
        return jnp.pad(a, ((0, 0), (0, total - a.shape[1])))

    def pad_rows(a, total):
        return jnp.pad(a, ((0, total - a.shape[0]), (0, 0)))

    kp = {}
    # GRU (input projection weights feed the hoisted `linear` call)
    kp["wih"] = p["gru_wih"].astype(bf16)
    kp["bih"] = p["gru_bih"]
    kp["whh"] = p["gru_whh"].astype(bf16)
    kp["bhh"] = p["gru_bhh"]

    # motion head -> [pose(component-major, 32-stride) | cam | shape | 0-pad]
    hw = jnp.concatenate([comp_pad_cols(p["head_w"][:, P6], 6),
                          p["head_w"][:, NPOSE:]], axis=1)          # (H, 205)
    kp["head_w"] = pad_cols(hw, PSC_PAD).astype(bf16)
    hb = jnp.concatenate([comp_pad_cols(p["head_b"][:, P6], 6),
                          p["head_b"][:, NPOSE:]], axis=1)
    kp["head_b"] = pad_cols(hb, PSC_PAD)

    # Regressor: fc1 side weight / output weight fused over [pose|cam|shape]
    w1psc = jnp.concatenate([comp_pad_rows(p["w1p"][P6, :], 6),
                             p["w1c"], p["w1s"]], axis=0)           # (205, RH)
    kp["w1psc"] = pad_rows(w1psc, PSC_PAD).astype(bf16)
    kp["w1f"] = p["w1f"].astype(bf16)
    kp["b1"] = p["b1"]
    kp["w2"] = p["w2"].astype(bf16)
    kp["b2"] = p["b2"]
    wout = jnp.concatenate([comp_pad_cols(p["wp"][:, P6], 6),
                            p["wc"], p["ws"]], axis=1)              # (RH, 205)
    kp["wout"] = pad_cols(wout, PSC_PAD).astype(bf16)
    bout = jnp.concatenate([comp_pad_cols(p["bp"][:, P6], 6),
                            p["bc"], p["bs"]], axis=1)
    kp["bout"] = pad_cols(bout, PSC_PAD)

    # SMPL-like bases indexed directly by the [pose|cam|shape] / rotmat slabs
    kp["tmpl"] = pad_cols(p["smpl_template"], V3P)                  # (1, V3P)
    sd = pad_cols(p["smpl_shapedirs"], V3P)                         # (10, V3P)
    kp["shapedirs"] = jnp.pad(
        sd, ((POSE_W + NCAM, PSC_PAD - PSC_W), (0, 0))).astype(bf16)  # (256,V3P)
    pd = comp_pad_rows(p["smpl_posedirs"][PR, :], 9)                # (288, V*3)
    kp["posedirs"] = pad_cols(pd, V3P).astype(bf16)                 # (288, V3P)
    jr = pad_cols(p["smpl_jreg3"], K3P)                             # (V*3, K3P)
    kp["jreg"] = pad_rows(jr, V3P).astype(bf16)                     # (V3P, K3P)
    return kp


# --------------------------- tiling helpers ---------------------------------
def _row_tile(n):
    # 256-row tiles at production sizes; 8 at toy sizes so the grids/index
    # maps still get exercised (per-step overhead only matters at scale).
    return 256 if n >= 512 else 8


def _col_tile(total):
    # largest lane-aligned chunk <= 2048 dividing the (128-padded) total,
    # leaving >= 2 chunks so the joint-regression accumulation axis is real.
    best = 128
    for cand in range(128, min(total, 2048) + 1, 128):
        if total % cand == 0 and cand < total:
            best = cand
    return best if total > 128 else total


# ---------------- kernel 1: generic row-tiled linear (bf16 weights) ---------
def _linear_kernel(x_ref, w_ref, b_ref, o_ref):
    o_ref[...] = (jnp.dot(x_ref[...].astype(jnp.bfloat16), w_ref[...],
                          preferred_element_type=jnp.float32)
                  + b_ref[...]).astype(o_ref.dtype)


def linear(x, w_bf16, b_f32):
    N, Fin = x.shape
    O = w_bf16.shape[1]
    tile = _row_tile(N)
    Np = _ru(N, tile)
    if Np != N:
        x = jnp.pad(x, ((0, Np - N), (0, 0)))
    out = pl.pallas_call(
        _linear_kernel,
        out_shape=jax.ShapeDtypeStruct((Np, O), jnp.float32),
        grid=(Np // tile,),
        in_specs=[
            pl.BlockSpec((tile, Fin), lambda i: (i, 0)),
            pl.BlockSpec((Fin, O), lambda i: (0, 0)),
            pl.BlockSpec((1, O), lambda i: (0, 0)),
        ],
        out_specs=pl.BlockSpec((tile, O), lambda i: (i, 0)),
        compiler_params=pltpu.CompilerParams(
            dimension_semantics=("parallel",), vmem_limit_bytes=VMEM_BUDGET),
    )(x, w_bf16, b_f32)
    return out[:N]


# ------------------- kernel 2: GRU recurrence (h @ W_hh only) ---------------
def _gru_step_kernel(gi_ref, x_ref, whh_ref, bhh_ref, y_ref, h_ref):
    t = pl.program_id(0)

    @pl.when(t == 0)
    def _():
        h_ref[...] = jnp.zeros_like(h_ref)

    h = h_ref[...]                              # (Bp, H) f32 carried state
    gi = gi_ref[...]                            # precomputed x @ W_ih + b_ih
    gh = jnp.dot(h.astype(jnp.bfloat16), whh_ref[...],
                 preferred_element_type=jnp.float32) + bhh_ref[...]
    # gate math stays f32 (v5e VPU/EUP have no bf16 path)
    r = jax.nn.sigmoid(gi[:, 0:H] + gh[:, 0:H])
    z = jax.nn.sigmoid(gi[:, H:2 * H] + gh[:, H:2 * H])
    n = jnp.tanh(gi[:, 2 * H:3 * H] + r * gh[:, 2 * H:3 * H])
    h_new = (1.0 - z) * n + z * h
    h_ref[...] = h_new
    y_ref[...] = h_new + x_ref[...]             # use_residual=True (F == H)


def temporal_encoder(gi_tbf, x_tbf, kp):
    # TODO(synk): at production F=H=2048 the (H, 3H) W_hh block should also be
    # tiled over the gate axis (or pinned single-buffered) to fit v7x's 64 MiB.
    Tn, Bp, Fn = x_tbf.shape
    return pl.pallas_call(
        _gru_step_kernel,
        out_shape=jax.ShapeDtypeStruct((Tn, Bp, H), jnp.float32),
        grid=(Tn,),
        in_specs=[
            pl.BlockSpec((pl.Squeezed(), Bp, 3 * H), lambda t: (t, 0, 0)),
            pl.BlockSpec((pl.Squeezed(), Bp, Fn), lambda t: (t, 0, 0)),
            pl.BlockSpec((H, 3 * H), lambda t: (0, 0)),
            pl.BlockSpec((1, 3 * H), lambda t: (0, 0)),
        ],
        out_specs=pl.BlockSpec((pl.Squeezed(), Bp, H), lambda t: (t, 0, 0)),
        scratch_shapes=[pltpu.VMEM((Bp, H), jnp.float32)],
        compiler_params=pltpu.CompilerParams(
            dimension_semantics=("arbitrary",), vmem_limit_bytes=VMEM_BUDGET),
    )(gi_tbf, x_tbf, kp["whh"], kp["bhh"])


# ---- kernel 3: fused head + Gram-Schmidt + 3-iter Regressor + 6D->rotmat ---
def _gs6(slab):
    """Gram-Schmidt of each joint's two 3-vectors on the component-major
    layout [a1x|a1y|a1z|a2x|a2y|a2z] (each CSTR lanes, zero-padded)."""
    a1x, a1y, a1z, a2x, a2y, a2z = [
        slab[:, i * CSTR:(i + 1) * CSTR] for i in range(6)]
    eps = 1e-8
    n1 = jax.lax.rsqrt(a1x * a1x + a1y * a1y + a1z * a1z + eps)
    b1x, b1y, b1z = a1x * n1, a1y * n1, a1z * n1
    proj = b1x * a2x + b1y * a2y + b1z * a2z
    u2x = a2x - proj * b1x
    u2y = a2y - proj * b1y
    u2z = a2z - proj * b1z
    n2 = jax.lax.rsqrt(u2x * u2x + u2y * u2y + u2z * u2z + eps)
    return b1x, b1y, b1z, u2x * n2, u2y * n2, u2z * n2


def _pose_regressor_kernel(feat_ref, hw_ref, hb_ref,
                           w1f_ref, w1psc_ref, b1_ref, w2_ref, b2_ref,
                           wout_ref, bout_ref,
                           psc_ref, rot_ref):
    feat = feat_ref[...]
    fb = feat.astype(jnp.bfloat16)

    # motion head: feature -> [pose6d(component-major) | cam | shape | 0-pad]
    hd = (jnp.dot(fb, hw_ref[...], preferred_element_type=jnp.float32)
          + hb_ref[...])

    # init_pose = rotmat_to_6d(convert_orth_6d_to_mat(X_r))  == Gram-Schmidt
    gs0 = _gs6(hd)
    psc_ref[...] = hd                       # cam / shape / zero pad pass through
    for c in range(6):
        psc_ref[:, c * CSTR:(c + 1) * CSTR] = gs0[c]
    psc = psc_ref[...]

    # 3 HMR iterations on the fused [pose|cam|shape] slab (dropout=eval id)
    for _ in range(3):
        h1 = (jnp.dot(fb, w1f_ref[...], preferred_element_type=jnp.float32)
              + jnp.dot(psc.astype(jnp.bfloat16), w1psc_ref[...],
                        preferred_element_type=jnp.float32)
              + b1_ref[...])
        h2 = (jnp.dot(h1.astype(jnp.bfloat16), w2_ref[...],
                      preferred_element_type=jnp.float32) + b2_ref[...])
        psc = (psc
               + jnp.dot(h2.astype(jnp.bfloat16), wout_ref[...],
                         preferred_element_type=jnp.float32)
               + bout_ref[...])
    psc_ref[...] = psc

    # final 6D -> rotmat (columns b1, b2, b3 = b1 x b2), component-major layout
    b1x, b1y, b1z, b2x, b2y, b2z = _gs6(psc)
    b3x = b1y * b2z - b1z * b2y
    b3y = b1z * b2x - b1x * b2z
    b3z = b1x * b2y - b1y * b2x
    comps = (b1x, b1y, b1z, b2x, b2y, b2z, b3x, b3y, b3z)
    for c in range(9):
        rot_ref[:, c * CSTR:(c + 1) * CSTR] = comps[c]


def pose_regressor(feat_p, kp, tile):
    Np = feat_p.shape[0]
    return pl.pallas_call(
        _pose_regressor_kernel,
        out_shape=(jax.ShapeDtypeStruct((Np, PSC_PAD), jnp.float32),
                   jax.ShapeDtypeStruct((Np, ROT_W), jnp.float32)),
        grid=(Np // tile,),
        in_specs=[
            pl.BlockSpec((tile, H), lambda r: (r, 0)),
            pl.BlockSpec((H, PSC_PAD), lambda r: (0, 0)),
            pl.BlockSpec((1, PSC_PAD), lambda r: (0, 0)),
            pl.BlockSpec((H, RH), lambda r: (0, 0)),
            pl.BlockSpec((PSC_PAD, RH), lambda r: (0, 0)),
            pl.BlockSpec((1, RH), lambda r: (0, 0)),
            pl.BlockSpec((RH, RH), lambda r: (0, 0)),
            pl.BlockSpec((1, RH), lambda r: (0, 0)),
            pl.BlockSpec((RH, PSC_PAD), lambda r: (0, 0)),
            pl.BlockSpec((1, PSC_PAD), lambda r: (0, 0)),
        ],
        out_specs=(pl.BlockSpec((tile, PSC_PAD), lambda r: (r, 0)),
                   pl.BlockSpec((tile, ROT_W), lambda r: (r, 0))),
        compiler_params=pltpu.CompilerParams(
            dimension_semantics=("parallel",), vmem_limit_bytes=VMEM_BUDGET),
    )(feat_p, kp["head_w"], kp["head_b"], kp["w1f"], kp["w1psc"], kp["b1"],
      kp["w2"], kp["b2"], kp["wout"], kp["bout"])


# ------------------- kernel 4: SMPL-like blend + joints ---------------------
def _smpl_kernel(psc_ref, rot_ref, tmpl_ref, bs_ref, bp_ref, jreg_ref,
                 verts_ref, joints_ref):
    vc = pl.program_id(1)

    @pl.when(vc == 0)
    def _():
        joints_ref[...] = jnp.zeros_like(joints_ref)

    v = (jnp.dot(psc_ref[...].astype(jnp.bfloat16), bs_ref[...],
                 preferred_element_type=jnp.float32)
         + jnp.dot(rot_ref[...].astype(jnp.bfloat16), bp_ref[...],
                   preferred_element_type=jnp.float32)
         + tmpl_ref[...])
    verts_ref[...] = v
    joints_ref[...] += jnp.dot(v.astype(jnp.bfloat16), jreg_ref[...],
                               preferred_element_type=jnp.float32)


def smpl_like(psc, rot, kp, tile):
    # TODO(synk): real SMPL LBS (joint kinematic chain, skinning weights) not
    # available; simplified linear blend of shape/pose bases + joint regressor.
    Np = psc.shape[0]
    vt = _col_tile(V3P)
    return pl.pallas_call(
        _smpl_kernel,
        out_shape=(jax.ShapeDtypeStruct((Np, V3P), jnp.float32),
                   jax.ShapeDtypeStruct((Np, K3P), jnp.float32)),
        grid=(Np // tile, V3P // vt),
        in_specs=[
            pl.BlockSpec((tile, PSC_PAD), lambda r, v: (r, 0)),
            pl.BlockSpec((tile, ROT_W), lambda r, v: (r, 0)),
            pl.BlockSpec((1, vt), lambda r, v: (0, v)),
            pl.BlockSpec((PSC_PAD, vt), lambda r, v: (0, v)),
            pl.BlockSpec((ROT_W, vt), lambda r, v: (0, v)),
            pl.BlockSpec((vt, K3P), lambda r, v: (v, 0)),
        ],
        out_specs=(pl.BlockSpec((tile, vt), lambda r, v: (r, v)),
                   pl.BlockSpec((tile, K3P), lambda r, v: (r, 0))),
        compiler_params=pltpu.CompilerParams(
            dimension_semantics=("parallel", "arbitrary"),
            vmem_limit_bytes=VMEM_BUDGET),
    )(psc, rot, kp["tmpl"], kp["shapedirs"], kp["posedirs"], kp["jreg"])


# ------------------------------- forward ------------------------------------
def meva_forward(x, kp, J_regressor=None):
    # TODO(synk): J_regressor override path (H36M joint regression) not implemented.
    Bn, Tn, Fn = x.shape
    N = Bn * Tn

    # ---- TemporalEncoder (GRU, n_layers=1, add_linear=False, use_residual) --
    Bp = max(8, _ru(Bn, 8))                         # pad batch to 8 sublanes
    x_tbf = jnp.transpose(x, (1, 0, 2))             # (T, B, F)
    x_tbf = jnp.pad(x_tbf, ((0, 0), (0, Bp - Bn), (0, 0)))
    # input projection hoisted out of the sequential loop (one big matmul)
    gi = linear(x_tbf.reshape(Tn * Bp, Fn), kp["wih"], kp["bih"])
    gi = gi.reshape(Tn, Bp, 3 * H)
    y_tbf = temporal_encoder(gi, x_tbf, kp)          # (T, Bp, H)
    feature = jnp.transpose(y_tbf[:, :Bn], (1, 0, 2))
    feat_flat = feature.reshape(N, H)

    # ---- fused head + Gram-Schmidt + 3-iteration Regressor + 6D->rotmat ----
    # TODO(synk): real `get_models(cfg)` VAE refiner + pretrained checkpoint
    # are external; replaced by a deterministic per-frame linear head.
    tile = _row_tile(N)
    Np = _ru(N, tile)
    feat_p = jnp.pad(feat_flat, ((0, Np - N), (0, 0)))
    psc_p, rot_p = pose_regressor(feat_p, kp, tile)  # (Np,256), (Np,288)

    # ---- SMPL-like blend + keypoint regression ----
    verts_p, joints_p = smpl_like(psc_p, rot_p, kp, tile)

    # ---- small XLA epilogue: slice pads, re-interleave, project ----
    psc = psc_p[:N]
    pred_pose = psc[:, :POSE_W].reshape(N, 6, CSTR)[:, :, :NJ].reshape(N, NPOSE)
    pred_pose = pred_pose[:, INV6]                   # back to per-joint order
    pred_cam = psc[:, POSE_W:POSE_W + NCAM]
    pred_shape = psc[:, POSE_W + NCAM:PSC_W]
    rotmat = (rot_p[:N].reshape(N, 9, CSTR)[:, :, :NJ]
              .reshape(N, 3, 3, NJ).transpose(0, 3, 2, 1))   # (N, NJ, 3, 3)
    verts = verts_p[:N, :V * 3].reshape(N, V, 3)
    kp_3d = joints_p[:N, :K * 3].reshape(N, K, 3)
    # TODO(synk): VIBE uses full perspective projection (focal 5000); weak
    # perspective s*(xy + t) kept here.
    s = pred_cam[:, 0][:, None, None]
    t2 = pred_cam[:, None, 1:3]
    kp_2d = s * (kp_3d[:, :, :2] + t2)
    # TODO(synk): real theta is 85-d (cam, axis-angle pose, shape); rotmat ->
    # axis-angle conversion omitted, 6D pose kept instead.
    theta = jnp.concatenate([pred_cam, pred_pose, pred_shape], axis=-1)

    out = {
        "theta": theta.reshape(Bn, Tn, -1),
        "verts": verts.reshape(Bn, Tn, -1, 3),
        "kp_2d": kp_2d.reshape(Bn, Tn, -1, 2),
        "kp_3d": kp_3d.reshape(Bn, Tn, -1, 3),
        "rotmat": rotmat.reshape(Bn, Tn, -1, 3, 3),
    }
    return [out]


# --------------- pure-JAX reference (original, unfused layout) --------------
def meva_forward_ref(x, p):
    Bn, Tn, Fn = x.shape
    N = Bn * Tn

    def mm(a, w):
        return jnp.dot(a.astype(jnp.bfloat16), w.astype(jnp.bfloat16),
                       preferred_element_type=jnp.float32)

    h = jnp.zeros((Bn, H), jnp.float32)
    ys = []
    for t in range(Tn):
        xt = x[:, t, :]
        gi = mm(xt, p["gru_wih"]) + p["gru_bih"]
        gh = mm(h, p["gru_whh"]) + p["gru_bhh"]
        r = jax.nn.sigmoid(gi[:, :H] + gh[:, :H])
        z = jax.nn.sigmoid(gi[:, H:2 * H] + gh[:, H:2 * H])
        n = jnp.tanh(gi[:, 2 * H:] + r * gh[:, 2 * H:])
        h = (1.0 - z) * n + z * h
        ys.append(h + xt)
    feature = jnp.stack(ys, axis=1).reshape(N, H)

    head = mm(feature, p["head_w"]) + p["head_b"]
    X_r = head[:, :NPOSE]
    cam = head[:, NPOSE:NPOSE + NCAM]
    shp = head[:, NPOSE + NCAM:]

    def gs(x6):
        a1, a2 = x6[:, 0:3], x6[:, 3:6]
        eps = 1e-8
        b1 = a1 * jax.lax.rsqrt(jnp.sum(a1 * a1, -1, keepdims=True) + eps)
        proj = jnp.sum(b1 * a2, -1, keepdims=True)
        u2 = a2 - proj * b1
        b2 = u2 * jax.lax.rsqrt(jnp.sum(u2 * u2, -1, keepdims=True) + eps)
        return jnp.concatenate([b1, b2], -1)

    pose = gs(X_r.reshape(N * NJ, 6)).reshape(N, NPOSE)
    for _ in range(3):
        h1 = (mm(feature, p["w1f"]) + mm(pose, p["w1p"]) + mm(shp, p["w1s"])
              + mm(cam, p["w1c"]) + p["b1"])
        h2 = mm(h1, p["w2"]) + p["b2"]
        pose = mm(h2, p["wp"]) + p["bp"] + pose
        shp = mm(h2, p["ws"]) + p["bs"] + shp
        cam = mm(h2, p["wc"]) + p["bc"] + cam

    p6 = gs(pose.reshape(N * NJ, 6))
    b1, b2 = p6[:, 0:3], p6[:, 3:6]
    b3 = jnp.cross(b1, b2)
    rotmat = jnp.stack([b1, b2, b3], axis=-1)
    rot_flat = rotmat.reshape(N, NJ * 9)

    verts = (mm(shp, p["smpl_shapedirs"]) + mm(rot_flat, p["smpl_posedirs"])
             + p["smpl_template"])
    kp_3d = mm(verts, p["smpl_jreg3"]).reshape(N, K, 3)
    s = cam[:, 0][:, None, None]
    t2 = cam[:, None, 1:3]
    kp_2d = s * (kp_3d[:, :, :2] + t2)
    theta = jnp.concatenate([cam, pose, shp], axis=-1)
    return {
        "theta": theta.reshape(Bn, Tn, -1),
        "verts": verts.reshape(Bn, Tn, V, 3),
        "kp_2d": kp_2d.reshape(Bn, Tn, K, 2),
        "kp_3d": kp_3d.reshape(Bn, Tn, K, 3),
        "rotmat": rotmat.reshape(Bn, Tn, NJ, 3, 3),
    }


if __name__ == "__main__":
    key = jax.random.PRNGKey(0)
    x = jax.random.normal(key, (B, T, F), dtype=jnp.float32)
    params = init_params(jax.random.PRNGKey(1))
    kparams = prepare_params(params)

    fwd = jax.jit(meva_forward)
    smpl_output = fwd(x, kparams)
    jax.tree_util.tree_map(jax.block_until_ready, smpl_output)

    s0 = smpl_output[0]
    assert s0["theta"].shape == (B, T, NCAM + NPOSE + NSHAPE)
    assert s0["verts"].shape == (B, T, V, 3)
    assert s0["kp_2d"].shape == (B, T, K, 2)
    assert s0["kp_3d"].shape == (B, T, K, 3)
    assert s0["rotmat"].shape == (B, T, NJ, 3, 3)

    # numerics vs a pure-JAX reference of the original (unpermuted / unfused)
    # forward, using the same bf16-weight / f32-accumulation policy
    ref = meva_forward_ref(x, params)
    for name in ("theta", "verts", "kp_2d", "kp_3d", "rotmat"):
        got, want = s0[name], ref[name]
        assert got.shape == want.shape, name
        assert bool(jnp.all(jnp.isfinite(got))), name
        err = float(jnp.max(jnp.abs(got - want)))
        assert err < 3e-2, (name, err)
    print("KERNEL_OK")
</pallas_src>

<mosaic_0001>
module attributes {stable_mosaic.version = 11 : i64} {
  func.func @_linear_kernel(%arg0: i32, %arg1: memref<8x32xf32, #tpu.memory_space<vmem>>, %arg2: memref<32x96xbf16, #tpu.memory_space<vmem>>, %arg3: memref<1x96xf32, #tpu.memory_space<vmem>>, %arg4: memref<8x96xf32, #tpu.memory_space<vmem>>) attributes {dimension_semantics = [#tpu.dimension_semantics<parallel>], iteration_bounds = array<i64: 8>, scalar_prefetch = 0 : i64, scratch_operands = 0 : i64, tpu.core_type = #tpu.core_type<tc>, window_params = [{transform_indices = @transform_0, window_bounds = array<i64: 8, 32>}, {pipeline_mode = #tpu.pipeline_mode<synchronous>, transform_indices = @transform_1, window_bounds = array<i64: 32, 96>}, {pipeline_mode = #tpu.pipeline_mode<synchronous>, transform_indices = @transform_2, window_bounds = array<i64: 1, 96>}, {transform_indices = @transform_3, window_bounds = array<i64: 8, 96>}]} {
    %c0 = arith.constant 0 : index
    %c0_0 = arith.constant 0 : index
    %0 = vector.load %arg1[%c0, %c0_0] : memref<8x32xf32, #tpu.memory_space<vmem>>, vector<8x32xf32>
    %1 = arith.truncf %0 : vector<8x32xf32> to vector<8x32xbf16>
    %c0_1 = arith.constant 0 : index
    %c0_2 = arith.constant 0 : index
    %2 = vector.load %arg2[%c0_1, %c0_2] : memref<32x96xbf16, #tpu.memory_space<vmem>>, vector<32x96xbf16>
    %cst = arith.constant dense<0.000000e+00> : vector<8x96xf32>
    %3 = tpu.matmul %1, %2, %cst {dimension_numbers = #tpu.dot_dimension_numbers<[1], [0], [0], [1], [0, 0, 1, 1], [], []>} : vector<8x32xbf16>, vector<32x96xbf16>, vector<8x96xf32> -> vector<8x96xf32>
    %c0_3 = arith.constant 0 : index
    %c0_4 = arith.constant 0 : index
    %4 = vector.load %arg3[%c0_3, %c0_4] : memref<1x96xf32, #tpu.memory_space<vmem>>, vector<1x96xf32>
    %5 = vector.broadcast %4 : vector<1x96xf32> to vector<8x96xf32>
    %6 = arith.addf %3, %5 : vector<8x96xf32>
    %c0_5 = arith.constant 0 : index
    %c0_6 = arith.constant 0 : index
    %7 = vector.load %arg4[%c0_5, %c0_6] : memref<8x96xf32, #tpu.memory_space<vmem>>, vector<8x96xf32>
    tpu.vector_store %arg4[%c0_5, %c0_6], %6 {strides = array<i32>} : memref<8x96xf32, #tpu.memory_space<vmem>>, vector<8x96xf32>,
    return
  }
  func.func @transform_0(%arg0: i32) -> (i32, i32) {
    %c0_i32 = arith.constant 0 : i32
    %c0_i32_0 = arith.constant 0 : i32
    return %arg0, %c0_i32 : i32, i32
  }
  func.func @transform_1(%arg0: i32) -> (i32, i32) {
    %c0_i32 = arith.constant 0 : i32
    %c0_i32_0 = arith.constant 0 : i32
    %c0_i32_1 = arith.constant 0 : i32
    return %c0_i32, %c0_i32_0 : i32, i32
  }
  func.func @transform_2(%arg0: i32) -> (i32, i32) {
    %c0_i32 = arith.constant 0 : i32
    %c0_i32_0 = arith.constant 0 : i32
    %c0_i32_1 = arith.constant 0 : i32
    return %c0_i32, %c0_i32_0 : i32, i32
  }
  func.func @transform_3(%arg0: i32) -> (i32, i32) {
    %c0_i32 = arith.constant 0 : i32
    %c0_i32_0 = arith.constant 0 : i32
    return %arg0, %c0_i32 : i32, i32
  }
}

module attributes {stable_mosaic.version = 11 : i64} {
  func.func @_gru_step_kernel(%arg0: i32, %arg1: memref<1x8x96xf32, #tpu.memory_space<vmem>>, %arg2: memref<1x8x32xf32, #tpu.memory_space<vmem>>, %arg3: memref<32x96xbf16, #tpu.memory_space<vmem>>, %arg4: memref<1x96xf32, #tpu.memory_space<vmem>>, %arg5: memref<1x8x32xf32, #tpu.memory_space<vmem>>, %arg6: memref<8x32xf32, #tpu.memory_space<vmem>>) attributes {dimension_semantics = [#tpu.dimension_semantics<arbitrary>], iteration_bounds = array<i64: 8>, scalar_prefetch = 0 : i64, scratch_operands = 1 : i64, tpu.core_type = #tpu.core_type<tc>, window_params = [{transform_indices = @transform_0, window_bounds = array<i64: 1, 8, 96>}, {transform_indices = @transform_1, window_bounds = array<i64: 1, 8, 32>}, {pipeline_mode = #tpu.pipeline_mode<synchronous>, transform_indices = @transform_2, window_bounds = array<i64: 32, 96>}, {pipeline_mode = #tpu.pipeline_mode<synchronous>, transform_indices = @transform_3, window_bounds = array<i64: 1, 96>}, {transform_indices = @transform_4, window_bounds = array<i64: 1, 8, 32>}]} {
    %c0_i32 = arith.constant 0 : i32
    %0 = arith.cmpi eq, %arg0, %c0_i32 : i32
    %1 = arith.extui %0 : i1 to i32
    %c0_i32_0 = arith.constant 0 : i32
    %2 = arith.cmpi ne, %1, %c0_i32_0 : i32
    scf.if %2 {
      %cst_20 = arith.constant 0.000000e+00 : f32
      %45 = vector.broadcast %cst_20 : f32 to vector<8x32xf32>
      %c0_21 = arith.constant 0 : index
      %c0_22 = arith.constant 0 : index
      %46 = vector.load %arg6[%c0_21, %c0_22] : memref<8x32xf32, #tpu.memory_space<vmem>>, vector<8x32xf32>
      tpu.vector_store %arg6[%c0_21, %c0_22], %45 {strides = array<i32>} : memref<8x32xf32, #tpu.memory_space<vmem>>, vector<8x32xf32>,
    } else {
    }
    %c0 = arith.constant 0 : index
    %c0_1 = arith.constant 0 : index
    %3 = vector.load %arg6[%c0, %c0_1] : memref<8x32xf32, #tpu.memory_space<vmem>>, vector<8x32xf32>
    %c0_2 = arith.constant 0 : index
    %c0_3 = arith.constant 0 : index
    %c0_4 = arith.constant 0 : index
    %4 = vector.load %arg1[%c0_2, %c0_3, %c0_4] : memref<1x8x96xf32, #tpu.memory_space<vmem>>, vector<1x8x96xf32>
    %5 = vector.shape_cast %4 : vector<1x8x96xf32> to vector<8x96xf32>
    %6 = arith.truncf %3 : vector<8x32xf32> to vector<8x32xbf16>
    %c0_5 = arith.constant 0 : index
    %c0_6 = arith.constant 0 : index
    %7 = vector.load %arg3[%c0_5, %c0_6] : memref<32x96xbf16, #tpu.memory_space<vmem>>, vector<32x96xbf16>
    %cst = arith.constant dense<0.000000e+00> : vector<8x96xf32>
    %8 = tpu.matmul %6, %7, %cst {dimension_numbers = #tpu.dot_dimension_numbers<[1], [0], [0], [1], [0, 0, 1, 1], [], []>} : vector<8x32xbf16>, vector<32x96xbf16>, vector<8x96xf32> -> vector<8x96xf32>
    %c0_7 = arith.constant 0 : index
    %c0_8 = arith.constant 0 : index
    %9 = vector.load %arg4[%c0_7, %c0_8] : memref<1x96xf32, #tpu.memory_space<vmem>>, vector<1x96xf32>
    %10 = vector.broadcast %9 : vector<1x96xf32> to vector<8x96xf32>
    %11 = arith.addf %8, %10 : vector<8x96xf32>
    %12 = vector.extract_strided_slice %5 {offsets = [0, 0], sizes = [8, 32], strides = [1, 1]} : vector<8x96xf32> to vector<8x32xf32>
    %13 = vector.extract_strided_slice %11 {offsets = [0, 0], sizes = [8, 32], strides = [1, 1]} : vector<8x96xf32> to vector<8x32xf32>
    %14 = arith.addf %12, %13 : vector<8x32xf32>
    %15 = arith.negf %14 : vector<8x32xf32>
    %16 = math.exp %15 : vector<8x32xf32>
    %cst_9 = arith.constant 1.000000e+00 : f32
    %17 = vector.broadcast %cst_9 : f32 to vector<8x32xf32>
    %18 = arith.addf %17, %16 : vector<8x32xf32>
    %19 = arith.divf %17, %18 : vector<8x32xf32>
    %20 = vector.extract_strided_slice %5 {offsets = [0, 32], sizes = [8, 32], strides = [1, 1]} : vector<8x96xf32> to vector<8x32xf32>
    %21 = vector.extract_strided_slice %11 {offsets = [0, 32], sizes = [8, 32], strides = [1, 1]} : vector<8x96xf32> to vector<8x32xf32>
    %22 = arith.addf %20, %21 : vector<8x32xf32>
    %23 = arith.negf %22 : vector<8x32xf32>
    %24 = math.exp %23 : vector<8x32xf32>
    %cst_10 = arith.constant 1.000000e+00 : f32
    %25 = vector.broadcast %cst_10 : f32 to vector<8x32xf32>
    %26 = arith.addf %25, %24 : vector<8x32xf32>
    %27 = arith.divf %25, %26 : vector<8x32xf32>
    %28 = vector.extract_strided_slice %5 {offsets = [0, 64], sizes = [8, 32], strides = [1, 1]} : vector<8x96xf32> to vector<8x32xf32>
    %29 = vector.extract_strided_slice %11 {offsets = [0, 64], sizes = [8, 32], strides = [1, 1]} : vector<8x96xf32> to vector<8x32xf32>
    %30 = arith.mulf %19, %29 : vector<8x32xf32>
    %31 = arith.addf %28, %30 : vector<8x32xf32>
    %32 = math.tanh %31 : vector<8x32xf32>
    %cst_11 = arith.constant 1.000000e+00 : f32
    %33 = vector.broadcast %cst_11 : f32 to vector<8x32xf32>
    %34 = arith.subf %33, %27 : vector<8x32xf32>
    %35 = arith.mulf %34, %32 : vector<8x32xf32>
    %36 = arith.mulf %27, %3 : vector<8x32xf32>
    %37 = arith.addf %35, %36 : vector<8x32xf32>
    %c0_12 = arith.constant 0 : index
    %c0_13 = arith.constant 0 : index
    %38 = vector.load %arg6[%c0_12, %c0_13] : memref<8x32xf32, #tpu.memory_space<vmem>>, vector<8x32xf32>
    tpu.vector_store %arg6[%c0_12, %c0_13], %37 {strides = array<i32>} : memref<8x32xf32, #tpu.memory_space<vmem>>, vector<8x32xf32>,
    %c0_14 = arith.constant 0 : index
    %c0_15 = arith.constant 0 : index
    %c0_16 = arith.constant 0 : index
    %39 = vector.load %arg2[%c0_14, %c0_15, %c0_16] : memref<1x8x32xf32, #tpu.memory_space<vmem>>, vector<1x8x32xf32>
    %40 = vector.shape_cast %39 : vector<1x8x32xf32> to vector<8x32xf32>
    %41 = arith.addf %37, %40 : vector<8x32xf32>
    %c0_17 = arith.constant 0 : index
    %c0_18 = arith.constant 0 : index
    %c0_19 = arith.constant 0 : index
    %42 = vector.load %arg5[%c0_17, %c0_18, %c0_19] : memref<1x8x32xf32, #tpu.memory_space<vmem>>, vector<1x8x32xf32>
    %43 = vector.shape_cast %42 : vector<1x8x32xf32> to vector<8x32xf32>
    %44 = vector.shape_cast %41 : vector<8x32xf32> to vector<1x8x32xf32>
    tpu.vector_store %arg5[%c0_17, %c0_18, %c0_19], %44 {strides = array<i32>} : memref<1x8x32xf32, #tpu.memory_space<vmem>>, vector<1x8x32xf32>,
    return
  }
  func.func @transform_0(%arg0: i32) -> (i32, i32, i32) {
    %c0_i32 = arith.constant 0 : i32
    %c0_i32_0 = arith.constant 0 : i32
    %c0_i32_1 = arith.constant 0 : i32
    return %arg0, %c0_i32, %c0_i32_0 : i32, i32, i32
  }
  func.func @transform_1(%arg0: i32) -> (i32, i32, i32) {
    %c0_i32 = arith.constant 0 : i32
    %c0_i32_0 = arith.constant 0 : i32
    %c0_i32_1 = arith.constant 0 : i32
    return %arg0, %c0_i32, %c0_i32_0 : i32, i32, i32
  }
  func.func @transform_2(%arg0: i32) -> (i32, i32) {
    %c0_i32 = arith.constant 0 : i32
    %c0_i32_0 = arith.constant 0 : i32
    %c0_i32_1 = arith.constant 0 : i32
    return %c0_i32, %c0_i32_0 : i32, i32
  }
  func.func @transform_3(%arg0: i32) -> (i32, i32) {
    %c0_i32 = arith.constant 0 : i32
    %c0_i32_0 = arith.constant 0 : i32
    %c0_i32_1 = arith.constant 0 : i32
    return %c0_i32, %c0_i32_0 : i32, i32
  }
  func.func @transform_4(%arg0: i32) -> (i32, i32, i32) {
    %c0_i32 = arith.constant 0 : i32
    %c0_i32_0 = arith.constant 0 : i32
    %c0_i32_1 = arith.constant 0 : i32
    return %arg0, %c0_i32, %c0_i32_0 : i32, i32, i32
  }
}

module attributes {stable_mosaic.version = 11 : i64} {
  func.func @_pose_regressor_kernel(%arg0: i32, %arg1: memref<8x32xf32, #tpu.memory_space<vmem>>, %arg2: memref<32x256xbf16, #tpu.memory_space<vmem>>, %arg3: memref<1x256xf32, #tpu.memory_space<vmem>>, %arg4: memref<32x64xbf16, #tpu.memory_space<vmem>>, %arg5: memref<256x64xbf16, #tpu.memory_space<vmem>>, %arg6: memref<1x64xf32, #tpu.memory_space<vmem>>, %arg7: memref<64x64xbf16, #tpu.memory_space<vmem>>, %arg8: memref<1x64xf32, #tpu.memory_space<vmem>>, %arg9: memref<64x256xbf16, #tpu.memory_space<vmem>>, %arg10: memref<1x256xf32, #tpu.memory_space<vmem>>, %arg11: memref<8x256xf32, #tpu.memory_space<vmem>>, %arg12: memref<8x288xf32, #tpu.memory_space<vmem>>) attributes {dimension_semantics = [#tpu.dimension_semantics<parallel>], iteration_bounds = array<i64: 2>, scalar_prefetch = 0 : i64, scratch_operands = 0 : i64, tpu.core_type = #tpu.core_type<tc>, window_params = [{transform_indices = @transform_0, window_bounds = array<i64: 8, 32>}, {pipeline_mode = #tpu.pipeline_mode<synchronous>, transform_indices = @transform_1, window_bounds = array<i64: 32, 256>}, {pipeline_mode = #tpu.pipeline_mode<synchronous>, transform_indices = @transform_2, window_bounds = array<i64: 1, 256>}, {pipeline_mode = #tpu.pipeline_mode<synchronous>, transform_indices = @transform_3, window_bounds = array<i64: 32, 64>}, {pipeline_mode = #tpu.pipeline_mode<synchronous>, transform_indices = @transform_4, window_bounds = array<i64: 256, 64>}, {pipeline_mode = #tpu.pipeline_mode<synchronous>, transform_indices = @transform_5, window_bounds = array<i64: 1, 64>}, {pipeline_mode = #tpu.pipeline_mode<synchronous>, transform_indices = @transform_6, window_bounds = array<i64: 64, 64>}, {pipeline_mode = #tpu.pipeline_mode<synchronous>, transform_indices = @transform_7, window_bounds = array<i64: 1, 64>}, {pipeline_mode = #tpu.pipeline_mode<synchronous>, transform_indices = @transform_8, window_bounds = array<i64: 64, 256>}, {pipeline_mode = #tpu.pipeline_mode<synchronous>, transform_indices = @transform_9, window_bounds = array<i64: 1, 256>}, {transform_indices = @transform_10, window_bounds = array<i64: 8, 256>}, {transform_indices = @transform_11, window_bounds = array<i64: 8, 288>}]} {
    %c0 = arith.constant 0 : index
    %c0_0 = arith.constant 0 : index
    %0 = vector.load %arg1[%c0, %c0_0] : memref<8x32xf32, #tpu.memory_space<vmem>>, vector<8x32xf32>
    %1 = arith.truncf %0 : vector<8x32xf32> to vector<8x32xbf16>
    %c0_1 = arith.constant 0 : index
    %c0_2 = arith.constant 0 : index
    %2 = vector.load %arg2[%c0_1, %c0_2] : memref<32x256xbf16, #tpu.memory_space<vmem>>, vector<32x256xbf16>
    %cst = arith.constant dense<0.000000e+00> : vector<8x256xf32>
    %3 = tpu.matmul %1, %2, %cst {dimension_numbers = #tpu.dot_dimension_numbers<[1], [0], [0], [1], [0, 0, 1, 1], [], []>} : vector<8x32xbf16>, vector<32x256xbf16>, vector<8x256xf32> -> vector<8x256xf32>
    %c0_3 = arith.constant 0 : index
    %c0_4 = arith.constant 0 : index
    %4 = vector.load %arg3[%c0_3, %c0_4] : memref<1x256xf32, #tpu.memory_space<vmem>>, vector<1x256xf32>
    %5 = vector.broadcast %4 : vector<1x256xf32> to vector<8x256xf32>
    %6 = arith.addf %3, %5 : vector<8x256xf32>
    %7 = vector.extract_strided_slice %6 {offsets = [0, 0], sizes = [8, 32], strides = [1, 1]} : vector<8x256xf32> to vector<8x32xf32>
    %8 = vector.extract_strided_slice %6 {offsets = [0, 32], sizes = [8, 32], strides = [1, 1]} : vector<8x256xf32> to vector<8x32xf32>
    %9 = vector.extract_strided_slice %6 {offsets = [0, 64], sizes = [8, 32], strides = [1, 1]} : vector<8x256xf32> to vector<8x32xf32>
    %10 = vector.extract_strided_slice %6 {offsets = [0, 96], sizes = [8, 32], strides = [1, 1]} : vector<8x256xf32> to vector<8x32xf32>
    %11 = vector.extract_strided_slice %6 {offsets = [0, 128], sizes = [8, 32], strides = [1, 1]} : vector<8x256xf32> to vector<8x32xf32>
    %12 = vector.extract_strided_slice %6 {offsets = [0, 160], sizes = [8, 32], strides = [1, 1]} : vector<8x256xf32> to vector<8x32xf32>
    %13 = arith.mulf %7, %7 : vector<8x32xf32>
    %14 = arith.mulf %8, %8 : vector<8x32xf32>
    %15 = arith.addf %13, %14 : vector<8x32xf32>
    %16 = arith.mulf %9, %9 : vector<8x32xf32>
    %17 = arith.addf %15, %16 : vector<8x32xf32>
    %cst_5 = arith.constant 9.99999993E-9 : f32
    %18 = vector.broadcast %cst_5 : f32 to vector<8x32xf32>
    %19 = arith.addf %17, %18 : vector<8x32xf32>
    %20 = math.rsqrt %19 : vector<8x32xf32>
    %21 = arith.mulf %7, %20 : vector<8x32xf32>
    %22 = arith.mulf %8, %20 : vector<8x32xf32>
    %23 = arith.mulf %9, %20 : vector<8x32xf32>
    %24 = arith.mulf %21, %10 : vector<8x32xf32>
    %25 = arith.mulf %22, %11 : vector<8x32xf32>
    %26 = arith.addf %24, %25 : vector<8x32xf32>
    %27 = arith.mulf %23, %12 : vector<8x32xf32>
    %28 = arith.addf %26, %27 : vector<8x32xf32>
    %29 = arith.mulf %28, %21 : vector<8x32xf32>
    %30 = arith.subf %10, %29 : vector<8x32xf32>
    %31 = arith.mulf %28, %22 : vector<8x32xf32>
    %32 = arith.subf %11, %31 : vector<8x32xf32>
    %33 = arith.mulf %28, %23 : vector<8x32xf32>
    %34 = arith.subf %12, %33 : vector<8x32xf32>
    %35 = arith.mulf %30, %30 : vector<8x32xf32>
    %36 = arith.mulf %32, %32 : vector<8x32xf32>
    %37 = arith.addf %35, %36 : vector<8x32xf32>
    %38 = arith.mulf %34, %34 : vector<8x32xf32>
    %39 = arith.addf %37, %38 : vector<8x32xf32>
    %cst_6 = arith.constant 9.99999993E-9 : f32
    %40 = vector.broadcast %cst_6 : f32 to vector<8x32xf32>
    %41 = arith.addf %39, %40 : vector<8x32xf32>
    %42 = math.rsqrt %41 : vector<8x32xf32>
    %43 = arith.mulf %30, %42 : vector<8x32xf32>
    %44 = arith.mulf %32, %42 : vector<8x32xf32>
    %45 = arith.mulf %34, %42 : vector<8x32xf32>
    %c0_7 = arith.constant 0 : index
    %c0_8 = arith.constant 0 : index
    %46 = vector.load %arg11[%c0_7, %c0_8] : memref<8x256xf32, #tpu.memory_space<vmem>>, vector<8x256xf32>
    tpu.vector_store %arg11[%c0_7, %c0_8], %6 {strides = array<i32>} : memref<8x256xf32, #tpu.memory_space<vmem>>, vector<8x256xf32>,
    %c0_9 = arith.constant 0 : index
    %c0_10 = arith.constant 0 : index
    %47 = vector.load %arg11[%c0_9, %c0_10] : memref<8x256xf32, #tpu.memory_space<vmem>>, vector<8x32xf32>
    tpu.vector_store %arg11[%c0_9, %c0_10], %21 {strides = array<i32>} : memref<8x256xf32, #tpu.memory_space<vmem>>, vector<8x32xf32>,
    %c0_11 = arith.constant 0 : index
    %c32 = arith.constant 32 : index
    %48 = vector.load %arg11[%c0_11, %c32] : memref<8x256xf32, #tpu.memory_space<vmem>>, vector<8x32xf32>
    tpu.vector_store %arg11[%c0_11, %c32], %22 {strides = array<i32>} : memref<8x256xf32, #tpu.memory_space<vmem>>, vector<8x32xf32>,
    %c0_12 = arith.constant 0 : index
    %c64 = arith.constant 64 : index
    %49 = vector.load %arg11[%c0_12, %c64] : memref<8x256xf32, #tpu.memory_space<vmem>>, vector<8x32xf32>
    tpu.vector_store %arg11[%c0_12, %c64], %23 {strides = array<i32>} : memref<8x256xf32, #tpu.memory_space<vmem>>, vector<8x32xf32>,
    %c0_13 = arith.constant 0 : index
    %c96 = arith.constant 96 : index
    %50 = vector.load %arg11[%c0_13, %c96] : memref<8x256xf32, #tpu.memory_space<vmem>>, vector<8x32xf32>
    tpu.vector_store %arg11[%c0_13, %c96], %43 {strides = array<i32>} : memref<8x256xf32, #tpu.memory_space<vmem>>, vector<8x32xf32>,
    %c0_14 = arith.constant 0 : index
    %c128 = arith.constant 128 : index
    %51 = vector.load %arg11[%c0_14, %c128] : memref<8x256xf32, #tpu.memory_space<vmem>>, vector<8x32xf32>
    tpu.vector_store %arg11[%c0_14, %c128], %44 {strides = array<i32>} : memref<8x256xf32, #tpu.memory_space<vmem>>, vector<8x32xf32>,
    %c0_15 = arith.constant 0 : index
    %c160 = arith.constant 160 : index
    %52 = vector.load %arg11[%c0_15, %c160] : memref<8x256xf32, #tpu.memory_space<vmem>>, vector<8x32xf32>
    tpu.vector_store %arg11[%c0_15, %c160], %45 {strides = array<i32>} : memref<8x256xf32, #tpu.memory_space<vmem>>, vector<8x32xf32>,
    %c0_16 = arith.constant 0 : index
    %c0_17 = arith.constant 0 : index
    %53 = vector.load %arg11[%c0_16, %c0_17] : memref<8x256xf32, #tpu.memory_space<vmem>>, vector<8x256xf32>
    %c0_18 = arith.constant 0 : index
    %c0_19 = arith.constant 0 : index
    %54 = vector.load %arg4[%c0_18, %c0_19] : memref<32x64xbf16, #tpu.memory_space<vmem>>, vector<32x64xbf16>
    %cst_20 = arith.constant dense<0.000000e+00> : vector<8x64xf32>
    %55 = tpu.matmul %1, %54, %cst_20 {dimension_numbers = #tpu.dot_dimension_numbers<[1], [0], [0], [1], [0, 0, 1, 1], [], []>} : vector<8x32xbf16>, vector<32x64xbf16>, vector<8x64xf32> -> vector<8x64xf32>
    %56 = arith.truncf %53 : vector<8x256xf32> to vector<8x256xbf16>
    %c0_21 = arith.constant 0 : index
    %c0_22 = arith.constant 0 : index
    %57 = vector.load %arg5[%c0_21, %c0_22] : memref<256x64xbf16, #tpu.memory_space<vmem>>, vector<256x64xbf16>
    %cst_23 = arith.constant dense<0.000000e+00> : vector<8x64xf32>
    %58 = tpu.matmul %56, %57, %cst_23 {dimension_numbers = #tpu.dot_dimension_numbers<[1], [0], [0], [1], [0, 0, 1, 1], [], []>} : vector<8x256xbf16>, vector<256x64xbf16>, vector<8x64xf32> -> vector<8x64xf32>
    %59 = arith.addf %55, %58 : vector<8x64xf32>
    %c0_24 = arith.constant 0 : index
    %c0_25 = arith.constant 0 : index
    %60 = vector.load %arg6[%c0_24, %c0_25] : memref<1x64xf32, #tpu.memory_space<vmem>>, vector<1x64xf32>
    %61 = vector.broadcast %60 : vector<1x64xf32> to vector<8x64xf32>
    %62 = arith.addf %59, %61 : vector<8x64xf32>
    %63 = arith.truncf %62 : vector<8x64xf32> to vector<8x64xbf16>
    %c0_26 = arith.constant 0 : index
    %c0_27 = arith.constant 0 : index
    %64 = vector.load %arg7[%c0_26, %c0_27] : memref<64x64xbf16, #tpu.memory_space<vmem>>, vector<64x64xbf16>
    %cst_28 = arith.constant dense<0.000000e+00> : vector<8x64xf32>
    %65 = tpu.matmul %63, %64, %cst_28 {dimension_numbers = #tpu.dot_dimension_numbers<[1], [0], [0], [1], [0, 0, 1, 1], [], []>} : vector<8x64xbf16>, vector<64x64xbf16>, vector<8x64xf32> -> vector<8x64xf32>
    %c0_29 = arith.constant 0 : index
    %c0_30 = arith.constant 0 : index
    %66 = vector.load %arg8[%c0_29, %c0_30] : memref<1x64xf32, #tpu.memory_space<vmem>>, vector<1x64xf32>
    %67 = vector.broadcast %66 : vector<1x64xf32> to vector<8x64xf32>
    %68 = arith.addf %65, %67 : vector<8x64xf32>
    %69 = arith.truncf %68 : vector<8x64xf32> to vector<8x64xbf16>
    %c0_31 = arith.constant 0 : index
    %c0_32 = arith.constant 0 : index
    %70 = vector.load %arg9[%c0_31, %c0_32] : memref<64x256xbf16, #tpu.memory_space<vmem>>, vector<64x256xbf16>
    %cst_33 = arith.constant dense<0.000000e+00> : vector<8x256xf32>
    %71 = tpu.matmul %69, %70, %cst_33 {dimension_numbers = #tpu.dot_dimension_numbers<[1], [0], [0], [1], [0, 0, 1, 1], [], []>} : vector<8x64xbf16>, vector<64x256xbf16>, vector<8x256xf32> -> vector<8x256xf32>
    %72 = arith.addf %53, %71 : vector<8x256xf32>
    %c0_34 = arith.constant 0 : index
    %c0_35 = arith.constant 0 : index
    %73 = vector.load %arg10[%c0_34, %c0_35] : memref<1x256xf32, #tpu.memory_space<vmem>>, vector<1x256xf32>
    %74 = vector.broadcast %73 : vector<1x256xf32> to vector<8x256xf32>
    %75 = arith.addf %72, %74 : vector<8x256xf32>
    %c0_36 = arith.constant 0 : index
    %c0_37 = arith.constant 0 : index
    %76 = vector.load %arg4[%c0_36, %c0_37] : memref<32x64xbf16, #tpu.memory_space<vmem>>, vector<32x64xbf16>
    %cst_38 = arith.constant dense<0.000000e+00> : vector<8x64xf32>
    %77 = tpu.matmul %1, %76, %cst_38 {dimension_numbers = #tpu.dot_dimension_numbers<[1], [0], [0], [1], [0, 0, 1, 1], [], []>} : vector<8x32xbf16>, vector<32x64xbf16>, vector<8x64xf32> -> vector<8x64xf32>
    %78 = arith.truncf %75 : vector<8x256xf32> to vector<8x256xbf16>
    %c0_39 = arith.constant 0 : index
    %c0_40 = arith.constant 0 : index
    %79 = vector.load %arg5[%c0_39, %c0_40] : memref<256x64xbf16, #tpu.memory_space<vmem>>, vector<256x64xbf16>
    %cst_41 = arith.constant dense<0.000000e+00> : vector<8x64xf32>
    %80 = tpu.matmul %78, %79, %cst_41 {dimension_numbers = #tpu.dot_dimension_numbers<[1], [0], [0], [1], [0, 0, 1, 1], [], []>} : vector<8x256xbf16>, vector<256x64xbf16>, vector<8x64xf32> -> vector<8x64xf32>
    %81 = arith.addf %77, %80 : vector<8x64xf32>
    %c0_42 = arith.constant 0 : index
    %c0_43 = arith.constant 0 : index
    %82 = vector.load %arg6[%c0_42, %c0_43] : memref<1x64xf32, #tpu.memory_space<vmem>>, vector<1x64xf32>
    %83 = vector.broadcast %82 : vector<1x64xf32> to vector<8x64xf32>
    %84 = arith.addf %81, %83 : vector<8x64xf32>
    %85 = arith.truncf %84 : vector<8x64xf32> to vector<8x64xbf16>
    %c0_44 = arith.constant 0 : index
    %c0_45 = arith.constant 0 : index
    %86 = vector.load %arg7[%c0_44, %c0_45] : memref<64x64xbf16, #tpu.memory_space<vmem>>, vector<64x64xbf16>
    %cst_46 = arith.constant dense<0.000000e+00> : vector<8x64xf32>
    %87 = tpu.matmul %85, %86, %cst_46 {dimension_numbers = #tpu.dot_dimension_numbers<[1], [0], [0], [1], [0, 0, 1, 1], [], []>} : vector<8x64xbf16>, vector<64x64xbf16>, vector<8x64xf32> -> vector<8x64xf32>
    %c0_47 = arith.constant 0 : index
    %c0_48 = arith.constant 0 : index
    %88 = vector.load %arg8[%c0_47, %c0_48] : memref<1x64xf32, #tpu.memory_space<vmem>>, vector<1x64xf32>
    %89 = vector.broadcast %88 : vector<1x64xf32> to vector<8x64xf32>
    %90 = arith.addf %87, %89 : vector<8x64xf32>
    %91 = arith.truncf %90 : vector<8x64xf32> to vector<8x64xbf16>
    %c0_49 = arith.constant 0 : index
    %c0_50 = arith.constant 0 : index
    %92 = vector.load %arg9[%c0_49, %c0_50] : memref<64x256xbf16, #tpu.memory_space<vmem>>, vector<64x256xbf16>
    %cst_51 = arith.constant dense<0.000000e+00> : vector<8x256xf32>
    %93 = tpu.matmul %91, %92, %cst_51 {dimension_numbers = #tpu.dot_dimension_numbers<[1], [0], [0], [1], [0, 0, 1, 1], [], []>} : vector<8x64xbf16>, vector<64x256xbf16>, vector<8x256xf32> -> vector<8x256xf32>
    %94 = arith.addf %75, %93 : vector<8x256xf32>
    %c0_52 = arith.constant 0 : index
    %c0_53 = arith.constant 0 : index
    %95 = vector.load %arg10[%c0_52, %c0_53] : memref<1x256xf32, #tpu.memory_space<vmem>>, vector<1x256xf32>
    %96 = vector.broadcast %95 : vector<1x256xf32> to vector<8x256xf32>
    %97 = arith.addf %94, %96 : vector<8x256xf32>
    %c0_54 = arith.constant 0 : index
    %c0_55 = arith.constant 0 : index
    %98 = vector.load %arg4[%c0_54, %c0_55] : memref<32x64xbf16, #tpu.memory_space<vmem>>, vector<32x64xbf16>
    %cst_56 = arith.constant dense<0.000000e+00> : vector<8x64xf32>
    %99 = tpu.matmul %1, %98, %cst_56 {dimension_numbers = #tpu.dot_dimension_numbers<[1], [0], [0], [1], [0, 0, 1, 1], [], []>} : vector<8x32xbf16>, vector<32x64xbf16>, vector<8x64xf32> -> vector<8x64xf32>
    %100 = arith.truncf %97 : vector<8x256xf32> to vector<8x256xbf16>
    %c0_57 = arith.constant 0 : index
    %c0_58 = arith.constant 0 : index
    %101 = vector.load %arg5[%c0_57, %c0_58] : memref<256x64xbf16, #tpu.memory_space<vmem>>, vector<256x64xbf16>
    %cst_59 = arith.constant dense<0.000000e+00> : vector<8x64xf32>
    %102 = tpu.matmul %100, %101, %cst_59 {dimension_numbers = #tpu.dot_dimension_numbers<[1], [0], [0], [1], [0, 0, 1, 1], [], []>} : vector<8x256xbf16>, vector<256x64xbf16>, vector<8x64xf32> -> vector<8x64xf32>
    %103 = arith.addf %99, %102 : vector<8x64xf32>
    %c0_60 = arith.constant 0 : index
    %c0_61 = arith.constant 0 : index
    %104 = vector.load %arg6[%c0_60, %c0_61] : memref<1x64xf32, #tpu.memory_space<vmem>>, vector<1x64xf32>
    %105 = vector.broadcast %104 : vector<1x64xf32> to vector<8x64xf32>
    %106 = arith.addf %103, %105 : vector<8x64xf32>
    %107 = arith.truncf %106 : vector<8x64xf32> to vector<8x64xbf16>
    %c0_62 = arith.constant 0 : index
    %c0_63 = arith.constant 0 : index
    %108 = vector.load %arg7[%c0_62, %c0_63] : memref<64x64xbf16, #tpu.memory_space<vmem>>, vector<64x64xbf16>
    %cst_64 = arith.constant dense<0.000000e+00> : vector<8x64xf32>
    %109 = tpu.matmul %107, %108, %cst_64 {dimension_numbers = #tpu.dot_dimension_numbers<[1], [0], [0], [1], [0, 0, 1, 1], [], []>} : vector<8x64xbf16>, vector<64x64xbf16>, vector<8x64xf32> -> vector<8x64xf32>
    %c0_65 = arith.constant 0 : index
    %c0_66 = arith.constant 0 : index
    %110 = vector.load %arg8[%c0_65, %c0_66] : memref<1x64xf32, #tpu.memory_space<vmem>>, vector<1x64xf32>
    %111 = vector.broadcast %110 : vector<1x64xf32> to vector<8x64xf32>
    %112 = arith.addf %109, %111 : vector<8x64xf32>
    %113 = arith.truncf %112 : vector<8x64xf32> to vector<8x64xbf16>
    %c0_67 = arith.constant 0 : index
    %c0_68 = arith.constant 0 : index
    %114 = vector.load %arg9[%c0_67, %c0_68] : memref<64x256xbf16, #tpu.memory_space<vmem>>, vector<64x256xbf16>
    %cst_69 = arith.constant dense<0.000000e+00> : vector<8x256xf32>
    %115 = tpu.matmul %113, %114, %cst_69 {dimension_numbers = #tpu.dot_dimension_numbers<[1], [0], [0], [1], [0, 0, 1, 1], [], []>} : vector<8x64xbf16>, vector<64x256xbf16>, vector<8x256xf32> -> vector<8x256xf32>
    %116 = arith.addf %97, %115 : vector<8x256xf32>
    %c0_70 = arith.constant 0 : index
    %c0_71 = arith.constant 0 : index
    %117 = vector.load %arg10[%c0_70, %c0_71] : memref<1x256xf32, #tpu.memory_space<vmem>>, vector<1x256xf32>
    %118 = vector.broadcast %117 : vector<1x256xf32> to vector<8x256xf32>
    %119 = arith.addf %116, %118 : vector<8x256xf32>
    %c0_72 = arith.constant 0 : index
    %c0_73 = arith.constant 0 : index
    %120 = vector.load %arg11[%c0_72, %c0_73] : memref<8x256xf32, #tpu.memory_space<vmem>>, vector<8x256xf32>
    tpu.vector_store %arg11[%c0_72, %c0_73], %119 {strides = array<i32>} : memref<8x256xf32, #tpu.memory_space<vmem>>, vector<8x256xf32>,
    %121 = vector.extract_strided_slice %119 {offsets = [0, 0], sizes = [8, 32], strides = [1, 1]} : vector<8x256xf32> to vector<8x32xf32>
    %122 = vector.extract_strided_slice %119 {offsets = [0, 32], sizes = [8, 32], strides = [1, 1]} : vector<8x256xf32> to vector<8x32xf32>
    %123 = vector.extract_strided_slice %119 {offsets = [0, 64], sizes = [8, 32], strides = [1, 1]} : vector<8x256xf32> to vector<8x32xf32>
    %124 = vector.extract_strided_slice %119 {offsets = [0, 96], sizes = [8, 32], strides = [1, 1]} : vector<8x256xf32> to vector<8x32xf32>
    %125 = vector.extract_strided_slice %119 {offsets = [0, 128], sizes = [8, 32], strides = [1, 1]} : vector<8x256xf32> to vector<8x32xf32>
    %126 = vector.extract_strided_slice %119 {offsets = [0, 160], sizes = [8, 32], strides = [1, 1]} : vector<8x256xf32> to vector<8x32xf32>
    %127 = arith.mulf %121, %121 : vector<8x32xf32>
    %128 = arith.mulf %122, %122 : vector<8x32xf32>
    %129 = arith.addf %127, %128 : vector<8x32xf32>
    %130 = arith.mulf %123, %123 : vector<8x32xf32>
    %131 = arith.addf %129, %130 : vector<8x32xf32>
    %cst_74 = arith.constant 9.99999993E-9 : f32
    %132 = vector.broadcast %cst_74 : f32 to vector<8x32xf32>
    %133 = arith.addf %131, %132 : vector<8x32xf32>
    %134 = math.rsqrt %133 : vector<8x32xf32>
    %135 = arith.mulf %121, %134 : vector<8x32xf32>
    %136 = arith.mulf %122, %134 : vector<8x32xf32>
    %137 = arith.mulf %123, %134 : vector<8x32xf32>
    %138 = arith.mulf %135, %124 : vector<8x32xf32>
    %139 = arith.mulf %136, %125 : vector<8x32xf32>
    %140 = arith.addf %138, %139 : vector<8x32xf32>
    %141 = arith.mulf %137, %126 : vector<8x32xf32>
    %142 = arith.addf %140, %141 : vector<8x32xf32>
    %143 = arith.mulf %142, %135 : vector<8x32xf32>
    %144 = arith.subf %124, %143 : vector<8x32xf32>
    %145 = arith.mulf %142, %136 : vector<8x32xf32>
    %146 = arith.subf %125, %145 : vector<8x32xf32>
    %147 = arith.mulf %142, %137 : vector<8x32xf32>
    %148 = arith.subf %126, %147 : vector<8x32xf32>
    %149 = arith.mulf %144, %144 : vector<8x32xf32>
    %150 = arith.mulf %146, %146 : vector<8x32xf32>
    %151 = arith.addf %149, %150 : vector<8x32xf32>
    %152 = arith.mulf %148, %148 : vector<8x32xf32>
    %153 = arith.addf %151, %152 : vector<8x32xf32>
    %cst_75 = arith.constant 9.99999993E-9 : f32
    %154 = vector.broadcast %cst_75 : f32 to vector<8x32xf32>
    %155 = arith.addf %153, %154 : vector<8x32xf32>
    %156 = math.rsqrt %155 : vector<8x32xf32>
    %157 = arith.mulf %144, %156 : vector<8x32xf32>
    %158 = arith.mulf %146, %156 : vector<8x32xf32>
    %159 = arith.mulf %148, %156 : vector<8x32xf32>
    %160 = arith.mulf %136, %159 : vector<8x32xf32>
    %161 = arith.mulf %137, %158 : vector<8x32xf32>
    %162 = arith.subf %160, %161 : vector<8x32xf32>
    %163 = arith.mulf %137, %157 : vector<8x32xf32>
    %164 = arith.mulf %135, %159 : vector<8x32xf32>
    %165 = arith.subf %163, %164 : vector<8x32xf32>
    %166 = arith.mulf %135, %158 : vector<8x32xf32>
    %167 = arith.mulf %136, %157 : vector<8x32xf32>
    %168 = arith.subf %166, %167 : vector<8x32xf32>
    %c0_76 = arith.constant 0 : index
    %c0_77 = arith.constant 0 : index
    %169 = vector.load %arg12[%c0_76, %c0_77] : memref<8x288xf32, #tpu.memory_space<vmem>>, vector<8x32xf32>
    tpu.vector_store %arg12[%c0_76, %c0_77], %135 {strides = array<i32>} : memref<8x288xf32, #tpu.memory_space<vmem>>, vector<8x32xf32>,
    %c0_78 = arith.constant 0 : index
    %c32_79 = arith.constant 32 : index
    %170 = vector.load %arg12[%c0_78, %c32_79] : memref<8x288xf32, #tpu.memory_space<vmem>>, vector<8x32xf32>
    tpu.vector_store %arg12[%c0_78, %c32_79], %136 {strides = array<i32>} : memref<8x288xf32, #tpu.memory_space<vmem>>, vector<8x32xf32>,
    %c0_80 = arith.constant 0 : index
    %c64_81 = arith.constant 64 : index
    %171 = vector.load %arg12[%c0_80, %c64_81] : memref<8x288xf32, #tpu.memory_space<vmem>>, vector<8x32xf32>
    tpu.vector_store %arg12[%c0_80, %c64_81], %137 {strides = array<i32>} : memref<8x288xf32, #tpu.memory_space<vmem>>, vector<8x32xf32>,
    %c0_82 = arith.constant 0 : index
    %c96_83 = arith.constant 96 : index
    %172 = vector.load %arg12[%c0_82, %c96_83] : memref<8x288xf32, #tpu.memory_space<vmem>>, vector<8x32xf32>
    tpu.vector_store %arg12[%c0_82, %c96_83], %157 {strides = array<i32>} : memref<8x288xf32, #tpu.memory_space<vmem>>, vector<8x32xf32>,
    %c0_84 = arith.constant 0 : index
    %c128_85 = arith.constant 128 : index
    %173 = vector.load %arg12[%c0_84, %c128_85] : memref<8x288xf32, #tpu.memory_space<vmem>>, vector<8x32xf32>
    tpu.vector_store %arg12[%c0_84, %c128_85], %158 {strides = array<i32>} : memref<8x288xf32, #tpu.memory_space<vmem>>, vector<8x32xf32>,
    %c0_86 = arith.constant 0 : index
    %c160_87 = arith.constant 160 : index
    %174 = vector.load %arg12[%c0_86, %c160_87] : memref<8x288xf32, #tpu.memory_space<vmem>>, vector<8x32xf32>
    tpu.vector_store %arg12[%c0_86, %c160_87], %159 {strides = array<i32>} : memref<8x288xf32, #tpu.memory_space<vmem>>, vector<8x32xf32>,
    %c0_88 = arith.constant 0 : index
    %c192 = arith.constant 192 : index
    %175 = vector.load %arg12[%c0_88, %c192] : memref<8x288xf32, #tpu.memory_space<vmem>>, vector<8x32xf32>
    tpu.vector_store %arg12[%c0_88, %c192], %162 {strides = array<i32>} : memref<8x288xf32, #tpu.memory_space<vmem>>, vector<8x32xf32>,
    %c0_89 = arith.constant 0 : index
    %c224 = arith.constant 224 : index
    %176 = vector.load %arg12[%c0_89, %c224] : memref<8x288xf32, #tpu.memory_space<vmem>>, vector<8x32xf32>
    tpu.vector_store %arg12[%c0_89, %c224], %165 {strides = array<i32>} : memref<8x288xf32, #tpu.memory_space<vmem>>, vector<8x32xf32>,
    %c0_90 = arith.constant 0 : index
    %c256 = arith.constant 256 : index
    %177 = vector.load %arg12[%c0_90, %c256] : memref<8x288xf32, #tpu.memory_space<vmem>>, vector<8x32xf32>
    tpu.vector_store %arg12[%c0_90, %c256], %168 {strides = array<i32>} : memref<8x288xf32, #tpu.memory_space<vmem>>, vector<8x32xf32>,
    return
  }
  func.func @transform_0(%arg0: i32) -> (i32, i32) {
    %c0_i32 = arith.constant 0 : i32
    %c0_i32_0 = arith.constant 0 : i32
    return %arg0, %c0_i32 : i32, i32
  }
  func.func @transform_1(%arg0: i32) -> (i32, i32) {
    %c0_i32 = arith.constant 0 : i32
    %c0_i32_0 = arith.constant 0 : i32
    %c0_i32_1 = arith.constant 0 : i32
    return %c0_i32, %c0_i32_0 : i32, i32
  }
  func.func @transform_2(%arg0: i32) -> (i32, i32) {
    %c0_i32 = arith.constant 0 : i32
    %c0_i32_0 = arith.constant 0 : i32
    %c0_i32_1 = arith.constant 0 : i32
    return %c0_i32, %c0_i32_0 : i32, i32
  }
  func.func @transform_3(%arg0: i32) -> (i32, i32) {
    %c0_i32 = arith.constant 0 : i32
    %c0_i32_0 = arith.constant 0 : i32
    %c0_i32_1 = arith.constant 0 : i32
    return %c0_i32, %c0_i32_0 : i32, i32
  }
  func.func @transform_4(%arg0: i32) -> (i32, i32) {
    %c0_i32 = arith.constant 0 : i32
    %c0_i32_0 = arith.constant 0 : i32
    %c0_i32_1 = arith.constant 0 : i32
    return %c0_i32, %c0_i32_0 : i32, i32
  }
  func.func @transform_5(%arg0: i32) -> (i32, i32) {
    %c0_i32 = arith.constant 0 : i32
    %c0_i32_0 = arith.constant 0 : i32
    %c0_i32_1 = arith.constant 0 : i32
    return %c0_i32, %c0_i32_0 : i32, i32
  }
  func.func @transform_6(%arg0: i32) -> (i32, i32) {
    %c0_i32 = arith.constant 0 : i32
    %c0_i32_0 = arith.constant 0 : i32
    %c0_i32_1 = arith.constant 0 : i32
    return %c0_i32, %c0_i32_0 : i32, i32
  }
  func.func @transform_7(%arg0: i32) -> (i32, i32) {
    %c0_i32 = arith.constant 0 : i32
    %c0_i32_0 = arith.constant 0 : i32
    %c0_i32_1 = arith.constant 0 : i32
    return %c0_i32, %c0_i32_0 : i32, i32
  }
  func.func @transform_8(%arg0: i32) -> (i32, i32) {
    %c0_i32 = arith.constant 0 : i32
    %c0_i32_0 = arith.constant 0 : i32
    %c0_i32_1 = arith.constant 0 : i32
    return %c0_i32, %c0_i32_0 : i32, i32
  }
  func.func @transform_9(%arg0: i32) -> (i32, i32) {
    %c0_i32 = arith.constant 0 : i32
    %c0_i32_0 = arith.constant 0 : i32
    %c0_i32_1 = arith.constant 0 : i32
    return %c0_i32, %c0_i32_0 : i32, i32
  }
  func.func @transform_10(%arg0: i32) -> (i32, i32) {
    %c0_i32 = arith.constant 0 : i32
    %c0_i32_0 = arith.constant 0 : i32
    return %arg0, %c0_i32 : i32, i32
  }
  func.func @transform_11(%arg0: i32) -> (i32, i32) {
    %c0_i32 = arith.constant 0 : i32
    %c0_i32_0 = arith.constant 0 : i32
    return %arg0, %c0_i32 : i32, i32
  }
}

module attributes {stable_mosaic.version = 11 : i64} {
  func.func @_smpl_kernel(%arg0: i32, %arg1: i32, %arg2: memref<8x256xf32, #tpu.memory_space<vmem>>, %arg3: memref<8x288xf32, #tpu.memory_space<vmem>>, %arg4: memref<1x128xf32, #tpu.memory_space<vmem>>, %arg5: memref<256x128xbf16, #tpu.memory_space<vmem>>, %arg6: memref<288x128xbf16, #tpu.memory_space<vmem>>, %arg7: memref<128x128xbf16, #tpu.memory_space<vmem>>, %arg8: memref<8x128xf32, #tpu.memory_space<vmem>>, %arg9: memref<8x128xf32, #tpu.memory_space<vmem>>) attributes {dimension_semantics = [#tpu.dimension_semantics<parallel>, #tpu.dimension_semantics<arbitrary>], iteration_bounds = array<i64: 2, 2>, scalar_prefetch = 0 : i64, scratch_operands = 0 : i64, tpu.core_type = #tpu.core_type<tc>, window_params = [{transform_indices = @transform_0, window_bounds = array<i64: 8, 256>}, {transform_indices = @transform_1, window_bounds = array<i64: 8, 288>}, {transform_indices = @transform_2, window_bounds = array<i64: 1, 128>}, {transform_indices = @transform_3, window_bounds = array<i64: 256, 128>}, {transform_indices = @transform_4, window_bounds = array<i64: 288, 128>}, {transform_indices = @transform_5, window_bounds = array<i64: 128, 128>}, {transform_indices = @transform_6, window_bounds = array<i64: 8, 128>}, {transform_indices = @transform_7, window_bounds = array<i64: 8, 128>}]} {
    %c0_i32 = arith.constant 0 : i32
    %0 = arith.cmpi eq, %arg1, %c0_i32 : i32
    %1 = arith.extui %0 : i1 to i32
    %c0_i32_0 = arith.constant 0 : i32
    %2 = arith.cmpi ne, %1, %c0_i32_0 : i32
    scf.if %2 {
      %cst_20 = arith.constant 0.000000e+00 : f32
      %22 = vector.broadcast %cst_20 : f32 to vector<8x128xf32>
      %c0_21 = arith.constant 0 : index
      %c0_22 = arith.constant 0 : index
      %23 = vector.load %arg9[%c0_21, %c0_22] : memref<8x128xf32, #tpu.memory_space<vmem>>, vector<8x128xf32>
      tpu.vector_store %arg9[%c0_21, %c0_22], %22 {strides = array<i32>} : memref<8x128xf32, #tpu.memory_space<vmem>>, vector<8x128xf32>,
    } else {
    }
    %c0 = arith.constant 0 : index
    %c0_1 = arith.constant 0 : index
    %3 = vector.load %arg2[%c0, %c0_1] : memref<8x256xf32, #tpu.memory_space<vmem>>, vector<8x256xf32>
    %4 = arith.truncf %3 : vector<8x256xf32> to vector<8x256xbf16>
    %c0_2 = arith.constant 0 : index
    %c0_3 = arith.constant 0 : index
    %5 = vector.load %arg5[%c0_2, %c0_3] : memref<256x128xbf16, #tpu.memory_space<vmem>>, vector<256x128xbf16>
    %cst = arith.constant dense<0.000000e+00> : vector<8x128xf32>
    %6 = tpu.matmul %4, %5, %cst {dimension_numbers = #tpu.dot_dimension_numbers<[1], [0], [0], [1], [0, 0, 1, 1], [], []>} : vector<8x256xbf16>, vector<256x128xbf16>, vector<8x128xf32> -> vector<8x128xf32>
    %c0_4 = arith.constant 0 : index
    %c0_5 = arith.constant 0 : index
    %7 = vector.load %arg3[%c0_4, %c0_5] : memref<8x288xf32, #tpu.memory_space<vmem>>, vector<8x288xf32>
    %8 = arith.truncf %7 : vector<8x288xf32> to vector<8x288xbf16>
    %c0_6 = arith.constant 0 : index
    %c0_7 = arith.constant 0 : index
    %9 = vector.load %arg6[%c0_6, %c0_7] : memref<288x128xbf16, #tpu.memory_space<vmem>>, vector<288x128xbf16>
    %cst_8 = arith.constant dense<0.000000e+00> : vector<8x128xf32>
    %10 = tpu.matmul %8, %9, %cst_8 {dimension_numbers = #tpu.dot_dimension_numbers<[1], [0], [0], [1], [0, 0, 1, 1], [], []>} : vector<8x288xbf16>, vector<288x128xbf16>, vector<8x128xf32> -> vector<8x128xf32>
    %11 = arith.addf %6, %10 : vector<8x128xf32>
    %c0_9 = arith.constant 0 : index
    %c0_10 = arith.constant 0 : index
    %12 = vector.load %arg4[%c0_9, %c0_10] : memref<1x128xf32, #tpu.memory_space<vmem>>, vector<1x128xf32>
    %13 = vector.broadcast %12 : vector<1x128xf32> to vector<8x128xf32>
    %14 = arith.addf %11, %13 : vector<8x128xf32>
    %c0_11 = arith.constant 0 : index
    %c0_12 = arith.constant 0 : index
    %15 = vector.load %arg8[%c0_11, %c0_12] : memref<8x128xf32, #tpu.memory_space<vmem>>, vector<8x128xf32>
    tpu.vector_store %arg8[%c0_11, %c0_12], %14 {strides = array<i32>} : memref<8x128xf32, #tpu.memory_space<vmem>>, vector<8x128xf32>,
    %c0_13 = arith.constant 0 : index
    %c0_14 = arith.constant 0 : index
    %16 = vector.load %arg9[%c0_13, %c0_14] : memref<8x128xf32, #tpu.memory_space<vmem>>, vector<8x128xf32>
    %17 = arith.truncf %14 : vector<8x128xf32> to vector<8x128xbf16>
    %c0_15 = arith.constant 0 : index
    %c0_16 = arith.constant 0 : index
    %18 = vector.load %arg7[%c0_15, %c0_16] : memref<128x128xbf16, #tpu.memory_space<vmem>>, vector<128x128xbf16>
    %cst_17 = arith.constant dense<0.000000e+00> : vector<8x128xf32>
    %19 = tpu.matmul %17, %18, %cst_17 {dimension_numbers = #tpu.dot_dimension_numbers<[1], [0], [0], [1], [0, 0, 1, 1], [], []>} : vector<8x128xbf16>, vector<128x128xbf16>, vector<8x128xf32> -> vector<8x128xf32>
    %20 = arith.addf %16, %19 : vector<8x128xf32>
    %c0_18 = arith.constant 0 : index
    %c0_19 = arith.constant 0 : index
    %21 = vector.load %arg9[%c0_18, %c0_19] : memref<8x128xf32, #tpu.memory_space<vmem>>, vector<8x128xf32>
    tpu.vector_store %arg9[%c0_18, %c0_19], %20 {strides = array<i32>} : memref<8x128xf32, #tpu.memory_space<vmem>>, vector<8x128xf32>,
    return
  }
  func.func @transform_0(%arg0: i32, %arg1: i32) -> (i32, i32) {
    %c0_i32 = arith.constant 0 : i32
    %c0_i32_0 = arith.constant 0 : i32
    return %arg0, %c0_i32 : i32, i32
  }
  func.func @transform_1(%arg0: i32, %arg1: i32) -> (i32, i32) {
    %c0_i32 = arith.constant 0 : i32
    %c0_i32_0 = arith.constant 0 : i32
    return %arg0, %c0_i32 : i32, i32
  }
  func.func @transform_2(%arg0: i32, %arg1: i32) -> (i32, i32) {
    %c0_i32 = arith.constant 0 : i32
    %c0_i32_0 = arith.constant 0 : i32
    return %c0_i32, %arg1 : i32, i32
  }
  func.func @transform_3(%arg0: i32, %arg1: i32) -> (i32, i32) {
    %c0_i32 = arith.constant 0 : i32
    %c0_i32_0 = arith.constant 0 : i32
    return %c0_i32, %arg1 : i32, i32
  }
  func.func @transform_4(%arg0: i32, %arg1: i32) -> (i32, i32) {
    %c0_i32 = arith.constant 0 : i32
    %c0_i32_0 = arith.constant 0 : i32
    return %c0_i32, %arg1 : i32, i32
  }
  func.func @transform_5(%arg0: i32, %arg1: i32) -> (i32, i32) {
    %c0_i32 = arith.constant 0 : i32
    %c0_i32_0 = arith.constant 0 : i32
    return %arg1, %c0_i32 : i32, i32
  }
  func.func @transform_6(%arg0: i32, %arg1: i32) -> (i32, i32) {
    %c0_i32 = arith.constant 0 : i32
    return %arg0, %arg1 : i32, i32
  }
  func.func @transform_7(%arg0: i32, %arg1: i32) -> (i32, i32) {
    %c0_i32 = arith.constant 0 : i32
    %c0_i32_0 = arith.constant 0 : i32
    return %arg0, %c0_i32 : i32, i32
  }
}

</mosaic_0001>

<llo_original>
// kernel: meva_forward.4
$region0: #{meva_forward.4}
  #allocation0 [shape = 'u32[]', space=smem, size = 0x4, offset = 0x4, fixed_abs, tag = 'smem constant byte address 0x4 - core index']
  #allocation1 [shape = 'u32[144,128]{1,0:T(1,128)}', space=vmem, size = 0x12000, scoped, tag = 'internal scratch']
  %s0 = inlined_call_operand.vmem [shape: f32[64,32], index: 0, kind: input, shape index: {}]
  %s1 = inlined_call_operand.vmem [shape: bf16[32,96], index: 1, kind: input, shape index: {}]
  %s2 = inlined_call_operand.vmem [shape: f32[1,96], index: 2, kind: input, shape index: {}]
  %s3 = inlined_call_operand.vmem [shape: f32[64,96], index: 3, kind: output, shape index: {}]
  %s4 = sld [smem:[#allocation0]]
  $region45: #{meva_forward.4} parent=0
    _
  %s6 = ssub.s32 1, %s4
  %s7 = scalar_select 0, %s6, %s4
  loop: start=0, step=1, limit=10
  $region2: #{meva_forward.4} parent=0 // loop_pre_header
    _
  $region3: #{meva_forward.4} parent=0 // loop_header
    %s9 = sphi 0, %s13
    %p10 = scmp.ge.s32.totalorder %s9, 10
    %s19 = sphi 0, %s21
    %s22 = sphi 0, %s19
    %s23 = sphi 0, %s22
    %s39 = sphi 0, %s23
    %s43 = sphi 0, %s43
    %s45 = sphi 0, %s43
    %s46 = sphi 0, %s45
    %s60 = sphi 0, %s46
    %s64 = sphi 0, %s64
    %s66 = sphi 0, %s64
    %s67 = sphi 0, %s66
    %s81 = sphi 0, %s67
    %s87 = sphi 0, %s89
    %s90 = sphi 0, %s87
    %s91 = sphi 0, %s90
    %s107 = sphi 0, %s91
  $region4: #{meva_forward.4} parent=0 // loop_header_branch
    %12 = sbr.rel (%p10) target = $region8
  $region5: #{meva_forward.4} parent=0 // loop_body
    %s14 = ssub.s32 %s9, 1
    %s15 = ssub.s32 %s9, 2
    %s16 = sadd.s32 %s9, 1
    %s17 = ssub.s32 %s9, %s16
    %p18 = scmp.eq.s32.totalorder %s17, 0
    %s20 = sadd.s32 %s19, 1
    %s21 = scalar_select %p18, %s19, %s20
    %p24 = pneg %p18
    %p25 = scmp.eq.s32.totalorder %s9, 7
    %p26 = por %p24, %p25
    %p27 = scmp.ne.s32.totalorder %s19, %s22
    %p28 = scmp.eq.s32.totalorder %s9, 0
    %p29 = por %p27, %p28
    %p30 = scmp.ne.s32.totalorder %s19, %s22
    %p31 = scmp.eq.s32.totalorder %s14, 7
    %p32 = por %p30, %p31
    %p33 = scmp.ne.s32.totalorder %s22, %s23
    %p34 = scmp.eq.s32.totalorder %s14, 0
    %p35 = por %p33, %p34
    %p36 = scmp.ne.s32.totalorder %s22, %s23
    %p37 = scmp.eq.s32.totalorder %s15, 7
    %p38 = por %p36, %p37
    %p40 = scmp.ne.s32.totalorder %s23, %s39
    %p41 = scmp.eq.s32.totalorder %s15, 0
    %p42 = por %p40, %p41
    %s44 = sadd.s32 %s43, 1
    %p47 = scmp.eq.s32.totalorder %s9, 7
    %p48 = scmp.ne.s32.totalorder %s43, %s45
    %p49 = scmp.eq.s32.totalorder %s9, 0
    %p50 = por %p48, %p49
    %p51 = scmp.ne.s32.totalorder %s43, %s45
    %p52 = scmp.eq.s32.totalorder %s14, 7
    %p53 = por %p51, %p52
    %p54 = scmp.ne.s32.totalorder %s45, %s46
    %p55 = scmp.eq.s32.totalorder %s14, 0
    %p56 = por %p54, %p55
    %p57 = scmp.ne.s32.totalorder %s45, %s46
    %p58 = scmp.eq.s32.totalorder %s15, 7
    %p59 = por %p57, %p58
    %p61 = scmp.ne.s32.totalorder %s46, %s60
    %p62 = scmp.eq.s32.totalorder %s15, 0
    %p63 = por %p61, %p62
    %s65 = sadd.s32 %s64, 1
    %p68 = scmp.eq.s32.totalorder %s9, 7
    %p69 = scmp.ne.s32.totalorder %s64, %s66
    %p70 = scmp.eq.s32.totalorder %s9, 0
    %p71 = por %p69, %p70
    %p72 = scmp.ne.s32.totalorder %s64, %s66
    %p73 = scmp.eq.s32.totalorder %s14, 7
    %p74 = por %p72, %p73
    %p75 = scmp.ne.s32.totalorder %s66, %s67
    %p76 = scmp.eq.s32.totalorder %s14, 0
    %p77 = por %p75, %p76
    %p78 = scmp.ne.s32.totalorder %s66, %s67
    %p79 = scmp.eq.s32.totalorder %s15, 7
    %p80 = por %p78, %p79
    %p82 = scmp.ne.s32.totalorder %s67, %s81
    %p83 = scmp.eq.s32.totalorder %s15, 0
    %p84 = por %p82, %p83
    %s85 = ssub.s32 %s9, %s16
    %p86 = scmp.eq.s32.totalorder %s85, 0
    %s88 = sadd.s32 %s87, 1
    %s89 = scalar_select %p86, %s87, %s88
    %p92 = pneg %p86
    %p93 = scmp.eq.s32.totalorder %s9, 7
    %p94 = por %p92, %p93
    %p95 = scmp.ne.s32.totalorder %s87, %s90
    %p96 = scmp.eq.s32.totalorder %s9, 0
    %p97 = por %p95, %p96
    %p98 = scmp.ne.s32.totalorder %s87, %s90
    %p99 = scmp.eq.s32.totalorder %s14, 7
    %p100 = por %p98, %p99
    %p101 = scmp.ne.s32.totalorder %s90, %s91
    %p102 = scmp.eq.s32.totalorder %s14, 0
    %p103 = por %p101, %p102
    %p104 = scmp.ne.s32.totalorder %s90, %s91
    %p105 = scmp.eq.s32.totalorder %s15, 7
    %p106 = por %p104, %p105
    %p108 = scmp.ne.s32.totalorder %s91, %s107
    %p109 = scmp.eq.s32.totalorder %s15, 0
    %p110 = por %p108, %p109
    %p111 = scmp.le.s32.totalorder 1, %s9
    %p112 = scmp.lt.s32.totalorder %s9, 9
    %p113 = pnand %p111, %p112
    %p114 = pneg %p113
    // Predicated region
    $region9: #{meva_forward.4} parent=5 // pred_check
      _
    $region10: #{meva_forward.4} parent=5 // pred_check_branch
      %116 = sbr.rel (%p113) target = $region12
    $region11: #{meva_forward.4} parent=5 // pred_region
      %s117 = ssub.s32 %s9, 1
      // Predicated region
      $region13: #{meva_forward.4} parent=11 // pred_check
        %p118 = pneg %p56
      $region14: #{meva_forward.4} parent=11 // pred_check_branch
        %120 = sbr.rel (%p118) target = $region16
      $region15: #{meva_forward.4} parent=11 // pred_region
        _
      $region16: #{meva_forward.4} parent=11 // pred_fallthru
        _
      // Predicated region
      $region17: #{meva_forward.4} parent=11 // pred_check
        %p121 = pneg %p77
      $region18: #{meva_forward.4} parent=11 // pred_check_branch
        %123 = sbr.rel (%p121) target = $region20
      $region19: #{meva_forward.4} parent=11 // pred_region
        _
      $region20: #{meva_forward.4} parent=11 // pred_fallthru
        _
    $region12: #{meva_forward.4} parent=5 // pred_fallthru
      _
    %p124 = scmp.lt.s32.totalorder %s9, 8
    // Predicated region
    $region21: #{meva_forward.4} parent=5 // pred_check
      %p125 = pneg %p124
    $region22: #{meva_forward.4} parent=5 // pred_check_branch
      %127 = sbr.rel (%p125) target = $region24
    $region23: #{meva_forward.4} parent=5 // pred_region
      // Predicated region
      $region25: #{meva_forward.4} parent=23 // pred_check
        %p128 = pneg %p29
      $region26: #{meva_forward.4} parent=23 // pred_check_branch
        %130 = sbr.rel (%p128) target = $region28
      $region27: #{meva_forward.4} parent=23 // pred_region
        %p131 = scmp.lt.s32.totalorder %s9, 7
        %s132 = scalar_select %p131, %s9, 7
        %s133 = smul.addr %s132, 8
        %s134 = scalar_lea.vmem %s0, %s133
      $region28: #{meva_forward.4} parent=23 // pred_fallthru
        _
    $region24: #{meva_forward.4} parent=5 // pred_fallthru
      _
    %p135 = scmp.le.s32.totalorder 1, %s9
    %p136 = scmp.lt.s32.totalorder %s9, 9
    %p137 = pnand %p135, %p136
    %p138 = pneg %p137
    // Predicated region
    $region29: #{meva_forward.4} parent=5 // pred_check
      _
    $region30: #{meva_forward.4} parent=5 // pred_check_branch
      %140 = sbr.rel (%p137) target = $region32
    $region31: #{meva_forward.4} parent=5 // pred_region
      %s141 = ssub.s32 %s9, 1
      %p142 = scmp.lt.s32.totalorder %s14, 7
      %s143 = scalar_select %p142, %s14, 7
      %s144 = smul.addr %s143, 8
      %s145 = scalar_lea.vmem %s0, %s144
      %p146 = pneg %p35
      %p147 = pneg %p32
      %p148 = pneg %p56
      %p149 = pneg %p53
      %p150 = pneg %p77
      %p151 = pneg %p74
      %p152 = pneg %p103
      %p153 = pneg %p100
      %p154 = scmp.lt.s32.totalorder %s14, 7
      %s155 = scalar_select %p154, %s14, 7
      %s156 = smul.addr %s155, 8
      %s157 = scalar_lea.vmem %s3, %s156
      %p158 = scmp.lt.s32.totalorder %s14, 7
      %s159 = scalar_select %p158, %s14, 7
      %s160 = smul.addr %s159, 8
      %s161 = scalar_lea.vmem %s0, %s160
      %p162 = scmp.lt.s32.totalorder %s14, 7
      %s163 = scalar_select %p162, %s14, 7
      %s164 = smul.addr %s163, 8
      %s165 = scalar_lea.vmem %s3, %s164
      %v167 = vld [vmem:[%s161] sm:$0xff]
      %v168 = vpack.c.bf16 %v167, %v167
      %v169 = vld [vmem:[%s1] sm:$0xf]
      %v170 = vld [vmem:[%s1 + $0x4] sm:$0xf]
      %v171 = vld [vmem:[%s1 + $0x8] sm:$0xf]
      %v172 = vld [vmem:[%s1 + $0xc] sm:$0xf]
      %v173 = vld [vmem:[%s2] sm:$0x1]
      %v175 = vlaneseq
      %v176 = vshrl.u32 %v175, 7
      %v177 = vsub.s32 0, %v176
      %v178 = vrot.slane %v173, %v177
      %v184 = vunpack.c.l.b16 %v169
      %v185 = vunpack.c.l.b16 %v170
      %v186 = vunpack.c.l.b16 %v171
      %v187 = vunpack.c.l.b16 %v172
      %v188 = vpack.c.b16 %v185, %v184
      %v189 = vpack.c.b16 %v187, %v186
      %vm192 = vcmask 261120
      %v194 = vsel %vm192, %v168, 0
      %196 = vmatprep.subr.bf16.mxu0 0
      %197 = vmatpush1.bf16.msra.mxu0 %v188
      %198 = vmatprep.subr.bf16.mxu0 0
      %199 = vmatpush1.bf16.msra.mxu0 %v189
      %200 = vmatprep.subr.bf16.mxu0 0
      %201 = vmatpush1.bf16.msra.mxu0 0
      %202 = vmatprep.subr.bf16.mxu0 0
      %203 = vmatpush1.bf16.msra.mxu0 0
      %204 = vmatprep.subr.bf16.mxu0 0
      %205 = vmatpush1.bf16.msra.mxu0 0
      %206 = vmatprep.subr.bf16.mxu0 0
      %207 = vmatpush1.bf16.msra.mxu0 0
      %208 = vmatprep.subr.bf16.mxu0 0
      %209 = vmatpush1.bf16.msra.mxu0 0
      %210 = vmatprep.subr.bf16.mxu0 0
      %211 = vmatpush1.bf16.msra.mxu0 0
      %212 = vmatprep.subr.bf16.mxu0 0
      %213 = vmatpush1.bf16.msra.mxu0 0
      %214 = vmatprep.subr.bf16.mxu0 0
      %215 = vmatpush1.bf16.msra.mxu0 0
      %216 = vmatprep.subr.bf16.mxu0 0
      %217 = vmatpush1.bf16.msra.mxu0 0
      %218 = vmatprep.subr.bf16.mxu0 0
      %219 = vmatpush1.bf16.msra.mxu0 0
      %220 = vmatprep.subr.bf16.mxu0 0
      %221 = vmatpush1.bf16.msra.mxu0 0
      %222 = vmatprep.subr.bf16.mxu0 0
      %223 = vmatpush1.bf16.msra.mxu0 0
      %224 = vmatprep.subr.bf16.mxu0 0
      %225 = vmatpush1.bf16.msra.mxu0 0
      %226 = vmatprep.subr.bf16.mxu0 0
      %227 = vmatpush1.bf16.msra.mxu0 0
      %228 = vmatprep.mubr.bf16.mxu0 0
      %229 = vmatmul.mubr.bf16.gmra.mrb[0].mxu0 %v194
      %v230 = vpop.f32.mrb[0].mxu0
      %v231 = vadd.f32 %v178, %v230
      %v232 = vpop.f32.mrb[0].mxu0
      %v233 = vpop.f32.mrb[0].mxu0
      %v234 = vpop.f32.mrb[0].mxu0
      %235 = vdwg.mxu0
      %vm236 = vcmask 785408
      %237 = vst.msk [vmem:[%s165] sm:$0xff] %vm236, %v231
      %p238 = scmp.lt.s32.totalorder %s14, 7
      %s239 = scalar_select %p238, %s14, 7
      %s240 = smul.addr %s239, 8
      %s241 = scalar_lea.vmem %s3, %s240
      // Predicated region
      $region33: #{meva_forward.4} parent=31 // pred_check
        %p242 = pneg %p100
      $region34: #{meva_forward.4} parent=31 // pred_check_branch
        %244 = sbr.rel (%p242) target = $region36
      $region35: #{meva_forward.4} parent=31 // pred_region
        _
      $region36: #{meva_forward.4} parent=31 // pred_fallthru
        _
    $region32: #{meva_forward.4} parent=5 // pred_fallthru
      _
    %p245 = scmp.le.s32.totalorder 2, %s9
    // Predicated region
    $region37: #{meva_forward.4} parent=5 // pred_check
      %p246 = pneg %p245
    $region38: #{meva_forward.4} parent=5 // pred_check_branch
      %248 = sbr.rel (%p246) target = $region40
    $region39: #{meva_forward.4} parent=5 // pred_region
      %s249 = ssub.s32 %s9, 2
      // Predicated region
      $region41: #{meva_forward.4} parent=39 // pred_check
        %p250 = pneg %p106
      $region42: #{meva_forward.4} parent=39 // pred_check_branch
        %252 = sbr.rel (%p250) target = $region44
      $region43: #{meva_forward.4} parent=39 // pred_region
        %p253 = scmp.lt.s32.totalorder %s15, 7
        %s254 = scalar_select %p253, %s15, 7
        %s255 = smul.addr %s254, 8
        %s256 = scalar_lea.vmem %s3, %s255
      $region44: #{meva_forward.4} parent=39 // pred_fallthru
        _
    $region40: #{meva_forward.4} parent=5 // pred_fallthru
      _
  $region6: #{meva_forward.4} parent=0 // loop_footer
    %s13 = sadd.s32 1, %s9
  $region7: #{meva_forward.4} parent=0 // loop_footer_branch
    %8 = sbr.rel target = $region3
  $region8: #{meva_forward.4} parent=0 // loop_exit
    _

// kernel: meva_forward.5
$region0: #{meva_forward.5}
  #allocation0 [shape = 'u32[]', space=smem, size = 0x4, offset = 0x4, fixed_abs, tag = 'smem constant byte address 0x4 - core index']
  #allocation1 [shape = 'u32[144,128]{1,0:T(1,128)}', space=vmem, size = 0x12000, scoped, tag = 'internal scratch']
  #allocation2 [shape = 'f32[8,32]{1,0:T(8,128)}', space=vmem, size = 0x1000, scoped, tag = 'scratch operand']
  %s0 = inlined_call_operand.vmem [shape: f32[8,8,96], index: 0, kind: input, shape index: {}]
  %s1 = inlined_call_operand.vmem [shape: f32[8,8,32], index: 1, kind: input, shape index: {}]
  %s2 = inlined_call_operand.vmem [shape: bf16[32,96], index: 2, kind: input, shape index: {}]
  %s3 = inlined_call_operand.vmem [shape: f32[1,96], index: 3, kind: input, shape index: {}]
  %s4 = inlined_call_operand.vmem [shape: f32[8,8,32], index: 4, kind: output, shape index: {}]
  %s5 = sld [smem:[#allocation0]]
  $region53: #{meva_forward.5} parent=0
    _
  %s7 = ssub.s32 1, %s5
  %s8 = scalar_select 0, %s7, %s5
  loop: start=0, step=1, limit=10
  $region2: #{meva_forward.5} parent=0 // loop_pre_header
    _
  $region3: #{meva_forward.5} parent=0 // loop_header
    %s10 = sphi 0, %s14
    %p11 = scmp.ge.s32.totalorder %s10, 10
    %s20 = sphi 0, %s22
    %s23 = sphi 0, %s20
    %s24 = sphi 0, %s23
    %s40 = sphi 0, %s24
    %s46 = sphi 0, %s48
    %s49 = sphi 0, %s46
    %s50 = sphi 0, %s49
    %s66 = sphi 0, %s50
    %s70 = sphi 0, %s70
    %s72 = sphi 0, %s70
    %s73 = sphi 0, %s72
    %s87 = sphi 0, %s73
    %s91 = sphi 0, %s91
    %s93 = sphi 0, %s91
    %s94 = sphi 0, %s93
    %s108 = sphi 0, %s94
    %s114 = sphi 0, %s116
    %s117 = sphi 0, %s114
    %s118 = sphi 0, %s117
    %s134 = sphi 0, %s118
  $region4: #{meva_forward.5} parent=0 // loop_header_branch
    %13 = sbr.rel (%p11) target = $region8
  $region5: #{meva_forward.5} parent=0 // loop_body
    %s15 = ssub.s32 %s10, 1
    %s16 = ssub.s32 %s10, 2
    %s17 = sadd.s32 %s10, 1
    %s18 = ssub.s32 %s10, %s17
    %p19 = scmp.eq.s32.totalorder %s18, 0
    %s21 = sadd.s32 %s20, 1
    %s22 = scalar_select %p19, %s20, %s21
    %p25 = pneg %p19
    %p26 = scmp.eq.s32.totalorder %s10, 7
    %p27 = por %p25, %p26
    %p28 = scmp.ne.s32.totalorder %s20, %s23
    %p29 = scmp.eq.s32.totalorder %s10, 0
    %p30 = por %p28, %p29
    %p31 = scmp.ne.s32.totalorder %s20, %s23
    %p32 = scmp.eq.s32.totalorder %s15, 7
    %p33 = por %p31, %p32
    %p34 = scmp.ne.s32.totalorder %s23, %s24
    %p35 = scmp.eq.s32.totalorder %s15, 0
    %p36 = por %p34, %p35
    %p37 = scmp.ne.s32.totalorder %s23, %s24
    %p38 = scmp.eq.s32.totalorder %s16, 7
    %p39 = por %p37, %p38
    %p41 = scmp.ne.s32.totalorder %s24, %s40
    %p42 = scmp.eq.s32.totalorder %s16, 0
    %p43 = por %p41, %p42
    %s44 = ssub.s32 %s10, %s17
    %p45 = scmp.eq.s32.totalorder %s44, 0
    %s47 = sadd.s32 %s46, 1
    %s48 = scalar_select %p45, %s46, %s47
    %p51 = pneg %p45
    %p52 = scmp.eq.s32.totalorder %s10, 7
    %p53 = por %p51, %p52
    %p54 = scmp.ne.s32.totalorder %s46, %s49
    %p55 = scmp.eq.s32.totalorder %s10, 0
    %p56 = por %p54, %p55
    %p57 = scmp.ne.s32.totalorder %s46, %s49
    %p58 = scmp.eq.s32.totalorder %s15, 7
    %p59 = por %p57, %p58
    %p60 = scmp.ne.s32.totalorder %s49, %s50
    %p61 = scmp.eq.s32.totalorder %s15, 0
    %p62 = por %p60, %p61
    %p63 = scmp.ne.s32.totalorder %s49, %s50
    %p64 = scmp.eq.s32.totalorder %s16, 7
    %p65 = por %p63, %p64
    %p67 = scmp.ne.s32.totalorder %s50, %s66
    %p68 = scmp.eq.s32.totalorder %s16, 0
    %p69 = por %p67, %p68
    %s71 = sadd.s32 %s70, 1
    %p74 = scmp.eq.s32.totalorder %s10, 7
    %p75 = scmp.ne.s32.totalorder %s70, %s72
    %p76 = scmp.eq.s32.totalorder %s10, 0
    %p77 = por %p75, %p76
    %p78 = scmp.ne.s32.totalorder %s70, %s72
    %p79 = scmp.eq.s32.totalorder %s15, 7
    %p80 = por %p78, %p79
    %p81 = scmp.ne.s32.totalorder %s72, %s73
    %p82 = scmp.eq.s32.totalorder %s15, 0
    %p83 = por %p81, %p82
    %p84 = scmp.ne.s32.totalorder %s72, %s73
    %p85 = scmp.eq.s32.totalorder %s16, 7
    %p86 = por %p84, %p85
    %p88 = scmp.ne.s32.totalorder %s73, %s87
    %p89 = scmp.eq.s32.totalorder %s16, 0
    %p90 = por %p88, %p89
    %s92 = sadd.s32 %s91, 1
    %p95 = scmp.eq.s32.totalorder %s10, 7
    %p96 = scmp.ne.s32.totalorder %s91, %s93
    %p97 = scmp.eq.s32.totalorder %s10, 0
    %p98 = por %p96, %p97
    %p99 = scmp.ne.s32.totalorder %s91, %s93
    %p100 = scmp.eq.s32.totalorder %s15, 7
    %p101 = por %p99, %p100
    %p102 = scmp.ne.s32.totalorder %s93, %s94
    %p103 = scmp.eq.s32.totalorder %s15, 0
    %p104 = por %p102, %p103
    %p105 = scmp.ne.s32.totalorder %s93, %s94
    %p106 = scmp.eq.s32.totalorder %s16, 7
    %p107 = por %p105, %p106
    %p109 = scmp.ne.s32.totalorder %s94, %s108
    %p110 = scmp.eq.s32.totalorder %s16, 0
    %p111 = por %p109, %p110
    %s112 = ssub.s32 %s10, %s17
    %p113 = scmp.eq.s32.totalorder %s112, 0
    %s115 = sadd.s32 %s114, 1
    %s116 = scalar_select %p113, %s114, %s115
    %p119 = pneg %p113
    %p120 = scmp.eq.s32.totalorder %s10, 7
    %p121 = por %p119, %p120
    %p122 = scmp.ne.s32.totalorder %s114, %s117
    %p123 = scmp.eq.s32.totalorder %s10, 0
    %p124 = por %p122, %p123
    %p125 = scmp.ne.s32.totalorder %s114, %s117
    %p126 = scmp.eq.s32.totalorder %s15, 7
    %p127 = por %p125, %p126
    %p128 = scmp.ne.s32.totalorder %s117, %s118
    %p129 = scmp.eq.s32.totalorder %s15, 0
    %p130 = por %p128, %p129
    %p131 = scmp.ne.s32.totalorder %s117, %s118
    %p132 = scmp.eq.s32.totalorder %s16, 7
    %p133 = por %p131, %p132
    %p135 = scmp.ne.s32.totalorder %s118, %s134
    %p136 = scmp.eq.s32.totalorder %s16, 0
    %p137 = por %p135, %p136
    %p138 = scmp.le.s32.totalorder 1, %s10
    %p139 = scmp.lt.s32.totalorder %s10, 9
    %p140 = pnand %p138, %p139
    %p141 = pneg %p140
    // Predicated region
    $region9: #{meva_forward.5} parent=5 // pred_check
      _
    $region10: #{meva_forward.5} parent=5 // pred_check_branch
      %143 = sbr.rel (%p140) target = $region12
    $region11: #{meva_forward.5} parent=5 // pred_region
      %s144 = ssub.s32 %s10, 1
      // Predicated region
      $region13: #{meva_forward.5} parent=11 // pred_check
        %p145 = pneg %p83
      $region14: #{meva_forward.5} parent=11 // pred_check_branch
        %147 = sbr.rel (%p145) target = $region16
      $region15: #{meva_forward.5} parent=11 // pred_region
        _
      $region16: #{meva_forward.5} parent=11 // pred_fallthru
        _
      // Predicated region
      $region17: #{meva_forward.5} parent=11 // pred_check
        %p148 = pneg %p104
      $region18: #{meva_forward.5} parent=11 // pred_check_branch
        %150 = sbr.rel (%p148) target = $region20
      $region19: #{meva_forward.5} parent=11 // pred_region
        _
      $region20: #{meva_forward.5} parent=11 // pred_fallthru
        _
    $region12: #{meva_forward.5} parent=5 // pred_fallthru
      _
    %p151 = scmp.lt.s32.totalorder %s10, 8
    // Predicated region
    $region21: #{meva_forward.5} parent=5 // pred_check
      %p152 = pneg %p151
    $region22: #{meva_forward.5} parent=5 // pred_check_branch
      %154 = sbr.rel (%p152) target = $region24
    $region23: #{meva_forward.5} parent=5 // pred_region
      // Predicated region
      $region25: #{meva_forward.5} parent=23 // pred_check
        %p155 = pneg %p30
      $region26: #{meva_forward.5} parent=23 // pred_check_branch
        %157 = sbr.rel (%p155) target = $region28
      $region27: #{meva_forward.5} parent=23 // pred_region
        %p158 = scmp.lt.s32.totalorder %s10, 7
        %s159 = scalar_select %p158, %s10, 7
        %s160 = smul.addr %s159, 8
        %s161 = scalar_lea.vmem %s0, %s160
      $region28: #{meva_forward.5} parent=23 // pred_fallthru
        _
      // Predicated region
      $region29: #{meva_forward.5} parent=23 // pred_check
        %p162 = pneg %p56
      $region30: #{meva_forward.5} parent=23 // pred_check_branch
        %164 = sbr.rel (%p162) target = $region32
      $region31: #{meva_forward.5} parent=23 // pred_region
        %p165 = scmp.lt.s32.totalorder %s10, 7
        %s166 = scalar_select %p165, %s10, 7
        %s167 = smul.addr %s166, 8
        %s168 = scalar_lea.vmem %s1, %s167
      $region32: #{meva_forward.5} parent=23 // pred_fallthru
        _
    $region24: #{meva_forward.5} parent=5 // pred_fallthru
      _
    %p169 = scmp.le.s32.totalorder 1, %s10
    %p170 = scmp.lt.s32.totalorder %s10, 9
    %p171 = pnand %p169, %p170
    %p172 = pneg %p171
    // Predicated region
    $region33: #{meva_forward.5} parent=5 // pred_check
      _
    $region34: #{meva_forward.5} parent=5 // pred_check_branch
      %174 = sbr.rel (%p171) target = $region36
    $region35: #{meva_forward.5} parent=5 // pred_region
      %s175 = ssub.s32 %s10, 1
      %p176 = scmp.lt.s32.totalorder %s15, 7
      %s177 = scalar_select %p176, %s15, 7
      %s178 = smul.addr %s177, 8
      %s179 = scalar_lea.vmem %s0, %s178
      %p180 = pneg %p36
      %p181 = pneg %p33
      %p182 = scmp.lt.s32.totalorder %s15, 7
      %s183 = scalar_select %p182, %s15, 7
      %s184 = smul.addr %s183, 8
      %s185 = scalar_lea.vmem %s1, %s184
      %p186 = pneg %p62
      %p187 = pneg %p59
      %p188 = pneg %p83
      %p189 = pneg %p80
      %p190 = pneg %p104
      %p191 = pneg %p101
      %p192 = pneg %p130
      %p193 = pneg %p127
      %p194 = scmp.lt.s32.totalorder %s15, 7
      %s195 = scalar_select %p194, %s15, 7
      %s196 = smul.addr %s195, 8
      %s197 = scalar_lea.vmem %s4, %s196
      %p198 = scmp.lt.s32.totalorder %s15, 7
      %s199 = scalar_select %p198, %s15, 7
      %s200 = smul.addr %s199, 8
      %s201 = scalar_lea.vmem %s0, %s200
      %p202 = scmp.lt.s32.totalorder %s15, 7
      %s203 = scalar_select %p202, %s15, 7
      %s204 = smul.addr %s203, 8
      %s205 = scalar_lea.vmem %s1, %s204
      %p206 = scmp.lt.s32.totalorder %s15, 7
      %s207 = scalar_select %p206, %s15, 7
      %s208 = smul.addr %s207, 8
      %s209 = scalar_lea.vmem %s4, %s208
      %p211 = scmp.eq.s32.totalorder %s15, 0
      // Predicated region
      $region37: #{meva_forward.5} parent=35 // pred_check
        %p212 = pneg %p211
      $region38: #{meva_forward.5} parent=35 // pred_check_branch
        %214 = sbr.rel (%p212) target = $region40
      $region39: #{meva_forward.5} parent=35 // pred_region
        %vm215 = vcmask 261120
        %216 = vst.msk [vmem:[#allocation2] sm:$0xff] %vm215, 0.0
      $region40: #{meva_forward.5} parent=35 // pred_fallthru
        _
      %v217 = vld [vmem:[#allocation2] sm:$0xff]
      %v218 = vld [vmem:[%s201] sm:$0xff]
      %v219 = vpack.c.bf16 %v217, %v217
      %v220 = vld [vmem:[%s2] sm:$0xf]
      %v221 = vld [vmem:[%s2 + $0x4] sm:$0xf]
      %v222 = vld [vmem:[%s2 + $0x8] sm:$0xf]
      %v223 = vld [vmem:[%s2 + $0xc] sm:$0xf]
      %v224 = vld [vmem:[%s3] sm:$0x1]
      %v226 = vlaneseq
      %v227 = vshrl.u32 %v226, 7
      %v228 = vsub.s32 0, %v227
      %v229 = vrot.slane %v224, %v228
      %v235 = vunpack.c.l.b16 %v220
      %v236 = vunpack.c.l.b16 %v221
      %v237 = vunpack.c.l.b16 %v222
      %v238 = vunpack.c.l.b16 %v223
      %v239 = vpack.c.b16 %v236, %v235
      %v240 = vpack.c.b16 %v238, %v237
      %vm243 = vcmask 261120
      %v245 = vsel %vm243, %v219, 0
      %247 = vmatprep.subr.bf16.mxu0 0
      %248 = vmatpush1.bf16.msra.mxu0 %v239
      %249 = vmatprep.subr.bf16.mxu0 0
      %250 = vmatpush1.bf16.msra.mxu0 %v240
      %251 = vmatprep.subr.bf16.mxu0 0
      %252 = vmatpush1.bf16.msra.mxu0 0
      %253 = vmatprep.subr.bf16.mxu0 0
      %254 = vmatpush1.bf16.msra.mxu0 0
      %255 = vmatprep.subr.bf16.mxu0 0
      %256 = vmatpush1.bf16.msra.mxu0 0
      %257 = vmatprep.subr.bf16.mxu0 0
      %258 = vmatpush1.bf16.msra.mxu0 0
      %259 = vmatprep.subr.bf16.mxu0 0
      %260 = vmatpush1.bf16.msra.mxu0 0
      %261 = vmatprep.subr.bf16.mxu0 0
      %262 = vmatpush1.bf16.msra.mxu0 0
      %263 = vmatprep.subr.bf16.mxu0 0
      %264 = vmatpush1.bf16.msra.mxu0 0
      %265 = vmatprep.subr.bf16.mxu0 0
      %266 = vmatpush1.bf16.msra.mxu0 0
      %267 = vmatprep.subr.bf16.mxu0 0
      %268 = vmatpush1.bf16.msra.mxu0 0
      %269 = vmatprep.subr.bf16.mxu0 0
      %270 = vmatpush1.bf16.msra.mxu0 0
      %271 = vmatprep.subr.bf16.mxu0 0
      %272 = vmatpush1.bf16.msra.mxu0 0
      %273 = vmatprep.subr.bf16.mxu0 0
      %274 = vmatpush1.bf16.msra.mxu0 0
      %275 = vmatprep.subr.bf16.mxu0 0
      %276 = vmatpush1.bf16.msra.mxu0 0
      %277 = vmatprep.subr.bf16.mxu0 0
      %278 = vmatpush1.bf16.msra.mxu0 0
      %279 = vmatprep.mubr.bf16.mxu0 0
      %280 = vmatmul.mubr.bf16.gmra.mrb[0].mxu0 %v245
      %v281 = vpop.f32.mrb[0].mxu0
      %v282 = vadd.f32 %v229, %v281
      %v283 = vpop.f32.mrb[0].mxu0
      %v284 = vpop.f32.mrb[0].mxu0
      %v285 = vpop.f32.mrb[0].mxu0
      %286 = vdwg.mxu0
      %v287 = vadd.f32 %v218, %v282
      %v288 = vxor.u32 %v287, 2147483648
      %v289 = vmul.f32 %v288, 1.442695
      %v290 = vpow.pop %v289
      %v291 = vadd.f32 %v290, 1.0
      %v292 = vrcp.pop %v291
      %v293 = vmul.f32 1.0, %v292
      %295 = vrot.lane.b32.xlu0 %v282, 64
      %v296 = vpop.permute.xlu0 %295
      %v298 = vmul.f32 %v293, %v296
      %300 = vrot.lane.b32.xlu0 %v298, 64
      %v301 = vpop.permute.xlu0 %300
      %v303 = vadd.f32 %v218, %v301
      %v304 = vtanh.pop %v303
      %v305 = vsub.f32 1.0, %v293
      %307 = vrot.lane.b32.xlu0 %v304, 96
      %v308 = vpop.permute.xlu0 %307
      %v310 = vmul.f32 %v305, %v308
      %312 = vrot.lane.b32.xlu0 %v217, 32
      %v313 = vpop.permute.xlu0 %312
      %v315 = vmul.f32 %v293, %v313
      %v316 = vadd.f32 %v310, %v315
      %318 = vrot.lane.b32.xlu0 %v316, 96
      %v319 = vpop.permute.xlu0 %318
      %321 = vst.msk [vmem:[#allocation2] sm:$0xff] %vm243, %v319
      %v322 = vld [vmem:[%s205] sm:$0xff]
      %324 = vrot.lane.b32.xlu0 %v322, 32
      %v325 = vpop.permute.xlu0 %324
      %v327 = vadd.f32 %v316, %v325
      %329 = vrot.lane.b32.xlu0 %v327, 96
      %v330 = vpop.permute.xlu0 %329
      %332 = vst.msk [vmem:[%s209] sm:$0xff] %vm243, %v330
      %p333 = scmp.lt.s32.totalorder %s15, 7
      %s334 = scalar_select %p333, %s15, 7
      %s335 = smul.addr %s334, 8
      %s336 = scalar_lea.vmem %s4, %s335
      // Predicated region
      $region41: #{meva_forward.5} parent=35 // pred_check
        %p337 = pneg %p127
      $region42: #{meva_forward.5} parent=35 // pred_check_branch
        %339 = sbr.rel (%p337) target = $region44
      $region43: #{meva_forward.5} parent=35 // pred_region
        _
      $region44: #{meva_forward.5} parent=35 // pred_fallthru
        _
    $region36: #{meva_forward.5} parent=5 // pred_fallthru
      _
    %p340 = scmp.le.s32.totalorder 2, %s10
    // Predicated region
    $region45: #{meva_forward.5} parent=5 // pred_check
      %p341 = pneg %p340
    $region46: #{meva_forward.5} parent=5 // pred_check_branch
      %343 = sbr.rel (%p341) target = $region48
    $region47: #{meva_forward.5} parent=5 // pred_region
      %s344 = ssub.s32 %s10, 2
      // Predicated region
      $region49: #{meva_forward.5} parent=47 // pred_check
        %p345 = pneg %p133
      $region50: #{meva_forward.5} parent=47 // pred_check_branch
        %347 = sbr.rel (%p345) target = $region52
      $region51: #{meva_forward.5} parent=47 // pred_region
        %p348 = scmp.lt.s32.totalorder %s16, 7
        %s349 = scalar_select %p348, %s16, 7
        %s350 = smul.addr %s349, 8
        %s351 = scalar_lea.vmem %s4, %s350
      $region52: #{meva_forward.5} parent=47 // pred_fallthru
        _
    $region48: #{meva_forward.5} parent=5 // pred_fallthru
      _
  $region6: #{meva_forward.5} parent=0 // loop_footer
    %s14 = sadd.s32 1, %s10
  $region7: #{meva_forward.5} parent=0 // loop_footer_branch
    %9 = sbr.rel target = $region3
  $region8: #{meva_forward.5} parent=0 // loop_exit
    _

// kernel: meva_forward.6
$region0: #{meva_forward.6}
  #allocation0 [shape = 'u32[]', space=smem, size = 0x4, offset = 0x4, fixed_abs, tag = 'smem constant byte address 0x4 - core index']
  #allocation1 [shape = 'u32[144,128]{1,0:T(1,128)}', space=vmem, size = 0x12000, scoped, tag = 'internal scratch']
  %s0 = inlined_call_operand.vmem [shape: f32[16,32], index: 0, kind: input, shape index: {}]
  %s1 = inlined_call_operand.vmem [shape: bf16[32,256], index: 1, kind: input, shape index: {}]
  %s2 = inlined_call_operand.vmem [shape: f32[1,256], index: 2, kind: input, shape index: {}]
  %s3 = inlined_call_operand.vmem [shape: bf16[32,64], index: 3, kind: input, shape index: {}]
  %s4 = inlined_call_operand.vmem [shape: bf16[256,64], index: 4, kind: input, shape index: {}]
  %s5 = inlined_call_operand.vmem [shape: f32[1,64], index: 5, kind: input, shape index: {}]
  %s6 = inlined_call_operand.vmem [shape: bf16[64,64], index: 6, kind: input, shape index: {}]
  %s7 = inlined_call_operand.vmem [shape: f32[1,64], index: 7, kind: input, shape index: {}]
  %s8 = inlined_call_operand.vmem [shape: bf16[64,256], index: 8, kind: input, shape index: {}]
  %s9 = inlined_call_operand.vmem [shape: f32[1,256], index: 9, kind: input, shape index: {}]
  %s10 = inlined_call_operand.vmem [shape: f32[16,256], index: 10, kind: output, shape index: {0}]
  %s11 = inlined_call_operand.vmem [shape: f32[16,288], index: 11, kind: output, shape index: {1}]
  %12 = xla_tuple %s10, %s11
  %s13 = sld [smem:[#allocation0]]
  $region81: #{meva_forward.6} parent=0
    _
  %s15 = ssub.s32 1, %s13
  %s16 = scalar_select 0, %s15, %s13
  loop: start=0, step=1, limit=4
  $region2: #{meva_forward.6} parent=0 // loop_pre_header
    _
  $region3: #{meva_forward.6} parent=0 // loop_header
    %s18 = sphi 0, %s22
    %p19 = scmp.ge.s32.totalorder %s18, 4
    %s28 = sphi 0, %s30
    %s31 = sphi 0, %s28
    %s32 = sphi 0, %s31
    %s48 = sphi 0, %s32
    %s52 = sphi 0, %s52
    %s54 = sphi 0, %s52
    %s55 = sphi 0, %s54
    %s69 = sphi 0, %s55
    %s73 = sphi 0, %s73
    %s75 = sphi 0, %s73
    %s76 = sphi 0, %s75
    %s90 = sphi 0, %s76
    %s94 = sphi 0, %s94
    %s96 = sphi 0, %s94
    %s97 = sphi 0, %s96
    %s111 = sphi 0, %s97
    %s115 = sphi 0, %s115
    %s117 = sphi 0, %s115
    %s118 = sphi 0, %s117
    %s132 = sphi 0, %s118
    %s136 = sphi 0, %s136
    %s138 = sphi 0, %s136
    %s139 = sphi 0, %s138
    %s153 = sphi 0, %s139
    %s157 = sphi 0, %s157
    %s159 = sphi 0, %s157
    %s160 = sphi 0, %s159
    %s174 = sphi 0, %s160
    %s178 = sphi 0, %s178
    %s180 = sphi 0, %s178
    %s181 = sphi 0, %s180
    %s195 = sphi 0, %s181
    %s199 = sphi 0, %s199
    %s201 = sphi 0, %s199
    %s202 = sphi 0, %s201
    %s216 = sphi 0, %s202
    %s220 = sphi 0, %s220
    %s222 = sphi 0, %s220
    %s223 = sphi 0, %s222
    %s237 = sphi 0, %s223
    %s243 = sphi 0, %s245
    %s246 = sphi 0, %s243
    %s247 = sphi 0, %s246
    %s263 = sphi 0, %s247
    %s269 = sphi 0, %s271
    %s272 = sphi 0, %s269
    %s273 = sphi 0, %s272
    %s289 = sphi 0, %s273
  $region4: #{meva_forward.6} parent=0 // loop_header_branch
    %21 = sbr.rel (%p19) target = $region8
  $region5: #{meva_forward.6} parent=0 // loop_body
    %s23 = ssub.s32 %s18, 1
    %s24 = ssub.s32 %s18, 2
    %s25 = sadd.s32 %s18, 1
    %s26 = ssub.s32 %s18, %s25
    %p27 = scmp.eq.s32.totalorder %s26, 0
    %s29 = sadd.s32 %s28, 1
    %s30 = scalar_select %p27, %s28, %s29
    %p33 = pneg %p27
    %p34 = scmp.eq.s32.totalorder %s18, 1
    %p35 = por %p33, %p34
    %p36 = scmp.ne.s32.totalorder %s28, %s31
    %p37 = scmp.eq.s32.totalorder %s18, 0
    %p38 = por %p36, %p37
    %p39 = scmp.ne.s32.totalorder %s28, %s31
    %p40 = scmp.eq.s32.totalorder %s23, 1
    %p41 = por %p39, %p40
    %p42 = scmp.ne.s32.totalorder %s31, %s32
    %p43 = scmp.eq.s32.totalorder %s23, 0
    %p44 = por %p42, %p43
    %p45 = scmp.ne.s32.totalorder %s31, %s32
    %p46 = scmp.eq.s32.totalorder %s24, 1
    %p47 = por %p45, %p46
    %p49 = scmp.ne.s32.totalorder %s32, %s48
    %p50 = scmp.eq.s32.totalorder %s24, 0
    %p51 = por %p49, %p50
    %s53 = sadd.s32 %s52, 1
    %p56 = scmp.eq.s32.totalorder %s18, 1
    %p57 = scmp.ne.s32.totalorder %s52, %s54
    %p58 = scmp.eq.s32.totalorder %s18, 0
    %p59 = por %p57, %p58
    %p60 = scmp.ne.s32.totalorder %s52, %s54
    %p61 = scmp.eq.s32.totalorder %s23, 1
    %p62 = por %p60, %p61
    %p63 = scmp.ne.s32.totalorder %s54, %s55
    %p64 = scmp.eq.s32.totalorder %s23, 0
    %p65 = por %p63, %p64
    %p66 = scmp.ne.s32.totalorder %s54, %s55
    %p67 = scmp.eq.s32.totalorder %s24, 1
    %p68 = por %p66, %p67
    %p70 = scmp.ne.s32.totalorder %s55, %s69
    %p71 = scmp.eq.s32.totalorder %s24, 0
    %p72 = por %p70, %p71
    %s74 = sadd.s32 %s73, 1
    %p77 = scmp.eq.s32.totalorder %s18, 1
    %p78 = scmp.ne.s32.totalorder %s73, %s75
    %p79 = scmp.eq.s32.totalorder %s18, 0
    %p80 = por %p78, %p79
    %p81 = scmp.ne.s32.totalorder %s73, %s75
    %p82 = scmp.eq.s32.totalorder %s23, 1
    %p83 = por %p81, %p82
    %p84 = scmp.ne.s32.totalorder %s75, %s76
    %p85 = scmp.eq.s32.totalorder %s23, 0
    %p86 = por %p84, %p85
    %p87 = scmp.ne.s32.totalorder %s75, %s76
    %p88 = scmp.eq.s32.totalorder %s24, 1
    %p89 = por %p87, %p88
    %p91 = scmp.ne.s32.totalorder %s76, %s90
    %p92 = scmp.eq.s32.totalorder %s24, 0
    %p93 = por %p91, %p92
    %s95 = sadd.s32 %s94, 1
    %p98 = scmp.eq.s32.totalorder %s18, 1
    %p99 = scmp.ne.s32.totalorder %s94, %s96
    %p100 = scmp.eq.s32.totalorder %s18, 0
    %p101 = por %p99, %p100
    %p102 = scmp.ne.s32.totalorder %s94, %s96
    %p103 = scmp.eq.s32.totalorder %s23, 1
    %p104 = por %p102, %p103
    %p105 = scmp.ne.s32.totalorder %s96, %s97
    %p106 = scmp.eq.s32.totalorder %s23, 0
    %p107 = por %p105, %p106
    %p108 = scmp.ne.s32.totalorder %s96, %s97
    %p109 = scmp.eq.s32.totalorder %s24, 1
    %p110 = por %p108, %p109
    %p112 = scmp.ne.s32.totalorder %s97, %s111
    %p113 = scmp.eq.s32.totalorder %s24, 0
    %p114 = por %p112, %p113
    %s116 = sadd.s32 %s115, 1
    %p119 = scmp.eq.s32.totalorder %s18, 1
    %p120 = scmp.ne.s32.totalorder %s115, %s117
    %p121 = scmp.eq.s32.totalorder %s18, 0
    %p122 = por %p120, %p121
    %p123 = scmp.ne.s32.totalorder %s115, %s117
    %p124 = scmp.eq.s32.totalorder %s23, 1
    %p125 = por %p123, %p124
    %p126 = scmp.ne.s32.totalorder %s117, %s118
    %p127 = scmp.eq.s32.totalorder %s23, 0
    %p128 = por %p126, %p127
    %p129 = scmp.ne.s32.totalorder %s117, %s118
    %p130 = scmp.eq.s32.totalorder %s24, 1
    %p131 = por %p129, %p130
    %p133 = scmp.ne.s32.totalorder %s118, %s132
    %p134 = scmp.eq.s32.totalorder %s24, 0
    %p135 = por %p133, %p134
    %s137 = sadd.s32 %s136, 1
    %p140 = scmp.eq.s32.totalorder %s18, 1
    %p141 = scmp.ne.s32.totalorder %s136, %s138
    %p142 = scmp.eq.s32.totalorder %s18, 0
    %p143 = por %p141, %p142
    %p144 = scmp.ne.s32.totalorder %s136, %s138
    %p145 = scmp.eq.s32.totalorder %s23, 1
    %p146 = por %p144, %p145
    %p147 = scmp.ne.s32.totalorder %s138, %s139
    %p148 = scmp.eq.s32.totalorder %s23, 0
    %p149 = por %p147, %p148
    %p150 = scmp.ne.s32.totalorder %s138, %s139
    %p151 = scmp.eq.s32.totalorder %s24, 1
    %p152 = por %p150, %p151
    %p154 = scmp.ne.s32.totalorder %s139, %s153
    %p155 = scmp.eq.s32.totalorder %s24, 0
    %p156 = por %p154, %p155
    %s158 = sadd.s32 %s157, 1
    %p161 = scmp.eq.s32.totalorder %s18, 1
    %p162 = scmp.ne.s32.totalorder %s157, %s159
    %p163 = scmp.eq.s32.totalorder %s18, 0
    %p164 = por %p162, %p163
    %p165 = scmp.ne.s32.totalorder %s157, %s159
    %p166 = scmp.eq.s32.totalorder %s23, 1
    %p167 = por %p165, %p166
    %p168 = scmp.ne.s32.totalorder %s159, %s160
    %p169 = scmp.eq.s32.totalorder %s23, 0
    %p170 = por %p168, %p169
    %p171 = scmp.ne.s32.totalorder %s159, %s160
    %p172 = scmp.eq.s32.totalorder %s24, 1
    %p173 = por %p171, %p172
    %p175 = scmp.ne.s32.totalorder %s160, %s174
    %p176 = scmp.eq.s32.totalorder %s24, 0
    %p177 = por %p175, %p176
    %s179 = sadd.s32 %s178, 1
    %p182 = scmp.eq.s32.totalorder %s18, 1
    %p183 = scmp.ne.s32.totalorder %s178, %s180
    %p184 = scmp.eq.s32.totalorder %s18, 0
    %p185 = por %p183, %p184
    %p186 = scmp.ne.s32.totalorder %s178, %s180
    %p187 = scmp.eq.s32.totalorder %s23, 1
    %p188 = por %p186, %p187
    %p189 = scmp.ne.s32.totalorder %s180, %s181
    %p190 = scmp.eq.s32.totalorder %s23, 0
    %p191 = por %p189, %p190
    %p192 = scmp.ne.s32.totalorder %s180, %s181
    %p193 = scmp.eq.s32.totalorder %s24, 1
    %p194 = por %p192, %p193
    %p196 = scmp.ne.s32.totalorder %s181, %s195
    %p197 = scmp.eq.s32.totalorder %s24, 0
    %p198 = por %p196, %p197
    %s200 = sadd.s32 %s199, 1
    %p203 = scmp.eq.s32.totalorder %s18, 1
    %p204 = scmp.ne.s32.totalorder %s199, %s201
    %p205 = scmp.eq.s32.totalorder %s18, 0
    %p206 = por %p204, %p205
    %p207 = scmp.ne.s32.totalorder %s199, %s201
    %p208 = scmp.eq.s32.totalorder %s23, 1
    %p209 = por %p207, %p208
    %p210 = scmp.ne.s32.totalorder %s201, %s202
    %p211 = scmp.eq.s32.totalorder %s23, 0
    %p212 = por %p210, %p211
    %p213 = scmp.ne.s32.totalorder %s201, %s202
    %p214 = scmp.eq.s32.totalorder %s24, 1
    %p215 = por %p213, %p214
    %p217 = scmp.ne.s32.totalorder %s202, %s216
    %p218 = scmp.eq.s32.totalorder %s24, 0
    %p219 = por %p217, %p218
    %s221 = sadd.s32 %s220, 1
    %p224 = scmp.eq.s32.totalorder %s18, 1
    %p225 = scmp.ne.s32.totalorder %s220, %s222
    %p226 = scmp.eq.s32.totalorder %s18, 0
    %p227 = por %p225, %p226
    %p228 = scmp.ne.s32.totalorder %s220, %s222
    %p229 = scmp.eq.s32.totalorder %s23, 1
    %p230 = por %p228, %p229
    %p231 = scmp.ne.s32.totalorder %s222, %s223
    %p232 = scmp.eq.s32.totalorder %s23, 0
    %p233 = por %p231, %p232
    %p234 = scmp.ne.s32.totalorder %s222, %s223
    %p235 = scmp.eq.s32.totalorder %s24, 1
    %p236 = por %p234, %p235
    %p238 = scmp.ne.s32.totalorder %s223, %s237
    %p239 = scmp.eq.s32.totalorder %s24, 0
    %p240 = por %p238, %p239
    %s241 = ssub.s32 %s18, %s25
    %p242 = scmp.eq.s32.totalorder %s241, 0
    %s244 = sadd.s32 %s243, 1
    %s245 = scalar_select %p242, %s243, %s244
    %p248 = pneg %p242
    %p249 = scmp.eq.s32.totalorder %s18, 1
    %p250 = por %p248, %p249
    %p251 = scmp.ne.s32.totalorder %s243, %s246
    %p252 = scmp.eq.s32.totalorder %s18, 0
    %p253 = por %p251, %p252
    %p254 = scmp.ne.s32.totalorder %s243, %s246
    %p255 = scmp.eq.s32.totalorder %s23, 1
    %p256 = por %p254, %p255
    %p257 = scmp.ne.s32.totalorder %s246, %s247
    %p258 = scmp.eq.s32.totalorder %s23, 0
    %p259 = por %p257, %p258
    %p260 = scmp.ne.s32.totalorder %s246, %s247
    %p261 = scmp.eq.s32.totalorder %s24, 1
    %p262 = por %p260, %p261
    %p264 = scmp.ne.s32.totalorder %s247, %s263
    %p265 = scmp.eq.s32.totalorder %s24, 0
    %p266 = por %p264, %p265
    %s267 = ssub.s32 %s18, %s25
    %p268 = scmp.eq.s32.totalorder %s267, 0
    %s270 = sadd.s32 %s269, 1
    %s271 = scalar_select %p268, %s269, %s270
    %p274 = pneg %p268
    %p275 = scmp.eq.s32.totalorder %s18, 1
    %p276 = por %p274, %p275
    %p277 = scmp.ne.s32.totalorder %s269, %s272
    %p278 = scmp.eq.s32.totalorder %s18, 0
    %p279 = por %p277, %p278
    %p280 = scmp.ne.s32.totalorder %s269, %s272
    %p281 = scmp.eq.s32.totalorder %s23, 1
    %p282 = por %p280, %p281
    %p283 = scmp.ne.s32.totalorder %s272, %s273
    %p284 = scmp.eq.s32.totalorder %s23, 0
    %p285 = por %p283, %p284
    %p286 = scmp.ne.s32.totalorder %s272, %s273
    %p287 = scmp.eq.s32.totalorder %s24, 1
    %p288 = por %p286, %p287
    %p290 = scmp.ne.s32.totalorder %s273, %s289
    %p291 = scmp.eq.s32.totalorder %s24, 0
    %p292 = por %p290, %p291
    %p293 = scmp.le.s32.totalorder 1, %s18
    %p294 = scmp.lt.s32.totalorder %s18, 3
    %p295 = pnand %p293, %p294
    %p296 = pneg %p295
    // Predicated region
    $region9: #{meva_forward.6} parent=5 // pred_check
      _
    $region10: #{meva_forward.6} parent=5 // pred_check_branch
      %298 = sbr.rel (%p295) target = $region12
    $region11: #{meva_forward.6} parent=5 // pred_region
      %s299 = ssub.s32 %s18, 1
      // Predicated region
      $region13: #{meva_forward.6} parent=11 // pred_check
        %p300 = pneg %p65
      $region14: #{meva_forward.6} parent=11 // pred_check_branch
        %302 = sbr.rel (%p300) target = $region16
      $region15: #{meva_forward.6} parent=11 // pred_region
        _
      $region16: #{meva_forward.6} parent=11 // pred_fallthru
        _
      // Predicated region
      $region17: #{meva_forward.6} parent=11 // pred_check
        %p303 = pneg %p86
      $region18: #{meva_forward.6} parent=11 // pred_check_branch
        %305 = sbr.rel (%p303) target = $region20
      $region19: #{meva_forward.6} parent=11 // pred_region
        _
      $region20: #{meva_forward.6} parent=11 // pred_fallthru
        _
      // Predicated region
      $region21: #{meva_forward.6} parent=11 // pred_check
        %p306 = pneg %p107
      $region22: #{meva_forward.6} parent=11 // pred_check_branch
        %308 = sbr.rel (%p306) target = $region24
      $region23: #{meva_forward.6} parent=11 // pred_region
        _
      $region24: #{meva_forward.6} parent=11 // pred_fallthru
        _
      // Predicated region
      $region25: #{meva_forward.6} parent=11 // pred_check
        %p309 = pneg %p128
      $region26: #{meva_forward.6} parent=11 // pred_check_branch
        %311 = sbr.rel (%p309) target = $region28
      $region27: #{meva_forward.6} parent=11 // pred_region
        _
      $region28: #{meva_forward.6} parent=11 // pred_fallthru
        _
      // Predicated region
      $region29: #{meva_forward.6} parent=11 // pred_check
        %p312 = pneg %p149
      $region30: #{meva_forward.6} parent=11 // pred_check_branch
        %314 = sbr.rel (%p312) target = $region32
      $region31: #{meva_forward.6} parent=11 // pred_region
        _
      $region32: #{meva_forward.6} parent=11 // pred_fallthru
        _
      // Predicated region
      $region33: #{meva_forward.6} parent=11 // pred_check
        %p315 = pneg %p170
      $region34: #{meva_forward.6} parent=11 // pred_check_branch
        %317 = sbr.rel (%p315) target = $region36
      $region35: #{meva_forward.6} parent=11 // pred_region
        _
      $region36: #{meva_forward.6} parent=11 // pred_fallthru
        _
      // Predicated region
      $region37: #{meva_forward.6} parent=11 // pred_check
        %p318 = pneg %p191
      $region38: #{meva_forward.6} parent=11 // pred_check_branch
        %320 = sbr.rel (%p318) target = $region40
      $region39: #{meva_forward.6} parent=11 // pred_region
        _
      $region40: #{meva_forward.6} parent=11 // pred_fallthru
        _
      // Predicated region
      $region41: #{meva_forward.6} parent=11 // pred_check
        %p321 = pneg %p212
      $region42: #{meva_forward.6} parent=11 // pred_check_branch
        %323 = sbr.rel (%p321) target = $region44
      $region43: #{meva_forward.6} parent=11 // pred_region
        _
      $region44: #{meva_forward.6} parent=11 // pred_fallthru
        _
      // Predicated region
      $region45: #{meva_forward.6} parent=11 // pred_check
        %p324 = pneg %p233
      $region46: #{meva_forward.6} parent=11 // pred_check_branch
        %326 = sbr.rel (%p324) target = $region48
      $region47: #{meva_forward.6} parent=11 // pred_region
        _
      $region48: #{meva_forward.6} parent=11 // pred_fallthru
        _
    $region12: #{meva_forward.6} parent=5 // pred_fallthru
      _
    %p327 = scmp.lt.s32.totalorder %s18, 2
    // Predicated region
    $region49: #{meva_forward.6} parent=5 // pred_check
      %p328 = pneg %p327
    $region50: #{meva_forward.6} parent=5 // pred_check_branch
      %330 = sbr.rel (%p328) target = $region52
    $region51: #{meva_forward.6} parent=5 // pred_region
      // Predicated region
      $region53: #{meva_forward.6} parent=51 // pred_check
        %p331 = pneg %p38
      $region54: #{meva_forward.6} parent=51 // pred_check_branch
        %333 = sbr.rel (%p331) target = $region56
      $region55: #{meva_forward.6} parent=51 // pred_region
        %p334 = scmp.lt.s32.totalorder %s18, 1
        %s335 = scalar_select %p334, %s18, 1
        %s336 = smul.addr %s335, 8
        %s337 = scalar_lea.vmem %s0, %s336
      $region56: #{meva_forward.6} parent=51 // pred_fallthru
        _
    $region52: #{meva_forward.6} parent=5 // pred_fallthru
      _
    %p338 = scmp.le.s32.totalorder 1, %s18
    %p339 = scmp.lt.s32.totalorder %s18, 3
    %p340 = pnand %p338, %p339
    %p341 = pneg %p340
    // Predicated region
    $region57: #{meva_forward.6} parent=5 // pred_check
      _
    $region58: #{meva_forward.6} parent=5 // pred_check_branch
      %343 = sbr.rel (%p340) target = $region60
    $region59: #{meva_forward.6} parent=5 // pred_region
      %s344 = ssub.s32 %s18, 1
      %p345 = scmp.lt.s32.totalorder %s23, 1
      %s346 = scalar_select %p345, %s23, 1
      %s347 = smul.addr %s346, 8
      %s348 = scalar_lea.vmem %s0, %s347
      %p349 = pneg %p44
      %p350 = pneg %p41
      %p351 = pneg %p65
      %p352 = pneg %p62
      %p353 = pneg %p86
      %p354 = pneg %p83
      %p355 = pneg %p107
      %p356 = pneg %p104
      %p357 = pneg %p128
      %p358 = pneg %p125
      %p359 = pneg %p149
      %p360 = pneg %p146
      %p361 = pneg %p170
      %p362 = pneg %p167
      %p363 = pneg %p191
      %p364 = pneg %p188
      %p365 = pneg %p212
      %p366 = pneg %p209
      %p367 = pneg %p233
      %p368 = pneg %p230
      %p369 = pneg %p259
      %p370 = pneg %p256
      %p371 = scmp.lt.s32.totalorder %s23, 1
      %s372 = scalar_select %p371, %s23, 1
      %s373 = smul.addr %s372, 2
      %s374 = smul.addr %s373, 8
      %s375 = scalar_lea.vmem %s10, %s374
      %p376 = pneg %p285
      %p377 = pneg %p282
      %p378 = scmp.lt.s32.totalorder %s23, 1
      %s379 = scalar_select %p378, %s23, 1
      %s380 = smul.addr %s379, 3
      %s381 = smul.addr %s380, 8
      %s382 = scalar_lea.vmem %s11, %s381
      %p383 = scmp.lt.s32.totalorder %s23, 1
      %s384 = scalar_select %p383, %s23, 1
      %s385 = smul.addr %s384, 8
      %s386 = scalar_lea.vmem %s0, %s385
      %p387 = scmp.lt.s32.totalorder %s23, 1
      %s388 = scalar_select %p387, %s23, 1
      %s389 = smul.addr %s388, 2
      %s390 = smul.addr %s389, 8
      %s391 = scalar_lea.vmem %s10, %s390
      %p392 = scmp.lt.s32.totalorder %s23, 1
      %s393 = scalar_select %p392, %s23, 1
      %s394 = smul.addr %s393, 3
      %s395 = smul.addr %s394, 8
      %s396 = scalar_lea.vmem %s11, %s395
      %v398 = vld [vmem:[%s386] sm:$0xff]
      %v399 = vpack.c.bf16 %v398, %v398
      %v400 = vld [vmem:[%s1] sm:$0xff]
      %v401 = vld [vmem:[%s1 + $0x8] sm:$0xff]
      %v402 = vld [vmem:[%s1 + $0x10] sm:$0xff]
      %v403 = vld [vmem:[%s1 + $0x18] sm:$0xff]
      %v404 = vld [vmem:[%s2] sm:$0x3]
      %v406 = vlaneseq
      %v407 = vshrl.u32 %v406, 7
      %v408 = vsub.s32 0, %v407
      %v409 = vrot.slane %v404, %v408
      %v410 = vlaneseq
      %v411 = vshrl.u32 %v410, 7
      %v412 = vsub.s32 1, %v411
      %v413 = vrot.slane %v404, %v412
      %v420 = vunpack.c.l.b16 %v400
      %v421 = vunpack.c.h.b16 %v400
      %v422 = vunpack.c.l.b16 %v401
      %v423 = vunpack.c.h.b16 %v401
      %v424 = vunpack.c.l.b16 %v402
      %v425 = vunpack.c.h.b16 %v402
      %v426 = vunpack.c.l.b16 %v403
      %v427 = vunpack.c.h.b16 %v403
      %v428 = vpack.c.b16 %v422, %v420
      %v429 = vpack.c.b16 %v423, %v421
      %v430 = vpack.c.b16 %v426, %v424
      %v431 = vpack.c.b16 %v427, %v425
      %vm436 = vcmask 261120
      %v438 = vsel %vm436, %v399, 0
      %440 = vmatprep.subr.bf16.mxu0 %v429
      %441 = vmatpush1.bf16.msra.mxu0 %v428
      %442 = vmatprep.subr.bf16.mxu0 %v431
      %443 = vmatpush1.bf16.msra.mxu0 %v430
      %444 = vmatprep.subr.bf16.mxu0 0
      %445 = vmatpush1.bf16.msra.mxu0 0
      %446 = vmatprep.subr.bf16.mxu0 0
      %447 = vmatpush1.bf16.msra.mxu0 0
      %448 = vmatprep.subr.bf16.mxu0 0
      %449 = vmatpush1.bf16.msra.mxu0 0
      %450 = vmatprep.subr.bf16.mxu0 0
      %451 = vmatpush1.bf16.msra.mxu0 0
      %452 = vmatprep.subr.bf16.mxu0 0
      %453 = vmatpush1.bf16.msra.mxu0 0
      %454 = vmatprep.subr.bf16.mxu0 0
      %455 = vmatpush1.bf16.msra.mxu0 0
      %456 = vmatprep.subr.bf16.mxu0 0
      %457 = vmatpush1.bf16.msra.mxu0 0
      %458 = vmatprep.subr.bf16.mxu0 0
      %459 = vmatpush1.bf16.msra.mxu0 0
      %460 = vmatprep.subr.bf16.mxu0 0
      %461 = vmatpush1.bf16.msra.mxu0 0
      %462 = vmatprep.subr.bf16.mxu0 0
      %463 = vmatpush1.bf16.msra.mxu0 0
      %464 = vmatprep.subr.bf16.mxu0 0
      %465 = vmatpush1.bf16.msra.mxu0 0
      %466 = vmatprep.subr.bf16.mxu0 0
      %467 = vmatpush1.bf16.msra.mxu0 0
      %468 = vmatprep.subr.bf16.mxu0 0
      %469 = vmatpush1.bf16.msra.mxu0 0
      %470 = vmatprep.subr.bf16.mxu0 0
      %471 = vmatpush1.bf16.msra.mxu0 0
      %472 = vmatprep.mubr.bf16.mxu0 0
      %473 = vmatmul.mubr.bf16.gmra.mrb[0].mxu0 %v438
      %v474 = vpop.f32.mrb[0].mxu0
      %v475 = vadd.f32 %v409, %v474
      %v476 = vpop.f32.mrb[0].mxu0
      %v477 = vadd.f32 %v413, %v476
      %v478 = vpop.f32.mrb[0].mxu0
      %v479 = vpop.f32.mrb[0].mxu0
      %480 = vdwg.mxu0
      %v481 = vmul.f32 %v475, %v475
      %483 = vrot.lane.b32.xlu0 %v481, 96
      %v484 = vpop.permute.xlu0 %483
      %v486 = vadd.f32 %v481, %v484
      %487 = vrot.lane.b32.xlu0 %v481, 64
      %v488 = vpop.permute.xlu0 %487
      %v490 = vadd.f32 %v486, %v488
      %v491 = vadd.f32 %v490, 1e-08
      %v492 = vrsqrt.pop %v491
      %v493 = vmul.f32 %v475, %v492
      %495 = vrot.lane.b32.xlu0 %v492, 32
      %v496 = vpop.permute.xlu0 %495
      %v498 = vmul.f32 %v475, %v496
      %499 = vrot.lane.b32.xlu0 %v492, 64
      %v500 = vpop.permute.xlu0 %499
      %v502 = vmul.f32 %v475, %v500
      %504 = vrot.lane.b32.xlu0 %v475, 32
      %v505 = vpop.permute.xlu0 %504
      %v507 = vmul.f32 %v493, %v505
      %509 = vrot.lane.b32.xlu0 %v477, 32
      %v510 = vpop.permute.xlu0 %509
      %v512 = vmul.f32 %v498, %v510
      %514 = vrot.lane.b32.xlu0 %v512, 96
      %v515 = vpop.permute.xlu0 %514
      %v517 = vadd.f32 %v507, %v515
      %v518 = vmul.f32 %v502, %v510
      %520 = vrot.lane.b32.xlu0 %v518, 64
      %v521 = vpop.permute.xlu0 %520
      %v523 = vadd.f32 %v517, %v521
      %v524 = vmul.f32 %v523, %v493
      %526 = vrot.lane.b32.xlu0 %v524, 96
      %v527 = vpop.permute.xlu0 %526
      %v529 = vsub.f32 %v475, %v527
      %531 = vrot.lane.b32.xlu0 %v498, 96
      %v532 = vpop.permute.xlu0 %531
      %v534 = vmul.f32 %v523, %v532
      %v535 = vsub.f32 %v477, %v534
      %537 = vrot.lane.b32.xlu0 %v502, 64
      %v538 = vpop.permute.xlu0 %537
      %v540 = vmul.f32 %v523, %v538
      %542 = vrot.lane.b32.xlu0 %v540, 32
      %v543 = vpop.permute.xlu0 %542
      %v545 = vsub.f32 %v477, %v543
      %v546 = vmul.f32 %v529, %v529
      %v547 = vmul.f32 %v535, %v535
      %549 = vrot.lane.b32.xlu0 %v547, 96
      %v550 = vpop.permute.xlu0 %549
      %v552 = vadd.f32 %v546, %v550
      %v553 = vmul.f32 %v545, %v545
      %555 = vrot.lane.b32.xlu0 %v553, 64
      %v556 = vpop.permute.xlu0 %555
      %v558 = vadd.f32 %v552, %v556
      %v559 = vadd.f32 %v558, 1e-08
      %v560 = vrsqrt.pop %v559
      %v561 = vmul.f32 %v529, %v560
      %563 = vrot.lane.b32.xlu0 %v560, 32
      %v564 = vpop.permute.xlu0 %563
      %v566 = vmul.f32 %v535, %v564
      %567 = vrot.lane.b32.xlu0 %v560, 64
      %v568 = vpop.permute.xlu0 %567
      %v570 = vmul.f32 %v545, %v568
      %571 = vst [vmem:[%s391] sm:$0xff] %v475
      %572 = vst [vmem:[%s391 + $0x8] sm:$0xff] %v477
      %573 = vst.msk [vmem:[%s391] sm:$0xff] %vm436, %v493
      %vm574 = vcmask 523520
      %575 = vst.msk [vmem:[%s391] sm:$0xff] %vm574, %v498
      %vm576 = vcmask 785920
      %577 = vst.msk [vmem:[%s391] sm:$0xff] %vm576, %v502
      %vm578 = vcmask 1048320
      %579 = vst.msk [vmem:[%s391] sm:$0xff] %vm578, %v561
      %580 = vst.msk [vmem:[%s391 + $0x8] sm:$0xff] %vm436, %v566
      %581 = vst.msk [vmem:[%s391 + $0x8] sm:$0xff] %vm574, %v570
      %v582 = vld [vmem:[%s391] sm:$0xff]
      %v583 = vld [vmem:[%s391 + $0x8] sm:$0xff]
      %v584 = vld [vmem:[%s3] sm:$0xf]
      %v585 = vld [vmem:[%s3 + $0x4] sm:$0xf]
      %v586 = vld [vmem:[%s3 + $0x8] sm:$0xf]
      %v587 = vld [vmem:[%s3 + $0xc] sm:$0xf]
      %v588 = vpack.c.bf16 %v582, %v582
      %v589 = vpack.c.bf16 %v583, %v583
      %v590 = vld [vmem:[%s4] sm:$0xf]
      %v591 = vld [vmem:[%s4 + $0x4] sm:$0xf]
      %v592 = vld [vmem:[%s4 + $0x8] sm:$0xf]
      %v593 = vld [vmem:[%s4 + $0xc] sm:$0xf]
      %v594 = vld [vmem:[%s4 + $0x10] sm:$0xf]
      %v595 = vld [vmem:[%s4 + $0x14] sm:$0xf]
      %v596 = vld [vmem:[%s4 + $0x18] sm:$0xf]
      %v597 = vld [vmem:[%s4 + $0x1c] sm:$0xf]
      %v598 = vld [vmem:[%s4 + $0x20] sm:$0xf]
      %v599 = vld [vmem:[%s4 + $0x24] sm:$0xf]
      %v600 = vld [vmem:[%s4 + $0x28] sm:$0xf]
      %v601 = vld [vmem:[%s4 + $0x2c] sm:$0xf]
      %v602 = vld [vmem:[%s4 + $0x30] sm:$0xf]
      %v603 = vld [vmem:[%s4 + $0x34] sm:$0xf]
      %v604 = vld [vmem:[%s4 + $0x38] sm:$0xf]
      %v605 = vld [vmem:[%s4 + $0x3c] sm:$0xf]
      %v606 = vld [vmem:[%s4 + $0x40] sm:$0xf]
      %v607 = vld [vmem:[%s4 + $0x44] sm:$0xf]
      %v608 = vld [vmem:[%s4 + $0x48] sm:$0xf]
      %v609 = vld [vmem:[%s4 + $0x4c] sm:$0xf]
      %v610 = vld [vmem:[%s4 + $0x50] sm:$0xf]
      %v611 = vld [vmem:[%s4 + $0x54] sm:$0xf]
      %v612 = vld [vmem:[%s4 + $0x58] sm:$0xf]
      %v613 = vld [vmem:[%s4 + $0x5c] sm:$0xf]
      %v614 = vld [vmem:[%s4 + $0x60] sm:$0xf]
      %v615 = vld [vmem:[%s4 + $0x64] sm:$0xf]
      %v616 = vld [vmem:[%s4 + $0x68] sm:$0xf]
      %v617 = vld [vmem:[%s4 + $0x6c] sm:$0xf]
      %v618 = vld [vmem:[%s4 + $0x70] sm:$0xf]
      %v619 = vld [vmem:[%s4 + $0x74] sm:$0xf]
      %v620 = vld [vmem:[%s4 + $0x78] sm:$0xf]
      %v621 = vld [vmem:[%s4 + $0x7c] sm:$0xf]
      %v654 = vunpack.c.l.b16 %v590
      %v655 = vunpack.c.l.b16 %v591
      %v656 = vunpack.c.l.b16 %v592
      %v657 = vunpack.c.l.b16 %v593
      %v658 = vunpack.c.l.b16 %v594
      %v659 = vunpack.c.l.b16 %v595
      %v660 = vunpack.c.l.b16 %v596
      %v661 = vunpack.c.l.b16 %v597
      %v662 = vunpack.c.l.b16 %v598
      %v663 = vunpack.c.l.b16 %v599
      %v664 = vunpack.c.l.b16 %v600
      %v665 = vunpack.c.l.b16 %v601
      %v666 = vunpack.c.l.b16 %v602
      %v667 = vunpack.c.l.b16 %v603
      %v668 = vunpack.c.l.b16 %v604
      %v669 = vunpack.c.l.b16 %v605
      %v670 = vunpack.c.l.b16 %v606
      %v671 = vunpack.c.l.b16 %v607
      %v672 = vunpack.c.l.b16 %v608
      %v673 = vunpack.c.l.b16 %v609
      %v674 = vunpack.c.l.b16 %v610
      %v675 = vunpack.c.l.b16 %v611
      %v676 = vunpack.c.l.b16 %v612
      %v677 = vunpack.c.l.b16 %v613
      %v678 = vunpack.c.l.b16 %v614
      %v679 = vunpack.c.l.b16 %v615
      %v680 = vunpack.c.l.b16 %v616
      %v681 = vunpack.c.l.b16 %v617
      %v682 = vunpack.c.l.b16 %v618
      %v683 = vunpack.c.l.b16 %v619
      %v684 = vunpack.c.l.b16 %v620
      %v685 = vunpack.c.l.b16 %v621
      %v686 = vpack.c.b16 %v655, %v654
      %v687 = vpack.c.b16 %v657, %v656
      %v688 = vpack.c.b16 %v659, %v658
      %v689 = vpack.c.b16 %v661, %v660
      %v690 = vpack.c.b16 %v663, %v662
      %v691 = vpack.c.b16 %v665, %v664
      %v692 = vpack.c.b16 %v667, %v666
      %v693 = vpack.c.b16 %v669, %v668
      %v694 = vpack.c.b16 %v671, %v670
      %v695 = vpack.c.b16 %v673, %v672
      %v696 = vpack.c.b16 %v675, %v674
      %v697 = vpack.c.b16 %v677, %v676
      %v698 = vpack.c.b16 %v679, %v678
      %v699 = vpack.c.b16 %v681, %v680
      %v700 = vpack.c.b16 %v683, %v682
      %v701 = vpack.c.b16 %v685, %v684
      %718 = vmatprep.subr.bf16.mxu0 0
      %719 = vmatpush1.bf16.msra.mxu0 %v686
      %720 = vmatprep.subr.bf16.mxu0 0
      %721 = vmatpush1.bf16.msra.mxu0 %v687
      %722 = vmatprep.subr.bf16.mxu0 0
      %723 = vmatpush1.bf16.msra.mxu0 %v688
      %724 = vmatprep.subr.bf16.mxu0 0
      %725 = vmatpush1.bf16.msra.mxu0 %v689
      %726 = vmatprep.subr.bf16.mxu0 0
      %727 = vmatpush1.bf16.msra.mxu0 %v690
      %728 = vmatprep.subr.bf16.mxu0 0
      %729 = vmatpush1.bf16.msra.mxu0 %v691
      %730 = vmatprep.subr.bf16.mxu0 0
      %731 = vmatpush1.bf16.msra.mxu0 %v692
      %732 = vmatprep.subr.bf16.mxu0 0
      %733 = vmatpush1.bf16.msra.mxu0 %v693
      %734 = vmatprep.subr.bf16.mxu0 0
      %735 = vmatpush1.bf16.msra.mxu0 %v694
      %736 = vmatprep.subr.bf16.mxu0 0
      %737 = vmatpush1.bf16.msra.mxu0 %v695
      %738 = vmatprep.subr.bf16.mxu0 0
      %739 = vmatpush1.bf16.msra.mxu0 %v696
      %740 = vmatprep.subr.bf16.mxu0 0
      %741 = vmatpush1.bf16.msra.mxu0 %v697
      %742 = vmatprep.subr.bf16.mxu0 0
      %743 = vmatpush1.bf16.msra.mxu0 %v698
      %744 = vmatprep.subr.bf16.mxu0 0
      %745 = vmatpush1.bf16.msra.mxu0 %v699
      %746 = vmatprep.subr.bf16.mxu0 0
      %747 = vmatpush1.bf16.msra.mxu0 %v700
      %748 = vmatprep.subr.bf16.mxu0 0
      %749 = vmatpush1.bf16.msra.mxu0 %v701
      %750 = vmatprep.mubr.bf16.mxu0 %v589
      %751 = vmatmul.mubr.bf16.gmra.mrb[0].mxu0 %v588
      %v752 = vpop.f32.mrb[0].mxu0
      %v753 = vadd.f32 0.0, %v752
      %v754 = vpop.f32.mrb[0].mxu0
      %v755 = vpop.f32.mrb[0].mxu0
      %v756 = vpop.f32.mrb[0].mxu0
      %757 = vdwg.mxu0
      %v762 = vunpack.c.l.b16 %v584
      %v763 = vunpack.c.l.b16 %v585
      %v764 = vunpack.c.l.b16 %v586
      %v765 = vunpack.c.l.b16 %v587
      %v766 = vpack.c.b16 %v763, %v762
      %v767 = vpack.c.b16 %v765, %v764
      %770 = vmatprep.subr.bf16.mxu0 0
      %771 = vmatpush1.bf16.msra.mxu0 %v766
      %772 = vmatprep.subr.bf16.mxu0 0
      %773 = vmatpush1.bf16.msra.mxu0 %v767
      %774 = vmatprep.subr.bf16.mxu0 0
      %775 = vmatpush1.bf16.msra.mxu0 0
      %776 = vmatprep.subr.bf16.mxu0 0
      %777 = vmatpush1.bf16.msra.mxu0 0
      %778 = vmatprep.subr.bf16.mxu0 0
      %779 = vmatpush1.bf16.msra.mxu0 0
      %780 = vmatprep.subr.bf16.mxu0 0
      %781 = vmatpush1.bf16.msra.mxu0 0
      %782 = vmatprep.subr.bf16.mxu0 0
      %783 = vmatpush1.bf16.msra.mxu0 0
      %784 = vmatprep.subr.bf16.mxu0 0
      %785 = vmatpush1.bf16.msra.mxu0 0
      %786 = vmatprep.subr.bf16.mxu0 0
      %787 = vmatpush1.bf16.msra.mxu0 0
      %788 = vmatprep.subr.bf16.mxu0 0
      %789 = vmatpush1.bf16.msra.mxu0 0
      %790 = vmatprep.subr.bf16.mxu0 0
      %791 = vmatpush1.bf16.msra.mxu0 0
      %792 = vmatprep.subr.bf16.mxu0 0
      %793 = vmatpush1.bf16.msra.mxu0 0
      %794 = vmatprep.subr.bf16.mxu0 0
      %795 = vmatpush1.bf16.msra.mxu0 0
      %796 = vmatprep.subr.bf16.mxu0 0
      %797 = vmatpush1.bf16.msra.mxu0 0
      %798 = vmatprep.subr.bf16.mxu0 0
      %799 = vmatpush1.bf16.msra.mxu0 0
      %800 = vmatprep.subr.bf16.mxu0 0
      %801 = vmatpush1.bf16.msra.mxu0 0
      %802 = vmatprep.mubr.bf16.mxu0 0
      %803 = vmatmul.mubr.bf16.gmra.mrb[0].mxu0 %v438
      %v804 = vpop.f32.mrb[0].mxu0
      %v805 = vadd.f32 %v753, %v804
      %v806 = vpop.f32.mrb[0].mxu0
      %v807 = vpop.f32.mrb[0].mxu0
      %v808 = vpop.f32.mrb[0].mxu0
      %809 = vdwg.mxu0
      %v810 = vld [vmem:[%s5] sm:$0x1]
      %v812 = vlaneseq
      %v813 = vshrl.u32 %v812, 7
      %v814 = vsub.s32 0, %v813
      %v815 = vrot.slane %v810, %v814
      %v817 = vadd.f32 %v805, %v815
      %v818 = vpack.c.bf16 %v817, %v817
      %v819 = vld [vmem:[%s6] sm:$0xf]
      %v820 = vld [vmem:[%s6 + $0x4] sm:$0xf]
      %v821 = vld [vmem:[%s6 + $0x8] sm:$0xf]
      %v822 = vld [vmem:[%s6 + $0xc] sm:$0xf]
      %v823 = vld [vmem:[%s6 + $0x10] sm:$0xf]
      %v824 = vld [vmem:[%s6 + $0x14] sm:$0xf]
      %v825 = vld [vmem:[%s6 + $0x18] sm:$0xf]
      %v826 = vld [vmem:[%s6 + $0x1c] sm:$0xf]
      %v827 = vld [vmem:[%s7] sm:$0x1]
      %v829 = vlaneseq
      %v830 = vshrl.u32 %v829, 7
      %v831 = vsub.s32 0, %v830
      %v832 = vrot.slane %v827, %v831
      %v842 = vunpack.c.l.b16 %v819
      %v843 = vunpack.c.l.b16 %v820
      %v844 = vunpack.c.l.b16 %v821
      %v845 = vunpack.c.l.b16 %v822
      %v846 = vunpack.c.l.b16 %v823
      %v847 = vunpack.c.l.b16 %v824
      %v848 = vunpack.c.l.b16 %v825
      %v849 = vunpack.c.l.b16 %v826
      %v850 = vpack.c.b16 %v843, %v842
      %v851 = vpack.c.b16 %v845, %v844
      %v852 = vpack.c.b16 %v847, %v846
      %v853 = vpack.c.b16 %v849, %v848
      %vm858 = vcmask 523264
      %v860 = vsel %vm858, %v818, 0
      %862 = vmatprep.subr.bf16.mxu0 0
      %863 = vmatpush1.bf16.msra.mxu0 %v850
      %864 = vmatprep.subr.bf16.mxu0 0
      %865 = vmatpush1.bf16.msra.mxu0 %v851
      %866 = vmatprep.subr.bf16.mxu0 0
      %867 = vmatpush1.bf16.msra.mxu0 %v852
      %868 = vmatprep.subr.bf16.mxu0 0
      %869 = vmatpush1.bf16.msra.mxu0 %v853
      %870 = vmatprep.subr.bf16.mxu0 0
      %871 = vmatpush1.bf16.msra.mxu0 0
      %872 = vmatprep.subr.bf16.mxu0 0
      %873 = vmatpush1.bf16.msra.mxu0 0
      %874 = vmatprep.subr.bf16.mxu0 0
      %875 = vmatpush1.bf16.msra.mxu0 0
      %876 = vmatprep.subr.bf16.mxu0 0
      %877 = vmatpush1.bf16.msra.mxu0 0
      %878 = vmatprep.subr.bf16.mxu0 0
      %879 = vmatpush1.bf16.msra.mxu0 0
      %880 = vmatprep.subr.bf16.mxu0 0
      %881 = vmatpush1.bf16.msra.mxu0 0
      %882 = vmatprep.subr.bf16.mxu0 0
      %883 = vmatpush1.bf16.msra.mxu0 0
      %884 = vmatprep.subr.bf16.mxu0 0
      %885 = vmatpush1.bf16.msra.mxu0 0
      %886 = vmatprep.subr.bf16.mxu0 0
      %887 = vmatpush1.bf16.msra.mxu0 0
      %888 = vmatprep.subr.bf16.mxu0 0
      %889 = vmatpush1.bf16.msra.mxu0 0
      %890 = vmatprep.subr.bf16.mxu0 0
      %891 = vmatpush1.bf16.msra.mxu0 0
      %892 = vmatprep.subr.bf16.mxu0 0
      %893 = vmatpush1.bf16.msra.mxu0 0
      %894 = vmatprep.mubr.bf16.mxu0 0
      %895 = vmatmul.mubr.bf16.gmra.mrb[0].mxu0 %v860
      %v896 = vpop.f32.mrb[0].mxu0
      %v897 = vadd.f32 %v832, %v896
      %v898 = vpop.f32.mrb[0].mxu0
      %v899 = vpop.f32.mrb[0].mxu0
      %v900 = vpop.f32.mrb[0].mxu0
      %901 = vdwg.mxu0
      %v902 = vpack.c.bf16 %v897, %v897
      %v903 = vld [vmem:[%s8] sm:$0xff]
      %v904 = vld [vmem:[%s8 + $0x8] sm:$0xff]
      %v905 = vld [vmem:[%s8 + $0x10] sm:$0xff]
      %v906 = vld [vmem:[%s8 + $0x18] sm:$0xff]
      %v907 = vld [vmem:[%s8 + $0x20] sm:$0xff]
      %v908 = vld [vmem:[%s8 + $0x28] sm:$0xff]
      %v909 = vld [vmem:[%s8 + $0x30] sm:$0xff]
      %v910 = vld [vmem:[%s8 + $0x38] sm:$0xff]
      %v919 = vunpack.c.l.b16 %v903
      %v920 = vunpack.c.h.b16 %v903
      %v921 = vunpack.c.l.b16 %v904
      %v922 = vunpack.c.h.b16 %v904
      %v923 = vunpack.c.l.b16 %v905
      %v924 = vunpack.c.h.b16 %v905
      %v925 = vunpack.c.l.b16 %v906
      %v926 = vunpack.c.h.b16 %v906
      %v927 = vunpack.c.l.b16 %v907
      %v928 = vunpack.c.h.b16 %v907
      %v929 = vunpack.c.l.b16 %v908
      %v930 = vunpack.c.h.b16 %v908
      %v931 = vunpack.c.l.b16 %v909
      %v932 = vunpack.c.h.b16 %v909
      %v933 = vunpack.c.l.b16 %v910
      %v934 = vunpack.c.h.b16 %v910
      %v935 = vpack.c.b16 %v921, %v919
      %v936 = vpack.c.b16 %v922, %v920
      %v937 = vpack.c.b16 %v925, %v923
      %v938 = vpack.c.b16 %v926, %v924
      %v939 = vpack.c.b16 %v929, %v927
      %v940 = vpack.c.b16 %v930, %v928
      %v941 = vpack.c.b16 %v933, %v931
      %v942 = vpack.c.b16 %v934, %v932
      %v952 = vsel %vm858, %v902, 0
      %954 = vmatprep.subr.bf16.mxu0 %v936
      %955 = vmatpush1.bf16.msra.mxu0 %v935
      %956 = vmatprep.subr.bf16.mxu0 %v938
      %957 = vmatpush1.bf16.msra.mxu0 %v937
      %958 = vmatprep.subr.bf16.mxu0 %v940
      %959 = vmatpush1.bf16.msra.mxu0 %v939
      %960 = vmatprep.subr.bf16.mxu0 %v942
      %961 = vmatpush1.bf16.msra.mxu0 %v941
      %962 = vmatprep.subr.bf16.mxu0 0
      %963 = vmatpush1.bf16.msra.mxu0 0
      %964 = vmatprep.subr.bf16.mxu0 0
      %965 = vmatpush1.bf16.msra.mxu0 0
      %966 = vmatprep.subr.bf16.mxu0 0
      %967 = vmatpush1.bf16.msra.mxu0 0
      %968 = vmatprep.subr.bf16.mxu0 0
      %969 = vmatpush1.bf16.msra.mxu0 0
      %970 = vmatprep.subr.bf16.mxu0 0
      %971 = vmatpush1.bf16.msra.mxu0 0
      %972 = vmatprep.subr.bf16.mxu0 0
      %973 = vmatpush1.bf16.msra.mxu0 0
      %974 = vmatprep.subr.bf16.mxu0 0
      %975 = vmatpush1.bf16.msra.mxu0 0
      %976 = vmatprep.subr.bf16.mxu0 0
      %977 = vmatpush1.bf16.msra.mxu0 0
      %978 = vmatprep.subr.bf16.mxu0 0
      %979 = vmatpush1.bf16.msra.mxu0 0
      %980 = vmatprep.subr.bf16.mxu0 0
      %981 = vmatpush1.bf16.msra.mxu0 0
      %982 = vmatprep.subr.bf16.mxu0 0
      %983 = vmatpush1.bf16.msra.mxu0 0
      %984 = vmatprep.subr.bf16.mxu0 0
      %985 = vmatpush1.bf16.msra.mxu0 0
      %986 = vmatprep.mubr.bf16.mxu0 0
      %987 = vmatmul.mubr.bf16.gmra.mrb[0].mxu0 %v952
      %v988 = vpop.f32.mrb[0].mxu0
      %v989 = vadd.f32 0.0, %v988
      %v990 = vpop.f32.mrb[0].mxu0
      %v991 = vadd.f32 0.0, %v990
      %v992 = vpop.f32.mrb[0].mxu0
      %v993 = vpop.f32.mrb[0].mxu0
      %994 = vdwg.mxu0
      %v995 = vadd.f32 %v582, %v989
      %v996 = vadd.f32 %v583, %v991
      %v997 = vld [vmem:[%s9] sm:$0x3]
      %v999 = vlaneseq
      %v1000 = vshrl.u32 %v999, 7
      %v1001 = vsub.s32 0, %v1000
      %v1002 = vrot.slane %v997, %v1001
      %v1003 = vlaneseq
      %v1004 = vshrl.u32 %v1003, 7
      %v1005 = vsub.s32 1, %v1004
      %v1006 = vrot.slane %v997, %v1005
      %v1009 = vadd.f32 %v995, %v1002
      %v1010 = vadd.f32 %v996, %v1006
      %v1011 = vpack.c.bf16 %v1009, %v1009
      %v1012 = vpack.c.bf16 %v1010, %v1010
      %1013 = vmatprep.subr.bf16.mxu0 0
      %1014 = vmatpush1.bf16.msra.mxu0 %v686
      %1015 = vmatprep.subr.bf16.mxu0 0
      %1016 = vmatpush1.bf16.msra.mxu0 %v687
      %1017 = vmatprep.subr.bf16.mxu0 0
      %1018 = vmatpush1.bf16.msra.mxu0 %v688
      %1019 = vmatprep.subr.bf16.mxu0 0
      %1020 = vmatpush1.bf16.msra.mxu0 %v689
      %1021 = vmatprep.subr.bf16.mxu0 0
      %1022 = vmatpush1.bf16.msra.mxu0 %v690
      %1023 = vmatprep.subr.bf16.mxu0 0
      %1024 = vmatpush1.bf16.msra.mxu0 %v691
      %1025 = vmatprep.subr.bf16.mxu0 0
      %1026 = vmatpush1.bf16.msra.mxu0 %v692
      %1027 = vmatprep.subr.bf16.mxu0 0
      %1028 = vmatpush1.bf16.msra.mxu0 %v693
      %1029 = vmatprep.subr.bf16.mxu0 0
      %1030 = vmatpush1.bf16.msra.mxu0 %v694
      %1031 = vmatprep.subr.bf16.mxu0 0
      %1032 = vmatpush1.bf16.msra.mxu0 %v695
      %1033 = vmatprep.subr.bf16.mxu0 0
      %1034 = vmatpush1.bf16.msra.mxu0 %v696
      %1035 = vmatprep.subr.bf16.mxu0 0
      %1036 = vmatpush1.bf16.msra.mxu0 %v697
      %1037 = vmatprep.subr.bf16.mxu0 0
      %1038 = vmatpush1.bf16.msra.mxu0 %v698
      %1039 = vmatprep.subr.bf16.mxu0 0
      %1040 = vmatpush1.bf16.msra.mxu0 %v699
      %1041 = vmatprep.subr.bf16.mxu0 0
      %1042 = vmatpush1.bf16.msra.mxu0 %v700
      %1043 = vmatprep.subr.bf16.mxu0 0
      %1044 = vmatpush1.bf16.msra.mxu0 %v701
      %1045 = vmatprep.mubr.bf16.mxu0 %v1012
      %1046 = vmatmul.mubr.bf16.gmra.mrb[0].mxu0 %v1011
      %v1047 = vpop.f32.mrb[0].mxu0
      %v1048 = vadd.f32 0.0, %v1047
      %v1049 = vpop.f32.mrb[0].mxu0
      %v1050 = vpop.f32.mrb[0].mxu0
      %v1051 = vpop.f32.mrb[0].mxu0
      %1052 = vdwg.mxu0
      %1053 = vmatprep.subr.bf16.mxu0 0
      %1054 = vmatpush1.bf16.msra.mxu0 %v766
      %1055 = vmatprep.subr.bf16.mxu0 0
      %1056 = vmatpush1.bf16.msra.mxu0 %v767
      %1057 = vmatprep.subr.bf16.mxu0 0
      %1058 = vmatpush1.bf16.msra.mxu0 0
      %1059 = vmatprep.subr.bf16.mxu0 0
      %1060 = vmatpush1.bf16.msra.mxu0 0
      %1061 = vmatprep.subr.bf16.mxu0 0
      %1062 = vmatpush1.bf16.msra.mxu0 0
      %1063 = vmatprep.subr.bf16.mxu0 0
      %1064 = vmatpush1.bf16.msra.mxu0 0
      %1065 = vmatprep.subr.bf16.mxu0 0
      %1066 = vmatpush1.bf16.msra.mxu0 0
      %1067 = vmatprep.subr.bf16.mxu0 0
      %1068 = vmatpush1.bf16.msra.mxu0 0
      %1069 = vmatprep.subr.bf16.mxu0 0
      %1070 = vmatpush1.bf16.msra.mxu0 0
      %1071 = vmatprep.subr.bf16.mxu0 0
      %1072 = vmatpush1.bf16.msra.mxu0 0
      %1073 = vmatprep.subr.bf16.mxu0 0
      %1074 = vmatpush1.bf16.msra.mxu0 0
      %1075 = vmatprep.subr.bf16.mxu0 0
      %1076 = vmatpush1.bf16.msra.mxu0 0
      %1077 = vmatprep.subr.bf16.mxu0 0
      %1078 = vmatpush1.bf16.msra.mxu0 0
      %1079 = vmatprep.subr.bf16.mxu0 0
      %1080 = vmatpush1.bf16.msra.mxu0 0
      %1081 = vmatprep.subr.bf16.mxu0 0
      %1082 = vmatpush1.bf16.msra.mxu0 0
      %1083 = vmatprep.subr.bf16.mxu0 0
      %1084 = vmatpush1.bf16.msra.mxu0 0
      %1085 = vmatprep.mubr.bf16.mxu0 0
      %1086 = vmatmul.mubr.bf16.gmra.mrb[0].mxu0 %v438
      %v1087 = vpop.f32.mrb[0].mxu0
      %v1088 = vadd.f32 %v1048, %v1087
      %v1089 = vpop.f32.mrb[0].mxu0
      %v1090 = vpop.f32.mrb[0].mxu0
      %v1091 = vpop.f32.mrb[0].mxu0
      %1092 = vdwg.mxu0
      %v1093 = vadd.f32 %v1088, %v815
      %v1094 = vpack.c.bf16 %v1093, %v1093
      %v1096 = vsel %vm858, %v1094, 0
      %1098 = vmatprep.subr.bf16.mxu0 0
      %1099 = vmatpush1.bf16.msra.mxu0 %v850
      %1100 = vmatprep.subr.bf16.mxu0 0
      %1101 = vmatpush1.bf16.msra.mxu0 %v851
      %1102 = vmatprep.subr.bf16.mxu0 0
      %1103 = vmatpush1.bf16.msra.mxu0 %v852
      %1104 = vmatprep.subr.bf16.mxu0 0
      %1105 = vmatpush1.bf16.msra.mxu0 %v853
      %1106 = vmatprep.subr.bf16.mxu0 0
      %1107 = vmatpush1.bf16.msra.mxu0 0
      %1108 = vmatprep.subr.bf16.mxu0 0
      %1109 = vmatpush1.bf16.msra.mxu0 0
      %1110 = vmatprep.subr.bf16.mxu0 0
      %1111 = vmatpush1.bf16.msra.mxu0 0
      %1112 = vmatprep.subr.bf16.mxu0 0
      %1113 = vmatpush1.bf16.msra.mxu0 0
      %1114 = vmatprep.subr.bf16.mxu0 0
      %1115 = vmatpush1.bf16.msra.mxu0 0
      %1116 = vmatprep.subr.bf16.mxu0 0
      %1117 = vmatpush1.bf16.msra.mxu0 0
      %1118 = vmatprep.subr.bf16.mxu0 0
      %1119 = vmatpush1.bf16.msra.mxu0 0
      %1120 = vmatprep.subr.bf16.mxu0 0
      %1121 = vmatpush1.bf16.msra.mxu0 0
      %1122 = vmatprep.subr.bf16.mxu0 0
      %1123 = vmatpush1.bf16.msra.mxu0 0
      %1124 = vmatprep.subr.bf16.mxu0 0
      %1125 = vmatpush1.bf16.msra.mxu0 0
      %1126 = vmatprep.subr.bf16.mxu0 0
      %1127 = vmatpush1.bf16.msra.mxu0 0
      %1128 = vmatprep.subr.bf16.mxu0 0
      %1129 = vmatpush1.bf16.msra.mxu0 0
      %1130 = vmatprep.mubr.bf16.mxu0 0
      %1131 = vmatmul.mubr.bf16.gmra.mrb[0].mxu0 %v1096
      %v1132 = vpop.f32.mrb[0].mxu0
      %v1133 = vadd.f32 %v832, %v1132
      %v1134 = vpop.f32.mrb[0].mxu0
      %v1135 = vpop.f32.mrb[0].mxu0
      %v1136 = vpop.f32.mrb[0].mxu0
      %1137 = vdwg.mxu0
      %v1138 = vpack.c.bf16 %v1133, %v1133
      %v1140 = vsel %vm858, %v1138, 0
      %1142 = vmatprep.subr.bf16.mxu0 %v936
      %1143 = vmatpush1.bf16.msra.mxu0 %v935
      %1144 = vmatprep.subr.bf16.mxu0 %v938
      %1145 = vmatpush1.bf16.msra.mxu0 %v937
      %1146 = vmatprep.subr.bf16.mxu0 %v940
      %1147 = vmatpush1.bf16.msra.mxu0 %v939
      %1148 = vmatprep.subr.bf16.mxu0 %v942
      %1149 = vmatpush1.bf16.msra.mxu0 %v941
      %1150 = vmatprep.subr.bf16.mxu0 0
      %1151 = vmatpush1.bf16.msra.mxu0 0
      %1152 = vmatprep.subr.bf16.mxu0 0
      %1153 = vmatpush1.bf16.msra.mxu0 0
      %1154 = vmatprep.subr.bf16.mxu0 0
      %1155 = vmatpush1.bf16.msra.mxu0 0
      %1156 = vmatprep.subr.bf16.mxu0 0
      %1157 = vmatpush1.bf16.msra.mxu0 0
      %1158 = vmatprep.subr.bf16.mxu0 0
      %1159 = vmatpush1.bf16.msra.mxu0 0
      %1160 = vmatprep.subr.bf16.mxu0 0
      %1161 = vmatpush1.bf16.msra.mxu0 0
      %1162 = vmatprep.subr.bf16.mxu0 0
      %1163 = vmatpush1.bf16.msra.mxu0 0
      %1164 = vmatprep.subr.bf16.mxu0 0
      %1165 = vmatpush1.bf16.msra.mxu0 0
      %1166 = vmatprep.subr.bf16.mxu0 0
      %1167 = vmatpush1.bf16.msra.mxu0 0
      %1168 = vmatprep.subr.bf16.mxu0 0
      %1169 = vmatpush1.bf16.msra.mxu0 0
      %1170 = vmatprep.subr.bf16.mxu0 0
      %1171 = vmatpush1.bf16.msra.mxu0 0
      %1172 = vmatprep.subr.bf16.mxu0 0
      %1173 = vmatpush1.bf16.msra.mxu0 0
      %1174 = vmatprep.mubr.bf16.mxu0 0
      %1175 = vmatmul.mubr.bf16.gmra.mrb[0].mxu0 %v1140
      %v1176 = vpop.f32.mrb[0].mxu0
      %v1177 = vadd.f32 0.0, %v1176
      %v1178 = vpop.f32.mrb[0].mxu0
      %v1179 = vadd.f32 0.0, %v1178
      %v1180 = vpop.f32.mrb[0].mxu0
      %v1181 = vpop.f32.mrb[0].mxu0
      %1182 = vdwg.mxu0
      %v1183 = vadd.f32 %v1009, %v1177
      %v1184 = vadd.f32 %v1010, %v1179
      %v1185 = vadd.f32 %v1183, %v1002
      %v1186 = vadd.f32 %v1184, %v1006
      %v1187 = vpack.c.bf16 %v1185, %v1185
      %v1188 = vpack.c.bf16 %v1186, %v1186
      %1189 = vmatprep.subr.bf16.mxu0 0
      %1190 = vmatpush1.bf16.msra.mxu0 %v686
      %1191 = vmatprep.subr.bf16.mxu0 0
      %1192 = vmatpush1.bf16.msra.mxu0 %v687
      %1193 = vmatprep.subr.bf16.mxu0 0
      %1194 = vmatpush1.bf16.msra.mxu0 %v688
      %1195 = vmatprep.subr.bf16.mxu0 0
      %1196 = vmatpush1.bf16.msra.mxu0 %v689
      %1197 = vmatprep.subr.bf16.mxu0 0
      %1198 = vmatpush1.bf16.msra.mxu0 %v690
      %1199 = vmatprep.subr.bf16.mxu0 0
      %1200 = vmatpush1.bf16.msra.mxu0 %v691
      %1201 = vmatprep.subr.bf16.mxu0 0
      %1202 = vmatpush1.bf16.msra.mxu0 %v692
      %1203 = vmatprep.subr.bf16.mxu0 0
      %1204 = vmatpush1.bf16.msra.mxu0 %v693
      %1205 = vmatprep.subr.bf16.mxu0 0
      %1206 = vmatpush1.bf16.msra.mxu0 %v694
      %1207 = vmatprep.subr.bf16.mxu0 0
      %1208 = vmatpush1.bf16.msra.mxu0 %v695
      %1209 = vmatprep.subr.bf16.mxu0 0
      %1210 = vmatpush1.bf16.msra.mxu0 %v696
      %1211 = vmatprep.subr.bf16.mxu0 0
      %1212 = vmatpush1.bf16.msra.mxu0 %v697
      %1213 = vmatprep.subr.bf16.mxu0 0
      %1214 = vmatpush1.bf16.msra.mxu0 %v698
      %1215 = vmatprep.subr.bf16.mxu0 0
      %1216 = vmatpush1.bf16.msra.mxu0 %v699
      %1217 = vmatprep.subr.bf16.mxu0 0
      %1218 = vmatpush1.bf16.msra.mxu0 %v700
      %1219 = vmatprep.subr.bf16.mxu0 0
      %1220 = vmatpush1.bf16.msra.mxu0 %v701
      %1221 = vmatprep.mubr.bf16.mxu0 %v1188
      %1222 = vmatmul.mubr.bf16.gmra.mrb[0].mxu0 %v1187
      %v1223 = vpop.f32.mrb[0].mxu0
      %v1224 = vadd.f32 0.0, %v1223
      %v1225 = vpop.f32.mrb[0].mxu0
      %v1226 = vpop.f32.mrb[0].mxu0
      %v1227 = vpop.f32.mrb[0].mxu0
      %1228 = vdwg.mxu0
      %1229 = vmatprep.subr.bf16.mxu0 0
      %1230 = vmatpush1.bf16.msra.mxu0 %v766
      %1231 = vmatprep.subr.bf16.mxu0 0
      %1232 = vmatpush1.bf16.msra.mxu0 %v767
      %1233 = vmatprep.subr.bf16.mxu0 0
      %1234 = vmatpush1.bf16.msra.mxu0 0
      %1235 = vmatprep.subr.bf16.mxu0 0
      %1236 = vmatpush1.bf16.msra.mxu0 0
      %1237 = vmatprep.subr.bf16.mxu0 0
      %1238 = vmatpush1.bf16.msra.mxu0 0
      %1239 = vmatprep.subr.bf16.mxu0 0
      %1240 = vmatpush1.bf16.msra.mxu0 0
      %1241 = vmatprep.subr.bf16.mxu0 0
      %1242 = vmatpush1.bf16.msra.mxu0 0
      %1243 = vmatprep.subr.bf16.mxu0 0
      %1244 = vmatpush1.bf16.msra.mxu0 0
      %1245 = vmatprep.subr.bf16.mxu0 0
      %1246 = vmatpush1.bf16.msra.mxu0 0
      %1247 = vmatprep.subr.bf16.mxu0 0
      %1248 = vmatpush1.bf16.msra.mxu0 0
      %1249 = vmatprep.subr.bf16.mxu0 0
      %1250 = vmatpush1.bf16.msra.mxu0 0
      %1251 = vmatprep.subr.bf16.mxu0 0
      %1252 = vmatpush1.bf16.msra.mxu0 0
      %1253 = vmatprep.subr.bf16.mxu0 0
      %1254 = vmatpush1.bf16.msra.mxu0 0
      %1255 = vmatprep.subr.bf16.mxu0 0
      %1256 = vmatpush1.bf16.msra.mxu0 0
      %1257 = vmatprep.subr.bf16.mxu0 0
      %1258 = vmatpush1.bf16.msra.mxu0 0
      %1259 = vmatprep.subr.bf16.mxu0 0
      %1260 = vmatpush1.bf16.msra.mxu0 0
      %1261 = vmatprep.mubr.bf16.mxu0 0
      %1262 = vmatmul.mubr.bf16.gmra.mrb[0].mxu0 %v438
      %v1263 = vpop.f32.mrb[0].mxu0
      %v1264 = vadd.f32 %v1224, %v1263
      %v1265 = vpop.f32.mrb[0].mxu0
      %v1266 = vpop.f32.mrb[0].mxu0
      %v1267 = vpop.f32.mrb[0].mxu0
      %1268 = vdwg.mxu0
      %v1269 = vadd.f32 %v1264, %v815
      %v1270 = vpack.c.bf16 %v1269, %v1269
      %v1272 = vsel %vm858, %v1270, 0
      %1274 = vmatprep.subr.bf16.mxu0 0
      %1275 = vmatpush1.bf16.msra.mxu0 %v850
      %1276 = vmatprep.subr.bf16.mxu0 0
      %1277 = vmatpush1.bf16.msra.mxu0 %v851
      %1278 = vmatprep.subr.bf16.mxu0 0
      %1279 = vmatpush1.bf16.msra.mxu0 %v852
      %1280 = vmatprep.subr.bf16.mxu0 0
      %1281 = vmatpush1.bf16.msra.mxu0 %v853
      %1282 = vmatprep.subr.bf16.mxu0 0
      %1283 = vmatpush1.bf16.msra.mxu0 0
      %1284 = vmatprep.subr.bf16.mxu0 0
      %1285 = vmatpush1.bf16.msra.mxu0 0
      %1286 = vmatprep.subr.bf16.mxu0 0
      %1287 = vmatpush1.bf16.msra.mxu0 0
      %1288 = vmatprep.subr.bf16.mxu0 0
      %1289 = vmatpush1.bf16.msra.mxu0 0
      %1290 = vmatprep.subr.bf16.mxu0 0
      %1291 = vmatpush1.bf16.msra.mxu0 0
      %1292 = vmatprep.subr.bf16.mxu0 0
      %1293 = vmatpush1.bf16.msra.mxu0 0
      %1294 = vmatprep.subr.bf16.mxu0 0
      %1295 = vmatpush1.bf16.msra.mxu0 0
      %1296 = vmatprep.subr.bf16.mxu0 0
      %1297 = vmatpush1.bf16.msra.mxu0 0
      %1298 = vmatprep.subr.bf16.mxu0 0
      %1299 = vmatpush1.bf16.msra.mxu0 0
      %1300 = vmatprep.subr.bf16.mxu0 0
      %1301 = vmatpush1.bf16.msra.mxu0 0
      %1302 = vmatprep.subr.bf16.mxu0 0
      %1303 = vmatpush1.bf16.msra.mxu0 0
      %1304 = vmatprep.subr.bf16.mxu0 0
      %1305 = vmatpush1.bf16.msra.mxu0 0
      %1306 = vmatprep.mubr.bf16.mxu0 0
      %1307 = vmatmul.mubr.bf16.gmra.mrb[0].mxu0 %v1272
      %v1308 = vpop.f32.mrb[0].mxu0
      %v1309 = vadd.f32 %v832, %v1308
      %v1310 = vpop.f32.mrb[0].mxu0
      %v1311 = vpop.f32.mrb[0].mxu0
      %v1312 = vpop.f32.mrb[0].mxu0
      %1313 = vdwg.mxu0
      %v1314 = vpack.c.bf16 %v1309, %v1309
      %v1316 = vsel %vm858, %v1314, 0
      %1318 = vmatprep.subr.bf16.mxu0 %v936
      %1319 = vmatpush1.bf16.msra.mxu0 %v935
      %1320 = vmatprep.subr.bf16.mxu0 %v938
      %1321 = vmatpush1.bf16.msra.mxu0 %v937
      %1322 = vmatprep.subr.bf16.mxu0 %v940
      %1323 = vmatpush1.bf16.msra.mxu0 %v939
      %1324 = vmatprep.subr.bf16.mxu0 %v942
      %1325 = vmatpush1.bf16.msra.mxu0 %v941
      %1326 = vmatprep.subr.bf16.mxu0 0
      %1327 = vmatpush1.bf16.msra.mxu0 0
      %1328 = vmatprep.subr.bf16.mxu0 0
      %1329 = vmatpush1.bf16.msra.mxu0 0
      %1330 = vmatprep.subr.bf16.mxu0 0
      %1331 = vmatpush1.bf16.msra.mxu0 0
      %1332 = vmatprep.subr.bf16.mxu0 0
      %1333 = vmatpush1.bf16.msra.mxu0 0
      %1334 = vmatprep.subr.bf16.mxu0 0
      %1335 = vmatpush1.bf16.msra.mxu0 0
      %1336 = vmatprep.subr.bf16.mxu0 0
      %1337 = vmatpush1.bf16.msra.mxu0 0
      %1338 = vmatprep.subr.bf16.mxu0 0
      %1339 = vmatpush1.bf16.msra.mxu0 0
      %1340 = vmatprep.subr.bf16.mxu0 0
      %1341 = vmatpush1.bf16.msra.mxu0 0
      %1342 = vmatprep.subr.bf16.mxu0 0
      %1343 = vmatpush1.bf16.msra.mxu0 0
      %1344 = vmatprep.subr.bf16.mxu0 0
      %1345 = vmatpush1.bf16.msra.mxu0 0
      %1346 = vmatprep.subr.bf16.mxu0 0
      %1347 = vmatpush1.bf16.msra.mxu0 0
      %1348 = vmatprep.subr.bf16.mxu0 0
      %1349 = vmatpush1.bf16.msra.mxu0 0
      %1350 = vmatprep.mubr.bf16.mxu0 0
      %1351 = vmatmul.mubr.bf16.gmra.mrb[0].mxu0 %v1316
      %v1352 = vpop.f32.mrb[0].mxu0
      %v1353 = vadd.f32 0.0, %v1352
      %v1354 = vpop.f32.mrb[0].mxu0
      %v1355 = vadd.f32 0.0, %v1354
      %v1356 = vpop.f32.mrb[0].mxu0
      %v1357 = vpop.f32.mrb[0].mxu0
      %1358 = vdwg.mxu0
      %v1359 = vadd.f32 %v1185, %v1353
      %v1360 = vadd.f32 %v1186, %v1355
      %v1361 = vadd.f32 %v1359, %v1002
      %v1362 = vadd.f32 %v1360, %v1006
      %1363 = vst [vmem:[%s391] sm:$0xff] %v1361
      %1364 = vst [vmem:[%s391 + $0x8] sm:$0xff] %v1362
      %v1365 = vmul.f32 %v1361, %v1361
      %1367 = vrot.lane.b32.xlu0 %v1365, 96
      %v1368 = vpop.permute.xlu0 %1367
      %v1370 = vadd.f32 %v1365, %v1368
      %1371 = vrot.lane.b32.xlu0 %v1365, 64
      %v1372 = vpop.permute.xlu0 %1371
      %v1374 = vadd.f32 %v1370, %v1372
      %v1375 = vadd.f32 %v1374, 1e-08
      %v1376 = vrsqrt.pop %v1375
      %v1377 = vmul.f32 %v1361, %v1376
      %1379 = vrot.lane.b32.xlu0 %v1376, 32
      %v1380 = vpop.permute.xlu0 %1379
      %v1382 = vmul.f32 %v1361, %v1380
      %1383 = vrot.lane.b32.xlu0 %v1376, 64
      %v1384 = vpop.permute.xlu0 %1383
      %v1386 = vmul.f32 %v1361, %v1384
      %1388 = vrot.lane.b32.xlu0 %v1361, 32
      %v1389 = vpop.permute.xlu0 %1388
      %v1391 = vmul.f32 %v1377, %v1389
      %1393 = vrot.lane.b32.xlu0 %v1362, 32
      %v1394 = vpop.permute.xlu0 %1393
      %v1396 = vmul.f32 %v1382, %v1394
      %1398 = vrot.lane.b32.xlu0 %v1396, 96
      %v1399 = vpop.permute.xlu0 %1398
      %v1401 = vadd.f32 %v1391, %v1399
      %v1402 = vmul.f32 %v1386, %v1394
      %1404 = vrot.lane.b32.xlu0 %v1402, 64
      %v1405 = vpop.permute.xlu0 %1404
      %v1407 = vadd.f32 %v1401, %v1405
      %v1408 = vmul.f32 %v1407, %v1377
      %1410 = vrot.lane.b32.xlu0 %v1408, 96
      %v1411 = vpop.permute.xlu0 %1410
      %v1413 = vsub.f32 %v1361, %v1411
      %1415 = vrot.lane.b32.xlu0 %v1382, 96
      %v1416 = vpop.permute.xlu0 %1415
      %v1418 = vmul.f32 %v1407, %v1416
      %v1419 = vsub.f32 %v1362, %v1418
      %1421 = vrot.lane.b32.xlu0 %v1386, 64
      %v1422 = vpop.permute.xlu0 %1421
      %v1424 = vmul.f32 %v1407, %v1422
      %1426 = vrot.lane.b32.xlu0 %v1424, 32
      %v1427 = vpop.permute.xlu0 %1426
      %v1429 = vsub.f32 %v1362, %v1427
      %v1430 = vmul.f32 %v1413, %v1413
      %v1431 = vmul.f32 %v1419, %v1419
      %1433 = vrot.lane.b32.xlu0 %v1431, 96
      %v1434 = vpop.permute.xlu0 %1433
      %v1436 = vadd.f32 %v1430, %v1434
      %v1437 = vmul.f32 %v1429, %v1429
      %1439 = vrot.lane.b32.xlu0 %v1437, 64
      %v1440 = vpop.permute.xlu0 %1439
      %v1442 = vadd.f32 %v1436, %v1440
      %v1443 = vadd.f32 %v1442, 1e-08
      %v1444 = vrsqrt.pop %v1443
      %v1445 = vmul.f32 %v1413, %v1444
      %1447 = vrot.lane.b32.xlu0 %v1444, 32
      %v1448 = vpop.permute.xlu0 %1447
      %v1450 = vmul.f32 %v1419, %v1448
      %1451 = vrot.lane.b32.xlu0 %v1444, 64
      %v1452 = vpop.permute.xlu0 %1451
      %v1454 = vmul.f32 %v1429, %v1452
      %v1455 = vmul.f32 %v1382, %v1454
      %1457 = vrot.lane.b32.xlu0 %v1450, 64
      %v1458 = vpop.permute.xlu0 %1457
      %v1460 = vmul.f32 %v1386, %v1458
      %1462 = vrot.lane.b32.xlu0 %v1460, 96
      %v1463 = vpop.permute.xlu0 %1462
      %v1465 = vsub.f32 %v1455, %v1463
      %1467 = vrot.lane.b32.xlu0 %v1445, 96
      %v1468 = vpop.permute.xlu0 %1467
      %v1470 = vmul.f32 %v1386, %v1468
      %1472 = vrot.lane.b32.xlu0 %v1454, 96
      %v1473 = vpop.permute.xlu0 %1472
      %v1475 = vmul.f32 %v1377, %v1473
      %1477 = vrot.lane.b32.xlu0 %v1475, 64
      %v1478 = vpop.permute.xlu0 %1477
      %v1480 = vsub.f32 %v1470, %v1478
      %v1481 = vmul.f32 %v1377, %v1450
      %1482 = vrot.lane.b32.xlu0 %v1445, 64
      %v1483 = vpop.permute.xlu0 %1482
      %v1485 = vmul.f32 %v1382, %v1483
      %1487 = vrot.lane.b32.xlu0 %v1485, 96
      %v1488 = vpop.permute.xlu0 %1487
      %v1490 = vsub.f32 %v1481, %v1488
      %1491 = vst.msk [vmem:[%s396] sm:$0xff] %vm436, %v1377
      %1492 = vst.msk [vmem:[%s396] sm:$0xff] %vm574, %v1382
      %1493 = vst.msk [vmem:[%s396] sm:$0xff] %vm576, %v1386
      %1494 = vst.msk [vmem:[%s396] sm:$0xff] %vm578, %v1445
      %1495 = vst.msk [vmem:[%s396 + $0x8] sm:$0xff] %vm436, %v1450
      %1496 = vst.msk [vmem:[%s396 + $0x8] sm:$0xff] %vm574, %v1454
      %1498 = vrot.lane.b32.xlu0 %v1465, 32
      %v1499 = vpop.permute.xlu0 %1498
      %1501 = vst.msk [vmem:[%s396 + $0x8] sm:$0xff] %vm576, %v1499
      %1503 = vrot.lane.b32.xlu0 %v1480, 32
      %v1504 = vpop.permute.xlu0 %1503
      %1506 = vst.msk [vmem:[%s396 + $0x8] sm:$0xff] %vm578, %v1504
      %1507 = vst.msk [vmem:[%s396 + $0x10] sm:$0xff] %vm436, %v1490
      %p1508 = scmp.lt.s32.totalorder %s23, 1
      %s1509 = scalar_select %p1508, %s23, 1
      %s1510 = smul.addr %s1509, 2
      %s1511 = smul.addr %s1510, 8
      %s1512 = scalar_lea.vmem %s10, %s1511
      %p1513 = scmp.lt.s32.totalorder %s23, 1
      %s1514 = scalar_select %p1513, %s23, 1
      %s1515 = smul.addr %s1514, 3
      %s1516 = smul.addr %s1515, 8
      %s1517 = scalar_lea.vmem %s11, %s1516
      // Predicated region
      $region61: #{meva_forward.6} parent=59 // pred_check
        %p1518 = pneg %p256
      $region62: #{meva_forward.6} parent=59 // pred_check_branch
        %1520 = sbr.rel (%p1518) target = $region64
      $region63: #{meva_forward.6} parent=59 // pred_region
        _
      $region64: #{meva_forward.6} parent=59 // pred_fallthru
        _
      // Predicated region
      $region65: #{meva_forward.6} parent=59 // pred_check
        %p1521 = pneg %p282
      $region66: #{meva_forward.6} parent=59 // pred_check_branch
        %1523 = sbr.rel (%p1521) target = $region68
      $region67: #{meva_forward.6} parent=59 // pred_region
        _
      $region68: #{meva_forward.6} parent=59 // pred_fallthru
        _
    $region60: #{meva_forward.6} parent=5 // pred_fallthru
      _
    %p1524 = scmp.le.s32.totalorder 2, %s18
    // Predicated region
    $region69: #{meva_forward.6} parent=5 // pred_check
      %p1525 = pneg %p1524
    $region70: #{meva_forward.6} parent=5 // pred_check_branch
      %1527 = sbr.rel (%p1525) target = $region72
    $region71: #{meva_forward.6} parent=5 // pred_region
      %s1528 = ssub.s32 %s18, 2
      // Predicated region
      $region73: #{meva_forward.6} parent=71 // pred_check
        %p1529 = pneg %p262
      $region74: #{meva_forward.6} parent=71 // pred_check_branch
        %1531 = sbr.rel (%p1529) target = $region76
      $region75: #{meva_forward.6} parent=71 // pred_region
        %p1532 = scmp.lt.s32.totalorder %s24, 1
        %s1533 = scalar_select %p1532, %s24, 1
        %s1534 = smul.addr %s1533, 2
        %s1535 = smul.addr %s1534, 8
        %s1536 = scalar_lea.vmem %s10, %s1535
      $region76: #{meva_forward.6} parent=71 // pred_fallthru
        _
      // Predicated region
      $region77: #{meva_forward.6} parent=71 // pred_check
        %p1537 = pneg %p288
      $region78: #{meva_forward.6} parent=71 // pred_check_branch
        %1539 = sbr.rel (%p1537) target = $region80
      $region79: #{meva_forward.6} parent=71 // pred_region
        %p1540 = scmp.lt.s32.totalorder %s24, 1
        %s1541 = scalar_select %p1540, %s24, 1
        %s1542 = smul.addr %s1541, 3
        %s1543 = smul.addr %s1542, 8
        %s1544 = scalar_lea.vmem %s11, %s1543
      $region80: #{meva_forward.6} parent=71 // pred_fallthru
        _
    $region72: #{meva_forward.6} parent=5 // pred_fallthru
      _
  $region6: #{meva_forward.6} parent=0 // loop_footer
    %s22 = sadd.s32 1, %s18
  $region7: #{meva_forward.6} parent=0 // loop_footer_branch
    %17 = sbr.rel target = $region3
  $region8: #{meva_forward.6} parent=0 // loop_exit
    _

// kernel: meva_forward.7
$region0: #{meva_forward.7}
  #allocation0 [shape = 'u32[]', space=smem, size = 0x4, offset = 0x4, fixed_abs, tag = 'smem constant byte address 0x4 - core index']
  #allocation1 [shape = 'u32[144,128]{1,0:T(1,128)}', space=vmem, size = 0x12000, scoped, tag = 'internal scratch']
  %s0 = inlined_call_operand.vmem [shape: f32[16,256], index: 0, kind: input, shape index: {}]
  %s1 = inlined_call_operand.vmem [shape: f32[16,288], index: 1, kind: input, shape index: {}]
  %s2 = inlined_call_operand.vmem [shape: f32[1,256], index: 2, kind: input, shape index: {}]
  %s3 = inlined_call_operand.vmem [shape: bf16[256,256], index: 3, kind: input, shape index: {}]
  %s4 = inlined_call_operand.vmem [shape: bf16[288,256], index: 4, kind: input, shape index: {}]
  %s5 = inlined_call_operand.vmem [shape: bf16[256,128], index: 5, kind: input, shape index: {}]
  %s6 = inlined_call_operand.vmem [shape: f32[16,256], index: 6, kind: output, shape index: {0}]
  %s7 = inlined_call_operand.vmem [shape: f32[16,128], index: 7, kind: output, shape index: {1}]
  %8 = xla_tuple %s6, %s7
  %s9 = sld [smem:[#allocation0]]
  $region151: #{meva_forward.7} parent=0
    _
  %s11 = ssub.s32 1, %s9
  %s12 = scalar_select 0, %s11, %s9
  $region1: #{meva_forward.7} parent=0
    #allocation2 [shape = 'u8[131072]{0}', space=vmem, size = 0x20000, scoped, tag = 'input window, operand 3']
    #allocation3 [shape = 'u8[147456]{0}', space=vmem, size = 0x24000, scoped, tag = 'input window, operand 4']
    loop: start=0, step=1, limit=6
    $region2: #{meva_forward.7} parent=1 // loop_pre_header
      _
    $region3: #{meva_forward.7} parent=1 // loop_header
      %s14 = sphi 0, %s18
      %p15 = scmp.ge.s32.totalorder %s14, 6
      %s21 = sphi 0, %s33
      %s22 = sphi 0, %s29
      %s23 = sphi 0, %s21
      %s24 = sphi 0, %s22
      %s25 = sphi 0, %s23
      %s26 = sphi 0, %s24
      %s36 = sphi 0, %s38
      %s39 = sphi 0, %s36
      %s40 = sphi 0, %s39
      %s56 = sphi 0, %s40
      %s62 = sphi 0, %s64
      %s65 = sphi 0, %s62
      %s66 = sphi 0, %s65
      %s82 = sphi 0, %s66
      %s88 = sphi 0, %s90
      %s91 = sphi 0, %s88
      %s92 = sphi 0, %s91
      %s108 = sphi 0, %s92
      %s114 = sphi 0, %s116
      %s117 = sphi 0, %s114
      %s118 = sphi 0, %s117
      %s134 = sphi 0, %s118
      %s140 = sphi 0, %s142
      %s143 = sphi 0, %s140
      %s144 = sphi 0, %s143
      %s160 = sphi 0, %s144
      %s166 = sphi 0, %s168
      %s169 = sphi 0, %s166
      %s170 = sphi 0, %s169
      %s186 = sphi 0, %s170
      %s194 = sphi 0, %s196
      %s197 = sphi 0, %s194
      %s198 = sphi 0, %s197
      %s214 = sphi 0, %s198
      %s220 = sphi 0, %s222
      %s223 = sphi 0, %s220
      %s224 = sphi 0, %s223
      %s240 = sphi 0, %s224
    $region4: #{meva_forward.7} parent=1 // loop_header_branch
      %17 = sbr.rel (%p15) target = $region8
    $region5: #{meva_forward.7} parent=1 // loop_body
      %s19 = ssub.s32 %s14, 1
      %s20 = ssub.s32 %s14, 2
      %s27 = sadd.s32 1, %s22
      %p28 = scmp.ge.s32.totalorder %s27, 2
      %s29 = scalar_select %p28, 0, %s27
      %s30 = sadd.s32 1, %s21
      %s31 = scalar_select %p28, %s30, %s21
      %p32 = scmp.ge.s32.totalorder %s31, 2
      %s33 = scalar_select %p32, 0, %s31
      %s34 = ssub.s32 %s21, %s33
      %p35 = scmp.eq.s32.totalorder %s34, 0
      %s37 = sadd.s32 %s36, 1
      %s38 = scalar_select %p35, %s36, %s37
      %p41 = pneg %p35
      %p42 = scmp.eq.s32.totalorder %s14, 3
      %p43 = por %p41, %p42
      %p44 = scmp.ne.s32.totalorder %s36, %s39
      %p45 = scmp.eq.s32.totalorder %s14, 0
      %p46 = por %p44, %p45
      %p47 = scmp.ne.s32.totalorder %s36, %s39
      %p48 = scmp.eq.s32.totalorder %s19, 3
      %p49 = por %p47, %p48
      %p50 = scmp.ne.s32.totalorder %s39, %s40
      %p51 = scmp.eq.s32.totalorder %s19, 0
      %p52 = por %p50, %p51
      %p53 = scmp.ne.s32.totalorder %s39, %s40
      %p54 = scmp.eq.s32.totalorder %s20, 3
      %p55 = por %p53, %p54
      %p57 = scmp.ne.s32.totalorder %s40, %s56
      %p58 = scmp.eq.s32.totalorder %s20, 0
      %p59 = por %p57, %p58
      %s60 = ssub.s32 %s21, %s33
      %p61 = scmp.eq.s32.totalorder %s60, 0
      %s63 = sadd.s32 %s62, 1
      %s64 = scalar_select %p61, %s62, %s63
      %p67 = pneg %p61
      %p68 = scmp.eq.s32.totalorder %s14, 3
      %p69 = por %p67, %p68
      %p70 = scmp.ne.s32.totalorder %s62, %s65
      %p71 = scmp.eq.s32.totalorder %s14, 0
      %p72 = por %p70, %p71
      %p73 = scmp.ne.s32.totalorder %s62, %s65
      %p74 = scmp.eq.s32.totalorder %s19, 3
      %p75 = por %p73, %p74
      %p76 = scmp.ne.s32.totalorder %s65, %s66
      %p77 = scmp.eq.s32.totalorder %s19, 0
      %p78 = por %p76, %p77
      %p79 = scmp.ne.s32.totalorder %s65, %s66
      %p80 = scmp.eq.s32.totalorder %s20, 3
      %p81 = por %p79, %p80
      %p83 = scmp.ne.s32.totalorder %s66, %s82
      %p84 = scmp.eq.s32.totalorder %s20, 0
      %p85 = por %p83, %p84
      %s86 = ssub.s32 %s22, %s29
      %p87 = scmp.eq.s32.totalorder %s86, 0
      %s89 = sadd.s32 %s88, 1
      %s90 = scalar_select %p87, %s88, %s89
      %p93 = pneg %p87
      %p94 = scmp.eq.s32.totalorder %s14, 3
      %p95 = por %p93, %p94
      %p96 = scmp.ne.s32.totalorder %s88, %s91
      %p97 = scmp.eq.s32.totalorder %s14, 0
      %p98 = por %p96, %p97
      %p99 = scmp.ne.s32.totalorder %s88, %s91
      %p100 = scmp.eq.s32.totalorder %s19, 3
      %p101 = por %p99, %p100
      %p102 = scmp.ne.s32.totalorder %s91, %s92
      %p103 = scmp.eq.s32.totalorder %s19, 0
      %p104 = por %p102, %p103
      %p105 = scmp.ne.s32.totalorder %s91, %s92
      %p106 = scmp.eq.s32.totalorder %s20, 3
      %p107 = por %p105, %p106
      %p109 = scmp.ne.s32.totalorder %s92, %s108
      %p110 = scmp.eq.s32.totalorder %s20, 0
      %p111 = por %p109, %p110
      %s112 = ssub.s32 %s22, %s29
      %p113 = scmp.eq.s32.totalorder %s112, 0
      %s115 = sadd.s32 %s114, 1
      %s116 = scalar_select %p113, %s114, %s115
      %p119 = pneg %p113
      %p120 = scmp.eq.s32.totalorder %s14, 3
      %p121 = por %p119, %p120
      %p122 = scmp.ne.s32.totalorder %s114, %s117
      %p123 = scmp.eq.s32.totalorder %s14, 0
      %p124 = por %p122, %p123
      %p125 = scmp.ne.s32.totalorder %s114, %s117
      %p126 = scmp.eq.s32.totalorder %s19, 3
      %p127 = por %p125, %p126
      %p128 = scmp.ne.s32.totalorder %s117, %s118
      %p129 = scmp.eq.s32.totalorder %s19, 0
      %p130 = por %p128, %p129
      %p131 = scmp.ne.s32.totalorder %s117, %s118
      %p132 = scmp.eq.s32.totalorder %s20, 3
      %p133 = por %p131, %p132
      %p135 = scmp.ne.s32.totalorder %s118, %s134
      %p136 = scmp.eq.s32.totalorder %s20, 0
      %p137 = por %p135, %p136
      %s138 = ssub.s32 %s22, %s29
      %p139 = scmp.eq.s32.totalorder %s138, 0
      %s141 = sadd.s32 %s140, 1
      %s142 = scalar_select %p139, %s140, %s141
      %p145 = pneg %p139
      %p146 = scmp.eq.s32.totalorder %s14, 3
      %p147 = por %p145, %p146
      %p148 = scmp.ne.s32.totalorder %s140, %s143
      %p149 = scmp.eq.s32.totalorder %s14, 0
      %p150 = por %p148, %p149
      %p151 = scmp.ne.s32.totalorder %s140, %s143
      %p152 = scmp.eq.s32.totalorder %s19, 3
      %p153 = por %p151, %p152
      %p154 = scmp.ne.s32.totalorder %s143, %s144
      %p155 = scmp.eq.s32.totalorder %s19, 0
      %p156 = por %p154, %p155
      %p157 = scmp.ne.s32.totalorder %s143, %s144
      %p158 = scmp.eq.s32.totalorder %s20, 3
      %p159 = por %p157, %p158
      %p161 = scmp.ne.s32.totalorder %s144, %s160
      %p162 = scmp.eq.s32.totalorder %s20, 0
      %p163 = por %p161, %p162
      %s164 = ssub.s32 %s22, %s29
      %p165 = scmp.eq.s32.totalorder %s164, 0
      %s167 = sadd.s32 %s166, 1
      %s168 = scalar_select %p165, %s166, %s167
      %p171 = pneg %p165
      %p172 = scmp.eq.s32.totalorder %s14, 3
      %p173 = por %p171, %p172
      %p174 = scmp.ne.s32.totalorder %s166, %s169
      %p175 = scmp.eq.s32.totalorder %s14, 0
      %p176 = por %p174, %p175
      %p177 = scmp.ne.s32.totalorder %s166, %s169
      %p178 = scmp.eq.s32.totalorder %s19, 3
      %p179 = por %p177, %p178
      %p180 = scmp.ne.s32.totalorder %s169, %s170
      %p181 = scmp.eq.s32.totalorder %s19, 0
      %p182 = por %p180, %p181
      %p183 = scmp.ne.s32.totalorder %s169, %s170
      %p184 = scmp.eq.s32.totalorder %s20, 3
      %p185 = por %p183, %p184
      %p187 = scmp.ne.s32.totalorder %s170, %s186
      %p188 = scmp.eq.s32.totalorder %s20, 0
      %p189 = por %p187, %p188
      %s190 = ssub.s32 %s21, %s33
      %s191 = ssub.s32 %s22, %s29
      %s192 = sor.u32 %s190, %s191
      %p193 = scmp.eq.s32.totalorder %s192, 0
      %s195 = sadd.s32 %s194, 1
      %s196 = scalar_select %p193, %s194, %s195
      %p199 = pneg %p193
      %p200 = scmp.eq.s32.totalorder %s14, 3
      %p201 = por %p199, %p200
      %p202 = scmp.ne.s32.totalorder %s194, %s197
      %p203 = scmp.eq.s32.totalorder %s14, 0
      %p204 = por %p202, %p203
      %p205 = scmp.ne.s32.totalorder %s194, %s197
      %p206 = scmp.eq.s32.totalorder %s19, 3
      %p207 = por %p205, %p206
      %p208 = scmp.ne.s32.totalorder %s197, %s198
      %p209 = scmp.eq.s32.totalorder %s19, 0
      %p210 = por %p208, %p209
      %p211 = scmp.ne.s32.totalorder %s197, %s198
      %p212 = scmp.eq.s32.totalorder %s20, 3
      %p213 = por %p211, %p212
      %p215 = scmp.ne.s32.totalorder %s198, %s214
      %p216 = scmp.eq.s32.totalorder %s20, 0
      %p217 = por %p215, %p216
      %s218 = ssub.s32 %s21, %s33
      %p219 = scmp.eq.s32.totalorder %s218, 0
      %s221 = sadd.s32 %s220, 1
      %s222 = scalar_select %p219, %s220, %s221
      %p225 = pneg %p219
      %p226 = scmp.eq.s32.totalorder %s14, 3
      %p227 = por %p225, %p226
      %p228 = scmp.ne.s32.totalorder %s220, %s223
      %p229 = scmp.eq.s32.totalorder %s14, 0
      %p230 = por %p228, %p229
      %p231 = scmp.ne.s32.totalorder %s220, %s223
      %p232 = scmp.eq.s32.totalorder %s19, 3
      %p233 = por %p231, %p232
      %p234 = scmp.ne.s32.totalorder %s223, %s224
      %p235 = scmp.eq.s32.totalorder %s19, 0
      %p236 = por %p234, %p235
      %p237 = scmp.ne.s32.totalorder %s223, %s224
      %p238 = scmp.eq.s32.totalorder %s20, 3
      %p239 = por %p237, %p238
      %p241 = scmp.ne.s32.totalorder %s224, %s240
      %p242 = scmp.eq.s32.totalorder %s20, 0
      %p243 = por %p241, %p242
      %p244 = scmp.le.s32.totalorder 1, %s14
      %p245 = scmp.lt.s32.totalorder %s14, 5
      %p246 = pnand %p244, %p245
      %p247 = pneg %p246
      // Predicated region
      $region9: #{meva_forward.7} parent=5 // pred_check
        _
      $region10: #{meva_forward.7} parent=5 // pred_check_branch
        %249 = sbr.rel (%p246) target = $region12
      $region11: #{meva_forward.7} parent=5 // pred_region
        %s250 = ssub.s32 %s14, 1
      $region12: #{meva_forward.7} parent=5 // pred_fallthru
        _
      %p251 = scmp.lt.s32.totalorder %s14, 4
      // Predicated region
      $region13: #{meva_forward.7} parent=5 // pred_check
        %p252 = pneg %p251
      $region14: #{meva_forward.7} parent=5 // pred_check_branch
        %254 = sbr.rel (%p252) target = $region16
      $region15: #{meva_forward.7} parent=5 // pred_region
        // Predicated region
        $region17: #{meva_forward.7} parent=15 // pred_check
          %p255 = pneg %p46
        $region18: #{meva_forward.7} parent=15 // pred_check_branch
          %257 = sbr.rel (%p255) target = $region20
        $region19: #{meva_forward.7} parent=15 // pred_region
          %p258 = scmp.lt.s32.totalorder %s21, 1
          %s259 = scalar_select %p258, %s21, 1
          %s260 = smul.addr %s259, 2
          %s261 = smul.addr %s260, 8
          %s262 = scalar_lea.vmem %s0, %s261
        $region20: #{meva_forward.7} parent=15 // pred_fallthru
          _
        // Predicated region
        $region21: #{meva_forward.7} parent=15 // pred_check
          %p263 = pneg %p72
        $region22: #{meva_forward.7} parent=15 // pred_check_branch
          %265 = sbr.rel (%p263) target = $region24
        $region23: #{meva_forward.7} parent=15 // pred_region
          %p266 = scmp.lt.s32.totalorder %s21, 1
          %s267 = scalar_select %p266, %s21, 1
          %s268 = smul.addr %s267, 3
          %s269 = smul.addr %s268, 8
          %s270 = scalar_lea.vmem %s1, %s269
        $region24: #{meva_forward.7} parent=15 // pred_fallthru
          _
        // Predicated region
        $region25: #{meva_forward.7} parent=15 // pred_check
          %p271 = pneg %p98
        $region26: #{meva_forward.7} parent=15 // pred_check_branch
          %273 = sbr.rel (%p271) target = $region28
        $region27: #{meva_forward.7} parent=15 // pred_region
          %p274 = scmp.lt.s32.totalorder %s22, 1
          %s275 = scalar_select %p274, %s22, 1
          %s276 = scalar_lea.vmem %s2, %s275
        $region28: #{meva_forward.7} parent=15 // pred_fallthru
          _
        // Predicated region
        $region29: #{meva_forward.7} parent=15 // pred_check
          %p277 = pneg %p124
        $region30: #{meva_forward.7} parent=15 // pred_check_branch
          %279 = sbr.rel (%p277) target = $region32
        $region31: #{meva_forward.7} parent=15 // pred_region
          %s280 = sand.u32 %s114, 1
          %s281 = sand.u32 %s114, 1
          %s282 = smul.addr %s281, 128
          %s283 = scalar_lea.vmem [#allocation2], %s282
          %s284 = smul.addr %s22, 4
          %s285 = scalar_lea.vmem %s3, %s284
          // Predicated region
          $region33: #{meva_forward.7} parent=31 // pred_check
            _
          $region34: #{meva_forward.7} parent=31 // pred_check_branch
            %287 = sbr.rel (0) target = $region36
          $region35: #{meva_forward.7} parent=31 // pred_region
            // Predicated region
            $region37: #{meva_forward.7} parent=35 // pred_check
              _
            $region38: #{meva_forward.7} parent=35 // pred_check_branch
              %289 = sbr.rel target = $region40
            $region39: #{meva_forward.7} parent=35 // pred_region
              // Predicated region
              $region52: #{meva_forward.7} parent=39 // pred_check
                _
              $region53: #{meva_forward.7} parent=39 // pred_check_branch
                %366 = sbr.rel (0) target = $region55
              $region54: #{meva_forward.7} parent=39 // pred_region
                loop: start=0, step=1, limit=1
                $region56: #{meva_forward.7} parent=54 // loop_pre_header
                  _
                $region57: #{meva_forward.7} parent=54 // loop_header
                  %s368 = sphi 0, %s372
                  %p369 = scmp.ge.s32.totalorder %s368, 1
                  %s373 = sphi %s285, %s285
                  %s374 = sphi %s283, %s283
                $region58: #{meva_forward.7} parent=54 // loop_header_branch
                  %371 = sbr.rel (%p369) target = $region62
                $region59: #{meva_forward.7} parent=54 // loop_body
                  _
                $region60: #{meva_forward.7} parent=54 // loop_footer
                  %s372 = sadd.s32 1, %s368
                $region61: #{meva_forward.7} parent=54 // loop_footer_branch
                  %367 = sbr.rel target = $region57
                $region62: #{meva_forward.7} parent=54 // loop_exit
                  _
                loop: start=0, step=1, limit=1
                $region63: #{meva_forward.7} parent=54 // loop_pre_header
                  _
                $region64: #{meva_forward.7} parent=54 // loop_header
                  %s377 = sphi 0, %s381
                  %p378 = scmp.ge.s32.totalorder %s377, 1
                  %s382 = sphi %s285, %s285
                  %s383 = sphi %s283, %s283
                $region65: #{meva_forward.7} parent=54 // loop_header_branch
                  %380 = sbr.rel (%p378) target = $region69
                $region66: #{meva_forward.7} parent=54 // loop_body
                  %v384 = vld [vmem:[%s382] sm:$0xf]
                  %385 = vst [vmem:[%s383] sm:$0xf] %v384
                  %v386 = vld [vmem:[%s382 + $0x8] sm:$0xf]
                  %387 = vst [vmem:[%s383 + $0x4] sm:$0xf] %v386
                  %v388 = vld [vmem:[%s382 + $0x10] sm:$0xf]
                  %389 = vst [vmem:[%s383 + $0x8] sm:$0xf] %v388
                  %v390 = vld [vmem:[%s382 + $0x18] sm:$0xf]
                  %391 = vst [vmem:[%s383 + $0xc] sm:$0xf] %v390
                  %v392 = vld [vmem:[%s382 + $0x20] sm:$0xf]
                  %393 = vst [vmem:[%s383 + $0x10] sm:$0xf] %v392
                  %v394 = vld [vmem:[%s382 + $0x28] sm:$0xf]
                  %395 = vst [vmem:[%s383 + $0x14] sm:$0xf] %v394
                  %v396 = vld [vmem:[%s382 + $0x30] sm:$0xf]
                  %397 = vst [vmem:[%s383 + $0x18] sm:$0xf] %v396
                  %v398 = vld [vmem:[%s382 + $0x38] sm:$0xf]
                  %399 = vst [vmem:[%s383 + $0x1c] sm:$0xf] %v398
                  %v400 = vld [vmem:[%s382 + $0x40] sm:$0xf]
                  %401 = vst [vmem:[%s383 + $0x20] sm:$0xf] %v400
                  %v402 = vld [vmem:[%s382 + $0x48] sm:$0xf]
                  %403 = vst [vmem:[%s383 + $0x24] sm:$0xf] %v402
                  %v404 = vld [vmem:[%s382 + $0x50] sm:$0xf]
                  %405 = vst [vmem:[%s383 + $0x28] sm:$0xf] %v404
                  %v406 = vld [vmem:[%s382 + $0x58] sm:$0xf]
                  %407 = vst [vmem:[%s383 + $0x2c] sm:$0xf] %v406
                  %v408 = vld [vmem:[%s382 + $0x60] sm:$0xf]
                  %409 = vst [vmem:[%s383 + $0x30] sm:$0xf] %v408
                  %v410 = vld [vmem:[%s382 + $0x68] sm:$0xf]
                  %411 = vst [vmem:[%s383 + $0x34] sm:$0xf] %v410
                  %v412 = vld [vmem:[%s382 + $0x70] sm:$0xf]
                  %413 = vst [vmem:[%s383 + $0x38] sm:$0xf] %v412
                  %v414 = vld [vmem:[%s382 + $0x78] sm:$0xf]
                  %415 = vst [vmem:[%s383 + $0x3c] sm:$0xf] %v414
                  %v416 = vld [vmem:[%s382 + $0x80] sm:$0xf]
                  %417 = vst [vmem:[%s383 + $0x40] sm:$0xf] %v416
                  %v418 = vld [vmem:[%s382 + $0x88] sm:$0xf]
                  %419 = vst [vmem:[%s383 + $0x44] sm:$0xf] %v418
                  %v420 = vld [vmem:[%s382 + $0x90] sm:$0xf]
                  %421 = vst [vmem:[%s383 + $0x48] sm:$0xf] %v420
                  %v422 = vld [vmem:[%s382 + $0x98] sm:$0xf]
                  %423 = vst [vmem:[%s383 + $0x4c] sm:$0xf] %v422
                  %v424 = vld [vmem:[%s382 + $0xa0] sm:$0xf]
                  %425 = vst [vmem:[%s383 + $0x50] sm:$0xf] %v424
                  %v426 = vld [vmem:[%s382 + $0xa8] sm:$0xf]
                  %427 = vst [vmem:[%s383 + $0x54] sm:$0xf] %v426
                  %v428 = vld [vmem:[%s382 + $0xb0] sm:$0xf]
                  %429 = vst [vmem:[%s383 + $0x58] sm:$0xf] %v428
                  %v430 = vld [vmem:[%s382 + $0xb8] sm:$0xf]
                  %431 = vst [vmem:[%s383 + $0x5c] sm:$0xf] %v430
                  %v432 = vld [vmem:[%s382 + $0xc0] sm:$0xf]
                  %433 = vst [vmem:[%s383 + $0x60] sm:$0xf] %v432
                  %v434 = vld [vmem:[%s382 + $0xc8] sm:$0xf]
                  %435 = vst [vmem:[%s383 + $0x64] sm:$0xf] %v434
                  %v436 = vld [vmem:[%s382 + $0xd0] sm:$0xf]
                  %437 = vst [vmem:[%s383 + $0x68] sm:$0xf] %v436
                  %v438 = vld [vmem:[%s382 + $0xd8] sm:$0xf]
                  %439 = vst [vmem:[%s383 + $0x6c] sm:$0xf] %v438
                  %v440 = vld [vmem:[%s382 + $0xe0] sm:$0xf]
                  %441 = vst [vmem:[%s383 + $0x70] sm:$0xf] %v440
                  %v442 = vld [vmem:[%s382 + $0xe8] sm:$0xf]
                  %443 = vst [vmem:[%s383 + $0x74] sm:$0xf] %v442
                  %v444 = vld [vmem:[%s382 + $0xf0] sm:$0xf]
                  %445 = vst [vmem:[%s383 + $0x78] sm:$0xf] %v444
                  %v446 = vld [vmem:[%s382 + $0xf8] sm:$0xf]
                  %447 = vst [vmem:[%s383 + $0x7c] sm:$0xf] %v446
                $region67: #{meva_forward.7} parent=54 // loop_footer
                  %s381 = sadd.s32 1, %s377
                $region68: #{meva_forward.7} parent=54 // loop_footer_branch
                  %376 = sbr.rel target = $region64
                $region69: #{meva_forward.7} parent=54 // loop_exit
                  _
              $region55: #{meva_forward.7} parent=39 // pred_fallthru
                _
            $region40: #{meva_forward.7} parent=35 // pred_fallthru
              _
            // Predicated region
            $region41: #{meva_forward.7} parent=35 // pred_check
              _
            $region42: #{meva_forward.7} parent=35 // pred_check_branch
              %291 = sbr.rel (0) target = $region44
            $region43: #{meva_forward.7} parent=35 // pred_region
              loop: start=0, step=1, limit=1
              $region45: #{meva_forward.7} parent=43 // loop_pre_header
                _
              $region46: #{meva_forward.7} parent=43 // loop_header
                %s294 = sphi 0, %s298
                %p295 = scmp.ge.s32.totalorder %s294, 1
                %s299 = sphi %s285, %s285
                %s300 = sphi %s283, %s283
              $region47: #{meva_forward.7} parent=43 // loop_header_branch
                %297 = sbr.rel (%p295) target = $region51
              $region48: #{meva_forward.7} parent=43 // loop_body
                %v301 = vld [vmem:[%s299] sm:$0xf]
                %302 = vst [vmem:[%s300] sm:$0xf] %v301
                %v303 = vld [vmem:[%s299 + $0x8] sm:$0xf]
                %304 = vst [vmem:[%s300 + $0x4] sm:$0xf] %v303
                %v305 = vld [vmem:[%s299 + $0x10] sm:$0xf]
                %306 = vst [vmem:[%s300 + $0x8] sm:$0xf] %v305
                %v307 = vld [vmem:[%s299 + $0x18] sm:$0xf]
                %308 = vst [vmem:[%s300 + $0xc] sm:$0xf] %v307
                %v309 = vld [vmem:[%s299 + $0x20] sm:$0xf]
                %310 = vst [vmem:[%s300 + $0x10] sm:$0xf] %v309
                %v311 = vld [vmem:[%s299 + $0x28] sm:$0xf]
                %312 = vst [vmem:[%s300 + $0x14] sm:$0xf] %v311
                %v313 = vld [vmem:[%s299 + $0x30] sm:$0xf]
                %314 = vst [vmem:[%s300 + $0x18] sm:$0xf] %v313
                %v315 = vld [vmem:[%s299 + $0x38] sm:$0xf]
                %316 = vst [vmem:[%s300 + $0x1c] sm:$0xf] %v315
                %v317 = vld [vmem:[%s299 + $0x40] sm:$0xf]
                %318 = vst [vmem:[%s300 + $0x20] sm:$0xf] %v317
                %v319 = vld [vmem:[%s299 + $0x48] sm:$0xf]
                %320 = vst [vmem:[%s300 + $0x24] sm:$0xf] %v319
                %v321 = vld [vmem:[%s299 + $0x50] sm:$0xf]
                %322 = vst [vmem:[%s300 + $0x28] sm:$0xf] %v321
                %v323 = vld [vmem:[%s299 + $0x58] sm:$0xf]
                %324 = vst [vmem:[%s300 + $0x2c] sm:$0xf] %v323
                %v325 = vld [vmem:[%s299 + $0x60] sm:$0xf]
                %326 = vst [vmem:[%s300 + $0x30] sm:$0xf] %v325
                %v327 = vld [vmem:[%s299 + $0x68] sm:$0xf]
                %328 = vst [vmem:[%s300 + $0x34] sm:$0xf] %v327
                %v329 = vld [vmem:[%s299 + $0x70] sm:$0xf]
                %330 = vst [vmem:[%s300 + $0x38] sm:$0xf] %v329
                %v331 = vld [vmem:[%s299 + $0x78] sm:$0xf]
                %332 = vst [vmem:[%s300 + $0x3c] sm:$0xf] %v331
                %v333 = vld [vmem:[%s299 + $0x80] sm:$0xf]
                %334 = vst [vmem:[%s300 + $0x40] sm:$0xf] %v333
                %v335 = vld [vmem:[%s299 + $0x88] sm:$0xf]
                %336 = vst [vmem:[%s300 + $0x44] sm:$0xf] %v335
                %v337 = vld [vmem:[%s299 + $0x90] sm:$0xf]
                %338 = vst [vmem:[%s300 + $0x48] sm:$0xf] %v337
                %v339 = vld [vmem:[%s299 + $0x98] sm:$0xf]
                %340 = vst [vmem:[%s300 + $0x4c] sm:$0xf] %v339
                %v341 = vld [vmem:[%s299 + $0xa0] sm:$0xf]
                %342 = vst [vmem:[%s300 + $0x50] sm:$0xf] %v341
                %v343 = vld [vmem:[%s299 + $0xa8] sm:$0xf]
                %344 = vst [vmem:[%s300 + $0x54] sm:$0xf] %v343
                %v345 = vld [vmem:[%s299 + $0xb0] sm:$0xf]
                %346 = vst [vmem:[%s300 + $0x58] sm:$0xf] %v345
                %v347 = vld [vmem:[%s299 + $0xb8] sm:$0xf]
                %348 = vst [vmem:[%s300 + $0x5c] sm:$0xf] %v347
                %v349 = vld [vmem:[%s299 + $0xc0] sm:$0xf]
                %350 = vst [vmem:[%s300 + $0x60] sm:$0xf] %v349
                %v351 = vld [vmem:[%s299 + $0xc8] sm:$0xf]
                %352 = vst [vmem:[%s300 + $0x64] sm:$0xf] %v351
                %v353 = vld [vmem:[%s299 + $0xd0] sm:$0xf]
                %354 = vst [vmem:[%s300 + $0x68] sm:$0xf] %v353
                %v355 = vld [vmem:[%s299 + $0xd8] sm:$0xf]
                %356 = vst [vmem:[%s300 + $0x6c] sm:$0xf] %v355
                %v357 = vld [vmem:[%s299 + $0xe0] sm:$0xf]
                %358 = vst [vmem:[%s300 + $0x70] sm:$0xf] %v357
                %v359 = vld [vmem:[%s299 + $0xe8] sm:$0xf]
                %360 = vst [vmem:[%s300 + $0x74] sm:$0xf] %v359
                %v361 = vld [vmem:[%s299 + $0xf0] sm:$0xf]
                %362 = vst [vmem:[%s300 + $0x78] sm:$0xf] %v361
                %v363 = vld [vmem:[%s299 + $0xf8] sm:$0xf]
                %364 = vst [vmem:[%s300 + $0x7c] sm:$0xf] %v363
              $region49: #{meva_forward.7} parent=43 // loop_footer
                %s298 = sadd.s32 1, %s294
              $region50: #{meva_forward.7} parent=43 // loop_footer_branch
                %293 = sbr.rel target = $region46
              $region51: #{meva_forward.7} parent=43 // loop_exit
                _
            $region44: #{meva_forward.7} parent=35 // pred_fallthru
              _
          $region36: #{meva_forward.7} parent=31 // pred_fallthru
            _
          %448 = vnop
        $region32: #{meva_forward.7} parent=15 // pred_fallthru
          _
        // Predicated region
        $region70: #{meva_forward.7} parent=15 // pred_check
          %p449 = pneg %p150
        $region71: #{meva_forward.7} parent=15 // pred_check_branch
          %451 = sbr.rel (%p449) target = $region73
        $region72: #{meva_forward.7} parent=15 // pred_region
          %s452 = sand.u32 %s140, 1
          %s453 = sand.u32 %s140, 1
          %s454 = smul.addr %s453, 144
          %s455 = scalar_lea.vmem [#allocation3], %s454
          %s456 = smul.addr %s22, 4
          %s457 = scalar_lea.vmem %s4, %s456
          // Predicated region
          $region74: #{meva_forward.7} parent=72 // pred_check
            _
          $region75: #{meva_forward.7} parent=72 // pred_check_branch
            %459 = sbr.rel (0) target = $region77
          $region76: #{meva_forward.7} parent=72 // pred_region
            // Predicated region
            $region78: #{meva_forward.7} parent=76 // pred_check
              _
            $region79: #{meva_forward.7} parent=76 // pred_check_branch
              %461 = sbr.rel target = $region81
            $region80: #{meva_forward.7} parent=76 // pred_region
              // Predicated region
              $region93: #{meva_forward.7} parent=80 // pred_check
                _
              $region94: #{meva_forward.7} parent=80 // pred_check_branch
                %546 = sbr.rel (0) target = $region96
              $region95: #{meva_forward.7} parent=80 // pred_region
                loop: start=0, step=1, limit=1
                $region97: #{meva_forward.7} parent=95 // loop_pre_header
                  _
                $region98: #{meva_forward.7} parent=95 // loop_header
                  %s548 = sphi 0, %s552
                  %p549 = scmp.ge.s32.totalorder %s548, 1
                  %s553 = sphi %s457, %s457
                  %s554 = sphi %s455, %s455
                $region99: #{meva_forward.7} parent=95 // loop_header_branch
                  %551 = sbr.rel (%p549) target = $region103
                $region100: #{meva_forward.7} parent=95 // loop_body
                  _
                $region101: #{meva_forward.7} parent=95 // loop_footer
                  %s552 = sadd.s32 1, %s548
                $region102: #{meva_forward.7} parent=95 // loop_footer_branch
                  %547 = sbr.rel target = $region98
                $region103: #{meva_forward.7} parent=95 // loop_exit
                  _
                loop: start=0, step=1, limit=1
                $region104: #{meva_forward.7} parent=95 // loop_pre_header
                  _
                $region105: #{meva_forward.7} parent=95 // loop_header
                  %s557 = sphi 0, %s561
                  %p558 = scmp.ge.s32.totalorder %s557, 1
                  %s562 = sphi %s457, %s457
                  %s563 = sphi %s455, %s455
                $region106: #{meva_forward.7} parent=95 // loop_header_branch
                  %560 = sbr.rel (%p558) target = $region110
                $region107: #{meva_forward.7} parent=95 // loop_body
                  %v564 = vld [vmem:[%s562] sm:$0xf]
                  %565 = vst [vmem:[%s563] sm:$0xf] %v564
                  %v566 = vld [vmem:[%s562 + $0x8] sm:$0xf]
                  %567 = vst [vmem:[%s563 + $0x4] sm:$0xf] %v566
                  %v568 = vld [vmem:[%s562 + $0x10] sm:$0xf]
                  %569 = vst [vmem:[%s563 + $0x8] sm:$0xf] %v568
                  %v570 = vld [vmem:[%s562 + $0x18] sm:$0xf]
                  %571 = vst [vmem:[%s563 + $0xc] sm:$0xf] %v570
                  %v572 = vld [vmem:[%s562 + $0x20] sm:$0xf]
                  %573 = vst [vmem:[%s563 + $0x10] sm:$0xf] %v572
                  %v574 = vld [vmem:[%s562 + $0x28] sm:$0xf]
                  %575 = vst [vmem:[%s563 + $0x14] sm:$0xf] %v574
                  %v576 = vld [vmem:[%s562 + $0x30] sm:$0xf]
                  %577 = vst [vmem:[%s563 + $0x18] sm:$0xf] %v576
                  %v578 = vld [vmem:[%s562 + $0x38] sm:$0xf]
                  %579 = vst [vmem:[%s563 + $0x1c] sm:$0xf] %v578
                  %v580 = vld [vmem:[%s562 + $0x40] sm:$0xf]
                  %581 = vst [vmem:[%s563 + $0x20] sm:$0xf] %v580
                  %v582 = vld [vmem:[%s562 + $0x48] sm:$0xf]
                  %583 = vst [vmem:[%s563 + $0x24] sm:$0xf] %v582
                  %v584 = vld [vmem:[%s562 + $0x50] sm:$0xf]
                  %585 = vst [vmem:[%s563 + $0x28] sm:$0xf] %v584
                  %v586 = vld [vmem:[%s562 + $0x58] sm:$0xf]
                  %587 = vst [vmem:[%s563 + $0x2c] sm:$0xf] %v586
                  %v588 = vld [vmem:[%s562 + $0x60] sm:$0xf]
                  %589 = vst [vmem:[%s563 + $0x30] sm:$0xf] %v588
                  %v590 = vld [vmem:[%s562 + $0x68] sm:$0xf]
                  %591 = vst [vmem:[%s563 + $0x34] sm:$0xf] %v590
                  %v592 = vld [vmem:[%s562 + $0x70] sm:$0xf]
                  %593 = vst [vmem:[%s563 + $0x38] sm:$0xf] %v592
                  %v594 = vld [vmem:[%s562 + $0x78] sm:$0xf]
                  %595 = vst [vmem:[%s563 + $0x3c] sm:$0xf] %v594
                  %v596 = vld [vmem:[%s562 + $0x80] sm:$0xf]
                  %597 = vst [vmem:[%s563 + $0x40] sm:$0xf] %v596
                  %v598 = vld [vmem:[%s562 + $0x88] sm:$0xf]
                  %599 = vst [vmem:[%s563 + $0x44] sm:$0xf] %v598
                  %v600 = vld [vmem:[%s562 + $0x90] sm:$0xf]
                  %601 = vst [vmem:[%s563 + $0x48] sm:$0xf] %v600
                  %v602 = vld [vmem:[%s562 + $0x98] sm:$0xf]
                  %603 = vst [vmem:[%s563 + $0x4c] sm:$0xf] %v602
                  %v604 = vld [vmem:[%s562 + $0xa0] sm:$0xf]
                  %605 = vst [vmem:[%s563 + $0x50] sm:$0xf] %v604
                  %v606 = vld [vmem:[%s562 + $0xa8] sm:$0xf]
                  %607 = vst [vmem:[%s563 + $0x54] sm:$0xf] %v606
                  %v608 = vld [vmem:[%s562 + $0xb0] sm:$0xf]
                  %609 = vst [vmem:[%s563 + $0x58] sm:$0xf] %v608
                  %v610 = vld [vmem:[%s562 + $0xb8] sm:$0xf]
                  %611 = vst [vmem:[%s563 + $0x5c] sm:$0xf] %v610
                  %v612 = vld [vmem:[%s562 + $0xc0] sm:$0xf]
                  %613 = vst [vmem:[%s563 + $0x60] sm:$0xf] %v612
                  %v614 = vld [vmem:[%s562 + $0xc8] sm:$0xf]
                  %615 = vst [vmem:[%s563 + $0x64] sm:$0xf] %v614
                  %v616 = vld [vmem:[%s562 + $0xd0] sm:$0xf]
                  %617 = vst [vmem:[%s563 + $0x68] sm:$0xf] %v616
                  %v618 = vld [vmem:[%s562 + $0xd8] sm:$0xf]
                  %619 = vst [vmem:[%s563 + $0x6c] sm:$0xf] %v618
                  %v620 = vld [vmem:[%s562 + $0xe0] sm:$0xf]
                  %621 = vst [vmem:[%s563 + $0x70] sm:$0xf] %v620
                  %v622 = vld [vmem:[%s562 + $0xe8] sm:$0xf]
                  %623 = vst [vmem:[%s563 + $0x74] sm:$0xf] %v622
                  %v624 = vld [vmem:[%s562 + $0xf0] sm:$0xf]
                  %625 = vst [vmem:[%s563 + $0x78] sm:$0xf] %v624
                  %v626 = vld [vmem:[%s562 + $0xf8] sm:$0xf]
                  %627 = vst [vmem:[%s563 + $0x7c] sm:$0xf] %v626
                  %v628 = vld [vmem:[%s562 + $0x100] sm:$0xf]
                  %629 = vst [vmem:[%s563 + $0x80] sm:$0xf] %v628
                  %v630 = vld [vmem:[%s562 + $0x108] sm:$0xf]
                  %631 = vst [vmem:[%s563 + $0x84] sm:$0xf] %v630
                  %v632 = vld [vmem:[%s562 + $0x110] sm:$0xf]
                  %633 = vst [vmem:[%s563 + $0x88] sm:$0xf] %v632
                  %v634 = vld [vmem:[%s562 + $0x118] sm:$0xf]
                  %635 = vst [vmem:[%s563 + $0x8c] sm:$0xf] %v634
                $region108: #{meva_forward.7} parent=95 // loop_footer
                  %s561 = sadd.s32 1, %s557
                $region109: #{meva_forward.7} parent=95 // loop_footer_branch
                  %556 = sbr.rel target = $region105
                $region110: #{meva_forward.7} parent=95 // loop_exit
                  _
              $region96: #{meva_forward.7} parent=80 // pred_fallthru
                _
            $region81: #{meva_forward.7} parent=76 // pred_fallthru
              _
            // Predicated region
            $region82: #{meva_forward.7} parent=76 // pred_check
              _
            $region83: #{meva_forward.7} parent=76 // pred_check_branch
              %463 = sbr.rel (0) target = $region85
            $region84: #{meva_forward.7} parent=76 // pred_region
              loop: start=0, step=1, limit=1
              $region86: #{meva_forward.7} parent=84 // loop_pre_header
                _
              $region87: #{meva_forward.7} parent=84 // loop_header
                %s466 = sphi 0, %s470
                %p467 = scmp.ge.s32.totalorder %s466, 1
                %s471 = sphi %s457, %s457
                %s472 = sphi %s455, %s455
              $region88: #{meva_forward.7} parent=84 // loop_header_branch
                %469 = sbr.rel (%p467) target = $region92
              $region89: #{meva_forward.7} parent=84 // loop_body
                %v473 = vld [vmem:[%s471] sm:$0xf]
                %474 = vst [vmem:[%s472] sm:$0xf] %v473
                %v475 = vld [vmem:[%s471 + $0x8] sm:$0xf]
                %476 = vst [vmem:[%s472 + $0x4] sm:$0xf] %v475
                %v477 = vld [vmem:[%s471 + $0x10] sm:$0xf]
                %478 = vst [vmem:[%s472 + $0x8] sm:$0xf] %v477
                %v479 = vld [vmem:[%s471 + $0x18] sm:$0xf]
                %480 = vst [vmem:[%s472 + $0xc] sm:$0xf] %v479
                %v481 = vld [vmem:[%s471 + $0x20] sm:$0xf]
                %482 = vst [vmem:[%s472 + $0x10] sm:$0xf] %v481
                %v483 = vld [vmem:[%s471 + $0x28] sm:$0xf]
                %484 = vst [vmem:[%s472 + $0x14] sm:$0xf] %v483
                %v485 = vld [vmem:[%s471 + $0x30] sm:$0xf]
                %486 = vst [vmem:[%s472 + $0x18] sm:$0xf] %v485
                %v487 = vld [vmem:[%s471 + $0x38] sm:$0xf]
                %488 = vst [vmem:[%s472 + $0x1c] sm:$0xf] %v487
                %v489 = vld [vmem:[%s471 + $0x40] sm:$0xf]
                %490 = vst [vmem:[%s472 + $0x20] sm:$0xf] %v489
                %v491 = vld [vmem:[%s471 + $0x48] sm:$0xf]
                %492 = vst [vmem:[%s472 + $0x24] sm:$0xf] %v491
                %v493 = vld [vmem:[%s471 + $0x50] sm:$0xf]
                %494 = vst [vmem:[%s472 + $0x28] sm:$0xf] %v493
                %v495 = vld [vmem:[%s471 + $0x58] sm:$0xf]
                %496 = vst [vmem:[%s472 + $0x2c] sm:$0xf] %v495
                %v497 = vld [vmem:[%s471 + $0x60] sm:$0xf]
                %498 = vst [vmem:[%s472 + $0x30] sm:$0xf] %v497
                %v499 = vld [vmem:[%s471 + $0x68] sm:$0xf]
                %500 = vst [vmem:[%s472 + $0x34] sm:$0xf] %v499
                %v501 = vld [vmem:[%s471 + $0x70] sm:$0xf]
                %502 = vst [vmem:[%s472 + $0x38] sm:$0xf] %v501
                %v503 = vld [vmem:[%s471 + $0x78] sm:$0xf]
                %504 = vst [vmem:[%s472 + $0x3c] sm:$0xf] %v503
                %v505 = vld [vmem:[%s471 + $0x80] sm:$0xf]
                %506 = vst [vmem:[%s472 + $0x40] sm:$0xf] %v505
                %v507 = vld [vmem:[%s471 + $0x88] sm:$0xf]
                %508 = vst [vmem:[%s472 + $0x44] sm:$0xf] %v507
                %v509 = vld [vmem:[%s471 + $0x90] sm:$0xf]
                %510 = vst [vmem:[%s472 + $0x48] sm:$0xf] %v509
                %v511 = vld [vmem:[%s471 + $0x98] sm:$0xf]
                %512 = vst [vmem:[%s472 + $0x4c] sm:$0xf] %v511
                %v513 = vld [vmem:[%s471 + $0xa0] sm:$0xf]
                %514 = vst [vmem:[%s472 + $0x50] sm:$0xf] %v513
                %v515 = vld [vmem:[%s471 + $0xa8] sm:$0xf]
                %516 = vst [vmem:[%s472 + $0x54] sm:$0xf] %v515
                %v517 = vld [vmem:[%s471 + $0xb0] sm:$0xf]
                %518 = vst [vmem:[%s472 + $0x58] sm:$0xf] %v517
                %v519 = vld [vmem:[%s471 + $0xb8] sm:$0xf]
                %520 = vst [vmem:[%s472 + $0x5c] sm:$0xf] %v519
                %v521 = vld [vmem:[%s471 + $0xc0] sm:$0xf]
                %522 = vst [vmem:[%s472 + $0x60] sm:$0xf] %v521
                %v523 = vld [vmem:[%s471 + $0xc8] sm:$0xf]
                %524 = vst [vmem:[%s472 + $0x64] sm:$0xf] %v523
                %v525 = vld [vmem:[%s471 + $0xd0] sm:$0xf]
                %526 = vst [vmem:[%s472 + $0x68] sm:$0xf] %v525
                %v527 = vld [vmem:[%s471 + $0xd8] sm:$0xf]
                %528 = vst [vmem:[%s472 + $0x6c] sm:$0xf] %v527
                %v529 = vld [vmem:[%s471 + $0xe0] sm:$0xf]
                %530 = vst [vmem:[%s472 + $0x70] sm:$0xf] %v529
                %v531 = vld [vmem:[%s471 + $0xe8] sm:$0xf]
                %532 = vst [vmem:[%s472 + $0x74] sm:$0xf] %v531
                %v533 = vld [vmem:[%s471 + $0xf0] sm:$0xf]
                %534 = vst [vmem:[%s472 + $0x78] sm:$0xf] %v533
                %v535 = vld [vmem:[%s471 + $0xf8] sm:$0xf]
                %536 = vst [vmem:[%s472 + $0x7c] sm:$0xf] %v535
                %v537 = vld [vmem:[%s471 + $0x100] sm:$0xf]
                %538 = vst [vmem:[%s472 + $0x80] sm:$0xf] %v537
                %v539 = vld [vmem:[%s471 + $0x108] sm:$0xf]
                %540 = vst [vmem:[%s472 + $0x84] sm:$0xf] %v539
                %v541 = vld [vmem:[%s471 + $0x110] sm:$0xf]
                %542 = vst [vmem:[%s472 + $0x88] sm:$0xf] %v541
                %v543 = vld [vmem:[%s471 + $0x118] sm:$0xf]
                %544 = vst [vmem:[%s472 + $0x8c] sm:$0xf] %v543
              $region90: #{meva_forward.7} parent=84 // loop_footer
                %s470 = sadd.s32 1, %s466
              $region91: #{meva_forward.7} parent=84 // loop_footer_branch
                %465 = sbr.rel target = $region87
              $region92: #{meva_forward.7} parent=84 // loop_exit
                _
            $region85: #{meva_forward.7} parent=76 // pred_fallthru
              _
          $region77: #{meva_forward.7} parent=72 // pred_fallthru
            _
          %636 = vnop
        $region73: #{meva_forward.7} parent=15 // pred_fallthru
          _
        // Predicated region
        $region111: #{meva_forward.7} parent=15 // pred_check
          %p637 = pneg %p176
        $region112: #{meva_forward.7} parent=15 // pred_check_branch
          %639 = sbr.rel (%p637) target = $region114
        $region113: #{meva_forward.7} parent=15 // pred_region
          %s640 = smul.u32 16, %s22
          %p641 = scmp.lt.s32.totalorder %s640, 31
          %s642 = scalar_select %p641, %s640, 31
          %s643 = smul.addr %s642, 4
          %s644 = scalar_lea.vmem %s5, %s643
          %s645 = smul.u32 16, %s22
        $region114: #{meva_forward.7} parent=15 // pred_fallthru
          _
      $region16: #{meva_forward.7} parent=5 // pred_fallthru
        _
      %p646 = scmp.le.s32.totalorder 1, %s14
      %p647 = scmp.lt.s32.totalorder %s14, 5
      %p648 = pnand %p646, %p647
      %p649 = pneg %p648
      // Predicated region
      $region115: #{meva_forward.7} parent=5 // pred_check
        _
      $region116: #{meva_forward.7} parent=5 // pred_check_branch
        %651 = sbr.rel (%p648) target = $region118
      $region117: #{meva_forward.7} parent=5 // pred_region
        %s652 = ssub.s32 %s14, 1
        %s653 = sand.u32 %s117, 1
        %s654 = sand.u32 %s117, 1
        %s655 = smul.addr %s654, 128
        %s656 = scalar_lea.vmem [#allocation2], %s655
        // Predicated region
        $region119: #{meva_forward.7} parent=117 // pred_check
          %p657 = pneg %p130
        $region120: #{meva_forward.7} parent=117 // pred_check_branch
          %659 = sbr.rel (%p657) target = $region122
        $region121: #{meva_forward.7} parent=117 // pred_region
          _
        $region122: #{meva_forward.7} parent=117 // pred_fallthru
          _
        %s660 = sand.u32 %s143, 1
        %s661 = sand.u32 %s143, 1
        %s662 = smul.addr %s661, 144
        %s663 = scalar_lea.vmem [#allocation3], %s662
        // Predicated region
        $region123: #{meva_forward.7} parent=117 // pred_check
          %p664 = pneg %p156
        $region124: #{meva_forward.7} parent=117 // pred_check_branch
          %666 = sbr.rel (%p664) target = $region126
        $region125: #{meva_forward.7} parent=117 // pred_region
          _
        $region126: #{meva_forward.7} parent=117 // pred_fallthru
          _
        %p667 = scmp.lt.s32.totalorder %s23, 1
        %s668 = scalar_select %p667, %s23, 1
        %s669 = smul.addr %s668, 2
        %s670 = smul.addr %s669, 8
        %s671 = scalar_lea.vmem %s0, %s670
        %p672 = pneg %p52
        %p673 = pneg %p49
        %p674 = scmp.lt.s32.totalorder %s23, 1
        %s675 = scalar_select %p674, %s23, 1
        %s676 = smul.addr %s675, 3
        %s677 = smul.addr %s676, 8
        %s678 = scalar_lea.vmem %s1, %s677
        %p679 = pneg %p78
        %p680 = pneg %p75
        %p681 = scmp.lt.s32.totalorder %s24, 1
        %s682 = scalar_select %p681, %s24, 1
        %s683 = scalar_lea.vmem %s2, %s682
        %p684 = pneg %p104
        %p685 = pneg %p101
        %s686 = sand.u32 %s117, 1
        %s687 = sand.u32 %s117, 1
        %s688 = smul.addr %s687, 128
        %s689 = scalar_lea.vmem [#allocation2], %s688
        %p690 = pneg %p130
        %p691 = pneg %p127
        %s692 = sand.u32 %s143, 1
        %s693 = sand.u32 %s143, 1
        %s694 = smul.addr %s693, 144
        %s695 = scalar_lea.vmem [#allocation3], %s694
        %p696 = pneg %p156
        %p697 = pneg %p153
        %s698 = smul.u32 16, %s24
        %p699 = scmp.lt.s32.totalorder %s698, 31
        %s700 = scalar_select %p699, %s698, 31
        %s701 = smul.addr %s700, 4
        %s702 = scalar_lea.vmem %s5, %s701
        %p703 = pneg %p182
        %p704 = pneg %p179
        %p705 = pneg %p210
        %p706 = pneg %p207
        %p707 = scmp.lt.s32.totalorder %s23, 1
        %s708 = scalar_select %p707, %s23, 1
        %p709 = scmp.lt.s32.totalorder %s24, 1
        %s710 = scalar_select %p709, %s24, 1
        %s711 = smul.addr %s708, 2
        %s712 = sadd.s32 %s710, %s711
        %s713 = smul.addr %s712, 8
        %s714 = scalar_lea.vmem %s6, %s713
        %p715 = pneg %p236
        %p716 = pneg %p233
        %p717 = scmp.lt.s32.totalorder %s23, 1
        %s718 = scalar_select %p717, %s23, 1
        %s719 = smul.addr %s718, 8
        %s720 = scalar_lea.vmem %s7, %s719
        %p721 = scmp.lt.s32.totalorder %s23, 1
        %s722 = scalar_select %p721, %s23, 1
        %s723 = smul.addr %s722, 2
        %s724 = smul.addr %s723, 8
        %s725 = scalar_lea.vmem %s0, %s724
        %p726 = scmp.lt.s32.totalorder %s23, 1
        %s727 = scalar_select %p726, %s23, 1
        %s728 = smul.addr %s727, 3
        %s729 = smul.addr %s728, 8
        %s730 = scalar_lea.vmem %s1, %s729
        %p731 = scmp.lt.s32.totalorder %s24, 1
        %s732 = scalar_select %p731, %s24, 1
        %s733 = scalar_lea.vmem %s2, %s732
        %s734 = smul.u32 16, %s24
        %p735 = scmp.lt.s32.totalorder %s734, 31
        %s736 = scalar_select %p735, %s734, 31
        %s737 = smul.addr %s736, 4
        %s738 = scalar_lea.vmem %s5, %s737
        %s739 = smul.u32 16, %s24
        %p740 = scmp.lt.s32.totalorder %s23, 1
        %s741 = scalar_select %p740, %s23, 1
        %p742 = scmp.lt.s32.totalorder %s24, 1
        %s743 = scalar_select %p742, %s24, 1
        %s744 = smul.addr %s741, 2
        %s745 = sadd.s32 %s743, %s744
        %s746 = smul.addr %s745, 8
        %s747 = scalar_lea.vmem %s6, %s746
        %p748 = scmp.lt.s32.totalorder %s23, 1
        %s749 = scalar_select %p748, %s23, 1
        %s750 = smul.addr %s749, 8
        %s751 = scalar_lea.vmem %s7, %s750
        %p753 = scmp.eq.s32.totalorder %s24, 0
        // Predicated region
        $region127: #{meva_forward.7} parent=117 // pred_check
          %p754 = pneg %p753
        $region128: #{meva_forward.7} parent=117 // pred_check_branch
          %756 = sbr.rel (%p754) target = $region130
        $region129: #{meva_forward.7} parent=117 // pred_region
          %757 = vst [vmem:[%s751] sm:$0xff] 0.0
        $region130: #{meva_forward.7} parent=117 // pred_fallthru
          _
        %v758 = vld [vmem:[%s725] sm:$0xff]
        %v759 = vld [vmem:[%s725 + $0x8] sm:$0xff]
        %v760 = vpack.c.bf16 %v758, %v758
        %v761 = vpack.c.bf16 %v759, %v759
        %v762 = vld [vmem:[%s656] sm:$0xf]
        %v763 = vld [vmem:[%s656 + $0x4] sm:$0xf]
        %v764 = vld [vmem:[%s656 + $0x8] sm:$0xf]
        %v765 = vld [vmem:[%s656 + $0xc] sm:$0xf]
        %v766 = vld [vmem:[%s656 + $0x10] sm:$0xf]
        %v767 = vld [vmem:[%s656 + $0x14] sm:$0xf]
        %v768 = vld [vmem:[%s656 + $0x18] sm:$0xf]
        %v769 = vld [vmem:[%s656 + $0x1c] sm:$0xf]
        %v770 = vld [vmem:[%s656 + $0x20] sm:$0xf]
        %v771 = vld [vmem:[%s656 + $0x24] sm:$0xf]
        %v772 = vld [vmem:[%s656 + $0x28] sm:$0xf]
        %v773 = vld [vmem:[%s656 + $0x2c] sm:$0xf]
        %v774 = vld [vmem:[%s656 + $0x30] sm:$0xf]
        %v775 = vld [vmem:[%s656 + $0x34] sm:$0xf]
        %v776 = vld [vmem:[%s656 + $0x38] sm:$0xf]
        %v777 = vld [vmem:[%s656 + $0x3c] sm:$0xf]
        %v778 = vld [vmem:[%s656 + $0x40] sm:$0xf]
        %v779 = vld [vmem:[%s656 + $0x44] sm:$0xf]
        %v780 = vld [vmem:[%s656 + $0x48] sm:$0xf]
        %v781 = vld [vmem:[%s656 + $0x4c] sm:$0xf]
        %v782 = vld [vmem:[%s656 + $0x50] sm:$0xf]
        %v783 = vld [vmem:[%s656 + $0x54] sm:$0xf]
        %v784 = vld [vmem:[%s656 + $0x58] sm:$0xf]
        %v785 = vld [vmem:[%s656 + $0x5c] sm:$0xf]
        %v786 = vld [vmem:[%s656 + $0x60] sm:$0xf]
        %v787 = vld [vmem:[%s656 + $0x64] sm:$0xf]
        %v788 = vld [vmem:[%s656 + $0x68] sm:$0xf]
        %v789 = vld [vmem:[%s656 + $0x6c] sm:$0xf]
        %v790 = vld [vmem:[%s656 + $0x70] sm:$0xf]
        %v791 = vld [vmem:[%s656 + $0x74] sm:$0xf]
        %v792 = vld [vmem:[%s656 + $0x78] sm:$0xf]
        %v793 = vld [vmem:[%s656 + $0x7c] sm:$0xf]
        %v794 = vld [vmem:[%s730] sm:$0xff]
        %v795 = vld [vmem:[%s730 + $0x8] sm:$0xff]
        %v796 = vld [vmem:[%s730 + $0x10] sm:$0xff]
        %v797 = vpack.c.bf16 %v794, %v794
        %v798 = vpack.c.bf16 %v795, %v795
        %v799 = vpack.c.bf16 %v796, %v796
        %v800 = vld [vmem:[%s663] sm:$0xf]
        %v801 = vld [vmem:[%s663 + $0x4] sm:$0xf]
        %v802 = vld [vmem:[%s663 + $0x8] sm:$0xf]
        %v803 = vld [vmem:[%s663 + $0xc] sm:$0xf]
        %v804 = vld [vmem:[%s663 + $0x10] sm:$0xf]
        %v805 = vld [vmem:[%s663 + $0x14] sm:$0xf]
        %v806 = vld [vmem:[%s663 + $0x18] sm:$0xf]
        %v807 = vld [vmem:[%s663 + $0x1c] sm:$0xf]
        %v808 = vld [vmem:[%s663 + $0x20] sm:$0xf]
        %v809 = vld [vmem:[%s663 + $0x24] sm:$0xf]
        %v810 = vld [vmem:[%s663 + $0x28] sm:$0xf]
        %v811 = vld [vmem:[%s663 + $0x2c] sm:$0xf]
        %v812 = vld [vmem:[%s663 + $0x30] sm:$0xf]
        %v813 = vld [vmem:[%s663 + $0x34] sm:$0xf]
        %v814 = vld [vmem:[%s663 + $0x38] sm:$0xf]
        %v815 = vld [vmem:[%s663 + $0x3c] sm:$0xf]
        %v816 = vld [vmem:[%s663 + $0x40] sm:$0xf]
        %v817 = vld [vmem:[%s663 + $0x44] sm:$0xf]
        %v818 = vld [vmem:[%s663 + $0x48] sm:$0xf]
        %v819 = vld [vmem:[%s663 + $0x4c] sm:$0xf]
        %v820 = vld [vmem:[%s663 + $0x50] sm:$0xf]
        %v821 = vld [vmem:[%s663 + $0x54] sm:$0xf]
        %v822 = vld [vmem:[%s663 + $0x58] sm:$0xf]
        %v823 = vld [vmem:[%s663 + $0x5c] sm:$0xf]
        %v824 = vld [vmem:[%s663 + $0x60] sm:$0xf]
        %v825 = vld [vmem:[%s663 + $0x64] sm:$0xf]
        %v826 = vld [vmem:[%s663 + $0x68] sm:$0xf]
        %v827 = vld [vmem:[%s663 + $0x6c] sm:$0xf]
        %v828 = vld [vmem:[%s663 + $0x70] sm:$0xf]
        %v829 = vld [vmem:[%s663 + $0x74] sm:$0xf]
        %v830 = vld [vmem:[%s663 + $0x78] sm:$0xf]
        %v831 = vld [vmem:[%s663 + $0x7c] sm:$0xf]
        %v832 = vld [vmem:[%s663 + $0x80] sm:$0xf]
        %v833 = vld [vmem:[%s663 + $0x84] sm:$0xf]
        %v834 = vld [vmem:[%s663 + $0x88] sm:$0xf]
        %v835 = vld [vmem:[%s663 + $0x8c] sm:$0xf]
        %v872 = vunpack.c.l.b16 %v800
        %v873 = vunpack.c.l.b16 %v801
        %v874 = vunpack.c.l.b16 %v802
        %v875 = vunpack.c.l.b16 %v803
        %v876 = vunpack.c.l.b16 %v804
        %v877 = vunpack.c.l.b16 %v805
        %v878 = vunpack.c.l.b16 %v806
        %v879 = vunpack.c.l.b16 %v807
        %v880 = vunpack.c.l.b16 %v808
        %v881 = vunpack.c.l.b16 %v809
        %v882 = vunpack.c.l.b16 %v810
        %v883 = vunpack.c.l.b16 %v811
        %v884 = vunpack.c.l.b16 %v812
        %v885 = vunpack.c.l.b16 %v813
        %v886 = vunpack.c.l.b16 %v814
        %v887 = vunpack.c.l.b16 %v815
        %v888 = vunpack.c.l.b16 %v816
        %v889 = vunpack.c.l.b16 %v817
        %v890 = vunpack.c.l.b16 %v818
        %v891 = vunpack.c.l.b16 %v819
        %v892 = vunpack.c.l.b16 %v820
        %v893 = vunpack.c.l.b16 %v821
        %v894 = vunpack.c.l.b16 %v822
        %v895 = vunpack.c.l.b16 %v823
        %v896 = vunpack.c.l.b16 %v824
        %v897 = vunpack.c.l.b16 %v825
        %v898 = vunpack.c.l.b16 %v826
        %v899 = vunpack.c.l.b16 %v827
        %v900 = vunpack.c.l.b16 %v828
        %v901 = vunpack.c.l.b16 %v829
        %v902 = vunpack.c.l.b16 %v830
        %v903 = vunpack.c.l.b16 %v831
        %v904 = vunpack.c.l.b16 %v832
        %v905 = vunpack.c.l.b16 %v833
        %v906 = vunpack.c.l.b16 %v834
        %v907 = vunpack.c.l.b16 %v835
        %v908 = vpack.c.b16 %v873, %v872
        %v909 = vpack.c.b16 %v875, %v874
        %v910 = vpack.c.b16 %v877, %v876
        %v911 = vpack.c.b16 %v879, %v878
        %v912 = vpack.c.b16 %v881, %v880
        %v913 = vpack.c.b16 %v883, %v882
        %v914 = vpack.c.b16 %v885, %v884
        %v915 = vpack.c.b16 %v887, %v886
        %v916 = vpack.c.b16 %v889, %v888
        %v917 = vpack.c.b16 %v891, %v890
        %v918 = vpack.c.b16 %v893, %v892
        %v919 = vpack.c.b16 %v895, %v894
        %v920 = vpack.c.b16 %v897, %v896
        %v921 = vpack.c.b16 %v899, %v898
        %v922 = vpack.c.b16 %v901, %v900
        %v923 = vpack.c.b16 %v903, %v902
        %v924 = vpack.c.b16 %v905, %v904
        %v925 = vpack.c.b16 %v907, %v906
        %vm944 = vcmask 261120
        %v946 = vsel %vm944, %v799, 0
        %948 = vmatprep.subr.bf16.mxu0 0
        %949 = vmatpush1.bf16.msra.mxu0 %v908
        %950 = vmatprep.subr.bf16.mxu0 0
        %951 = vmatpush1.bf16.msra.mxu0 %v909
        %952 = vmatprep.subr.bf16.mxu0 0
        %953 = vmatpush1.bf16.msra.mxu0 %v910
        %954 = vmatprep.subr.bf16.mxu0 0
        %955 = vmatpush1.bf16.msra.mxu0 %v911
        %956 = vmatprep.subr.bf16.mxu0 0
        %957 = vmatpush1.bf16.msra.mxu0 %v912
        %958 = vmatprep.subr.bf16.mxu0 0
        %959 = vmatpush1.bf16.msra.mxu0 %v913
        %960 = vmatprep.subr.bf16.mxu0 0
        %961 = vmatpush1.bf16.msra.mxu0 %v914
        %962 = vmatprep.subr.bf16.mxu0 0
        %963 = vmatpush1.bf16.msra.mxu0 %v915
        %964 = vmatprep.subr.bf16.mxu0 0
        %965 = vmatpush1.bf16.msra.mxu0 %v916
        %966 = vmatprep.subr.bf16.mxu0 0
        %967 = vmatpush1.bf16.msra.mxu0 %v917
        %968 = vmatprep.subr.bf16.mxu0 0
        %969 = vmatpush1.bf16.msra.mxu0 %v918
        %970 = vmatprep.subr.bf16.mxu0 0
        %971 = vmatpush1.bf16.msra.mxu0 %v919
        %972 = vmatprep.subr.bf16.mxu0 0
        %973 = vmatpush1.bf16.msra.mxu0 %v920
        %974 = vmatprep.subr.bf16.mxu0 0
        %975 = vmatpush1.bf16.msra.mxu0 %v921
        %976 = vmatprep.subr.bf16.mxu0 0
        %977 = vmatpush1.bf16.msra.mxu0 %v922
        %978 = vmatprep.subr.bf16.mxu0 0
        %979 = vmatpush1.bf16.msra.mxu0 %v923
        %980 = vmatprep.mubr.bf16.mxu0 %v798
        %981 = vmatmul.mubr.bf16.gmra.mrb[0].mxu0 %v797
        %v982 = vpop.f32.mrb[0].mxu0
        %v983 = vadd.f32 0.0, %v982
        %v984 = vpop.f32.mrb[0].mxu0
        %v985 = vpop.f32.mrb[0].mxu0
        %v986 = vpop.f32.mrb[0].mxu0
        %987 = vdwg.mxu0
        %988 = vmatprep.subr.bf16.mxu0 0
        %989 = vmatpush1.bf16.msra.mxu0 %v924
        %990 = vmatprep.subr.bf16.mxu0 0
        %991 = vmatpush1.bf16.msra.mxu0 %v925
        %992 = vmatprep.subr.bf16.mxu0 0
        %993 = vmatpush1.bf16.msra.mxu0 0
        %994 = vmatprep.subr.bf16.mxu0 0
        %995 = vmatpush1.bf16.msra.mxu0 0
        %996 = vmatprep.subr.bf16.mxu0 0
        %997 = vmatpush1.bf16.msra.mxu0 0
        %998 = vmatprep.subr.bf16.mxu0 0
        %999 = vmatpush1.bf16.msra.mxu0 0
        %1000 = vmatprep.subr.bf16.mxu0 0
        %1001 = vmatpush1.bf16.msra.mxu0 0
        %1002 = vmatprep.subr.bf16.mxu0 0
        %1003 = vmatpush1.bf16.msra.mxu0 0
        %1004 = vmatprep.subr.bf16.mxu0 0
        %1005 = vmatpush1.bf16.msra.mxu0 0
        %1006 = vmatprep.subr.bf16.mxu0 0
        %1007 = vmatpush1.bf16.msra.mxu0 0
        %1008 = vmatprep.subr.bf16.mxu0 0
        %1009 = vmatpush1.bf16.msra.mxu0 0
        %1010 = vmatprep.subr.bf16.mxu0 0
        %1011 = vmatpush1.bf16.msra.mxu0 0
        %1012 = vmatprep.subr.bf16.mxu0 0
        %1013 = vmatpush1.bf16.msra.mxu0 0
        %1014 = vmatprep.subr.bf16.mxu0 0
        %1015 = vmatpush1.bf16.msra.mxu0 0
        %1016 = vmatprep.subr.bf16.mxu0 0
        %1017 = vmatpush1.bf16.msra.mxu0 0
        %1018 = vmatprep.subr.bf16.mxu0 0
        %1019 = vmatpush1.bf16.msra.mxu0 0
        %1020 = vmatprep.mubr.bf16.mxu0 0
        %1021 = vmatmul.mubr.bf16.gmra.mrb[0].mxu0 %v946
        %v1022 = vpop.f32.mrb[0].mxu0
        %v1023 = vadd.f32 %v983, %v1022
        %v1024 = vpop.f32.mrb[0].mxu0
        %v1025 = vpop.f32.mrb[0].mxu0
        %v1026 = vpop.f32.mrb[0].mxu0
        %1027 = vdwg.mxu0
        %v1060 = vunpack.c.l.b16 %v762
        %v1061 = vunpack.c.l.b16 %v763
        %v1062 = vunpack.c.l.b16 %v764
        %v1063 = vunpack.c.l.b16 %v765
        %v1064 = vunpack.c.l.b16 %v766
        %v1065 = vunpack.c.l.b16 %v767
        %v1066 = vunpack.c.l.b16 %v768
        %v1067 = vunpack.c.l.b16 %v769
        %v1068 = vunpack.c.l.b16 %v770
        %v1069 = vunpack.c.l.b16 %v771
        %v1070 = vunpack.c.l.b16 %v772
        %v1071 = vunpack.c.l.b16 %v773
        %v1072 = vunpack.c.l.b16 %v774
        %v1073 = vunpack.c.l.b16 %v775
        %v1074 = vunpack.c.l.b16 %v776
        %v1075 = vunpack.c.l.b16 %v777
        %v1076 = vunpack.c.l.b16 %v778
        %v1077 = vunpack.c.l.b16 %v779
        %v1078 = vunpack.c.l.b16 %v780
        %v1079 = vunpack.c.l.b16 %v781
        %v1080 = vunpack.c.l.b16 %v782
        %v1081 = vunpack.c.l.b16 %v783
        %v1082 = vunpack.c.l.b16 %v784
        %v1083 = vunpack.c.l.b16 %v785
        %v1084 = vunpack.c.l.b16 %v786
        %v1085 = vunpack.c.l.b16 %v787
        %v1086 = vunpack.c.l.b16 %v788
        %v1087 = vunpack.c.l.b16 %v789
        %v1088 = vunpack.c.l.b16 %v790
        %v1089 = vunpack.c.l.b16 %v791
        %v1090 = vunpack.c.l.b16 %v792
        %v1091 = vunpack.c.l.b16 %v793
        %v1092 = vpack.c.b16 %v1061, %v1060
        %v1093 = vpack.c.b16 %v1063, %v1062
        %v1094 = vpack.c.b16 %v1065, %v1064
        %v1095 = vpack.c.b16 %v1067, %v1066
        %v1096 = vpack.c.b16 %v1069, %v1068
        %v1097 = vpack.c.b16 %v1071, %v1070
        %v1098 = vpack.c.b16 %v1073, %v1072
        %v1099 = vpack.c.b16 %v1075, %v1074
        %v1100 = vpack.c.b16 %v1077, %v1076
        %v1101 = vpack.c.b16 %v1079, %v1078
        %v1102 = vpack.c.b16 %v1081, %v1080
        %v1103 = vpack.c.b16 %v1083, %v1082
        %v1104 = vpack.c.b16 %v1085, %v1084
        %v1105 = vpack.c.b16 %v1087, %v1086
        %v1106 = vpack.c.b16 %v1089, %v1088
        %v1107 = vpack.c.b16 %v1091, %v1090
        %1124 = vmatprep.subr.bf16.mxu0 0
        %1125 = vmatpush1.bf16.msra.mxu0 %v1092
        %1126 = vmatprep.subr.bf16.mxu0 0
        %1127 = vmatpush1.bf16.msra.mxu0 %v1093
        %1128 = vmatprep.subr.bf16.mxu0 0
        %1129 = vmatpush1.bf16.msra.mxu0 %v1094
        %1130 = vmatprep.subr.bf16.mxu0 0
        %1131 = vmatpush1.bf16.msra.mxu0 %v1095
        %1132 = vmatprep.subr.bf16.mxu0 0
        %1133 = vmatpush1.bf16.msra.mxu0 %v1096
        %1134 = vmatprep.subr.bf16.mxu0 0
        %1135 = vmatpush1.bf16.msra.mxu0 %v1097
        %1136 = vmatprep.subr.bf16.mxu0 0
        %1137 = vmatpush1.bf16.msra.mxu0 %v1098
        %1138 = vmatprep.subr.bf16.mxu0 0
        %1139 = vmatpush1.bf16.msra.mxu0 %v1099
        %1140 = vmatprep.subr.bf16.mxu0 0
        %1141 = vmatpush1.bf16.msra.mxu0 %v1100
        %1142 = vmatprep.subr.bf16.mxu0 0
        %1143 = vmatpush1.bf16.msra.mxu0 %v1101
        %1144 = vmatprep.subr.bf16.mxu0 0
        %1145 = vmatpush1.bf16.msra.mxu0 %v1102
        %1146 = vmatprep.subr.bf16.mxu0 0
        %1147 = vmatpush1.bf16.msra.mxu0 %v1103
        %1148 = vmatprep.subr.bf16.mxu0 0
        %1149 = vmatpush1.bf16.msra.mxu0 %v1104
        %1150 = vmatprep.subr.bf16.mxu0 0
        %1151 = vmatpush1.bf16.msra.mxu0 %v1105
        %1152 = vmatprep.subr.bf16.mxu0 0
        %1153 = vmatpush1.bf16.msra.mxu0 %v1106
        %1154 = vmatprep.subr.bf16.mxu0 0
        %1155 = vmatpush1.bf16.msra.mxu0 %v1107
        %1156 = vmatprep.mubr.bf16.mxu0 %v761
        %1157 = vmatmul.mubr.bf16.gmra.mrb[0].mxu0 %v760
        %v1158 = vpop.f32.mrb[0].mxu0
        %v1159 = vadd.f32 %v1023, %v1158
        %v1160 = vpop.f32.mrb[0].mxu0
        %v1161 = vpop.f32.mrb[0].mxu0
        %v1162 = vpop.f32.mrb[0].mxu0
        %1163 = vdwg.mxu0
        %v1164 = vld [vmem:[%s733] sm:$0x1]
        %v1166 = vlaneseq
        %v1167 = vshrl.u32 %v1166, 7
        %v1168 = vsub.s32 0, %v1167
        %v1169 = vrot.slane %v1164, %v1168
        %v1171 = vadd.f32 %v1159, %v1169
        %1172 = vst [vmem:[%s747] sm:$0xff] %v1171
        %v1173 = vld [vmem:[%s751] sm:$0xff]
        %v1174 = vpack.c.bf16 %v1171, %v1171
        %v1175 = vld [vmem:[%s738] sm:$0xf]
        %v1176 = vld [vmem:[%s738 + $0x4] sm:$0xf]
        %v1177 = vld [vmem:[%s738 + $0x8] sm:$0xf]
        %v1178 = vld [vmem:[%s738 + $0xc] sm:$0xf]
        %v1179 = vld [vmem:[%s738 + $0x10] sm:$0xf]
        %v1180 = vld [vmem:[%s738 + $0x14] sm:$0xf]
        %v1181 = vld [vmem:[%s738 + $0x18] sm:$0xf]
        %v1182 = vld [vmem:[%s738 + $0x1c] sm:$0xf]
        %v1183 = vld [vmem:[%s738 + $0x20] sm:$0xf]
        %v1184 = vld [vmem:[%s738 + $0x24] sm:$0xf]
        %v1185 = vld [vmem:[%s738 + $0x28] sm:$0xf]
        %v1186 = vld [vmem:[%s738 + $0x2c] sm:$0xf]
        %v1187 = vld [vmem:[%s738 + $0x30] sm:$0xf]
        %v1188 = vld [vmem:[%s738 + $0x34] sm:$0xf]
        %v1189 = vld [vmem:[%s738 + $0x38] sm:$0xf]
        %v1190 = vld [vmem:[%s738 + $0x3c] sm:$0xf]
        %v1207 = vunpack.c.l.b16 %v1175
        %v1208 = vunpack.c.l.b16 %v1176
        %v1209 = vunpack.c.l.b16 %v1177
        %v1210 = vunpack.c.l.b16 %v1178
        %v1211 = vunpack.c.l.b16 %v1179
        %v1212 = vunpack.c.l.b16 %v1180
        %v1213 = vunpack.c.l.b16 %v1181
        %v1214 = vunpack.c.l.b16 %v1182
        %v1215 = vunpack.c.l.b16 %v1183
        %v1216 = vunpack.c.l.b16 %v1184
        %v1217 = vunpack.c.l.b16 %v1185
        %v1218 = vunpack.c.l.b16 %v1186
        %v1219 = vunpack.c.l.b16 %v1187
        %v1220 = vunpack.c.l.b16 %v1188
        %v1221 = vunpack.c.l.b16 %v1189
        %v1222 = vunpack.c.l.b16 %v1190
        %v1223 = vpack.c.b16 %v1208, %v1207
        %v1224 = vpack.c.b16 %v1210, %v1209
        %v1225 = vpack.c.b16 %v1212, %v1211
        %v1226 = vpack.c.b16 %v1214, %v1213
        %v1227 = vpack.c.b16 %v1216, %v1215
        %v1228 = vpack.c.b16 %v1218, %v1217
        %v1229 = vpack.c.b16 %v1220, %v1219
        %v1230 = vpack.c.b16 %v1222, %v1221
        %1239 = vmatprep.subr.bf16.mxu0 0
        %1240 = vmatpush1.bf16.msra.mxu0 %v1223
        %1241 = vmatprep.subr.bf16.mxu0 0
        %1242 = vmatpush1.bf16.msra.mxu0 %v1224
        %1243 = vmatprep.subr.bf16.mxu0 0
        %1244 = vmatpush1.bf16.msra.mxu0 %v1225
        %1245 = vmatprep.subr.bf16.mxu0 0
        %1246 = vmatpush1.bf16.msra.mxu0 %v1226
        %1247 = vmatprep.subr.bf16.mxu0 0
        %1248 = vmatpush1.bf16.msra.mxu0 %v1227
        %1249 = vmatprep.subr.bf16.mxu0 0
        %1250 = vmatpush1.bf16.msra.mxu0 %v1228
        %1251 = vmatprep.subr.bf16.mxu0 0
        %1252 = vmatpush1.bf16.msra.mxu0 %v1229
        %1253 = vmatprep.subr.bf16.mxu0 0
        %1254 = vmatpush1.bf16.msra.mxu0 %v1230
        %1255 = vmatprep.subr.bf16.mxu0 0
        %1256 = vmatpush1.bf16.msra.mxu0 0
        %1257 = vmatprep.subr.bf16.mxu0 0
        %1258 = vmatpush1.bf16.msra.mxu0 0
        %1259 = vmatprep.subr.bf16.mxu0 0
        %1260 = vmatpush1.bf16.msra.mxu0 0
        %1261 = vmatprep.subr.bf16.mxu0 0
        %1262 = vmatpush1.bf16.msra.mxu0 0
        %1263 = vmatprep.subr.bf16.mxu0 0
        %1264 = vmatpush1.bf16.msra.mxu0 0
        %1265 = vmatprep.subr.bf16.mxu0 0
        %1266 = vmatpush1.bf16.msra.mxu0 0
        %1267 = vmatprep.subr.bf16.mxu0 0
        %1268 = vmatpush1.bf16.msra.mxu0 0
        %1269 = vmatprep.subr.bf16.mxu0 0
        %1270 = vmatpush1.bf16.msra.mxu0 0
        %1271 = vmatprep.mubr.bf16.mxu0 0
        %1272 = vmatmul.mubr.bf16.gmra.mrb[0].mxu0 %v1174
        %v1273 = vpop.f32.mrb[0].mxu0
        %v1274 = vadd.f32 0.0, %v1273
        %v1275 = vpop.f32.mrb[0].mxu0
        %v1276 = vpop.f32.mrb[0].mxu0
        %v1277 = vpop.f32.mrb[0].mxu0
        %1278 = vdwg.mxu0
        %v1279 = vadd.f32 %v1173, %v1274
        %1280 = vst [vmem:[%s751] sm:$0xff] %v1279
        %p1281 = scmp.lt.s32.totalorder %s23, 1
        %s1282 = scalar_select %p1281, %s23, 1
        %p1283 = scmp.lt.s32.totalorder %s24, 1
        %s1284 = scalar_select %p1283, %s24, 1
        %s1285 = smul.addr %s1282, 2
        %s1286 = sadd.s32 %s1284, %s1285
        %s1287 = smul.addr %s1286, 8
        %s1288 = scalar_lea.vmem %s6, %s1287
        %p1289 = scmp.lt.s32.totalorder %s23, 1
        %s1290 = scalar_select %p1289, %s23, 1
        %s1291 = smul.addr %s1290, 8
        %s1292 = scalar_lea.vmem %s7, %s1291
        // Predicated region
        $region131: #{meva_forward.7} parent=117 // pred_check
          %p1293 = pneg %p207
        $region132: #{meva_forward.7} parent=117 // pred_check_branch
          %1295 = sbr.rel (%p1293) target = $region134
        $region133: #{meva_forward.7} parent=117 // pred_region
          _
        $region134: #{meva_forward.7} parent=117 // pred_fallthru
          _
        // Predicated region
        $region135: #{meva_forward.7} parent=117 // pred_check
          %p1296 = pneg %p233
        $region136: #{meva_forward.7} parent=117 // pred_check_branch
          %1298 = sbr.rel (%p1296) target = $region138
        $region137: #{meva_forward.7} parent=117 // pred_region
          _
        $region138: #{meva_forward.7} parent=117 // pred_fallthru
          _
      $region118: #{meva_forward.7} parent=5 // pred_fallthru
        _
      %p1299 = scmp.le.s32.totalorder 2, %s14
      // Predicated region
      $region139: #{meva_forward.7} parent=5 // pred_check
        %p1300 = pneg %p1299
      $region140: #{meva_forward.7} parent=5 // pred_check_branch
        %1302 = sbr.rel (%p1300) target = $region142
      $region141: #{meva_forward.7} parent=5 // pred_region
        %s1303 = ssub.s32 %s14, 2
        // Predicated region
        $region143: #{meva_forward.7} parent=141 // pred_check
          %p1304 = pneg %p213
        $region144: #{meva_forward.7} parent=141 // pred_check_branch
          %1306 = sbr.rel (%p1304) target = $region146
        $region145: #{meva_forward.7} parent=141 // pred_region
          %p1307 = scmp.lt.s32.totalorder %s25, 1
          %s1308 = scalar_select %p1307, %s25, 1
          %p1309 = scmp.lt.s32.totalorder %s26, 1
          %s1310 = scalar_select %p1309, %s26, 1
          %s1311 = smul.addr %s1308, 2
          %s1312 = sadd.s32 %s1310, %s1311
          %s1313 = smul.addr %s1312, 8
          %s1314 = scalar_lea.vmem %s6, %s1313
        $region146: #{meva_forward.7} parent=141 // pred_fallthru
          _
        // Predicated region
        $region147: #{meva_forward.7} parent=141 // pred_check
          %p1315 = pneg %p239
        $region148: #{meva_forward.7} parent=141 // pred_check_branch
          %1317 = sbr.rel (%p1315) target = $region150
        $region149: #{meva_forward.7} parent=141 // pred_region
          %p1318 = scmp.lt.s32.totalorder %s25, 1
          %s1319 = scalar_select %p1318, %s25, 1
          %s1320 = smul.addr %s1319, 8
          %s1321 = scalar_lea.vmem %s7, %s1320
        $region150: #{meva_forward.7} parent=141 // pred_fallthru
          _
      $region142: #{meva_forward.7} parent=5 // pred_fallthru
        _
    $region6: #{meva_forward.7} parent=1 // loop_footer
      %s18 = sadd.s32 1, %s14
    $region7: #{meva_forward.7} parent=1 // loop_footer_branch
      %13 = sbr.rel target = $region3
    $region8: #{meva_forward.7} parent=1 // loop_exit
      _

</llo_original>
